<compile_context>
chip_gen: v7x
topology: tpu7x:2x2x1
jax: 0.10.0
libtpu: 0.0.40
codegen_flags: <defaults>
</compile_context>

<pallas_src>
import jax
import jax.numpy as jnp
import numpy as np
from jax import lax
from jax.experimental import pallas as pl
from jax.experimental.pallas import tpu as pltpu

_BN_EPS = 1e-5


def _fold_bn(gamma, beta, mean, var):
    scale = gamma * lax.rsqrt(var + _BN_EPS)
    shift = beta - mean * scale
    return scale[None, :], shift[None, :]


# ------------------------------ fused kernel --------------------------------

def _make_fused_kernel(stride, res_mode):
    """Fused expand -> depthwise 3x3 -> project (+residual).

    One grid step processes one image of the batch; the expanded activation is
    kept in a zero-padded VMEM scratch (halo handled in-kernel, no HBM pad).
    """

    def kernel(*refs):
        if res_mode == "conv":
            (x_ref, we_ref, b1_ref, wd_ref, b2_ref,
             wp_ref, b3_ref, wr_ref, br_ref, o_ref, hpad_ref) = refs
        else:
            (x_ref, we_ref, b1_ref, wd_ref, b2_ref,
             wp_ref, b3_ref, o_ref, hpad_ref) = refs
            wr_ref = br_ref = None

        _, H, W, Cin = x_ref.shape
        hidden = we_ref.shape[1]
        cout = wp_ref.shape[1]

        x_f32 = x_ref[...].reshape(H * W, Cin)
        x_bf16 = x_f32.astype(jnp.bfloat16)

        # ---- 1x1 expand (MXU, bf16 in / f32 acc), BN1 folded, ReLU6 --------
        h1 = jnp.dot(x_bf16, we_ref[...], preferred_element_type=jnp.float32)
        h1 = jnp.clip(h1 + b1_ref[...], 0.0, 6.0)

        # ---- expanded activation -> zero-padded VMEM scratch (3x3 halo) ----
        hpad_ref[...] = jnp.zeros_like(hpad_ref)
        hpad_ref[1:H + 1, 1:W + 1, :] = h1.reshape(H, W, hidden)

        # ---- depthwise 3x3 (VPU, f32), BN2 folded into taps, ReLU6 ---------
        acc = jnp.zeros((H, W, hidden), jnp.float32)
        for dy in range(3):
            row = hpad_ref[dy:dy + H, :, :]              # (H, W + 2, hidden)
            for dx in range(3):
                k = dy * 3 + dx
                acc = acc + row[:, dx:dx + W, :] * wd_ref[k:k + 1, :]
        acc = jnp.clip(acc + b2_ref[...], 0.0, 6.0)

        if stride == 2:
            # TODO(synk): evaluate only the strided taps instead of computing
            # the full stride-1 depthwise output and subsampling in VMEM.
            acc = acc[::2, ::2, :]
        ho, wo = acc.shape[0], acc.shape[1]

        # ---- 1x1 project (MXU), BN3 folded, fused residual -----------------
        y = jnp.dot(acc.reshape(ho * wo, hidden).astype(jnp.bfloat16),
                    wp_ref[...], preferred_element_type=jnp.float32)
        y = y + b3_ref[...]
        if res_mode == "conv":
            r = jnp.dot(x_bf16, wr_ref[...], preferred_element_type=jnp.float32)
            y = y + r + br_ref[...]
        elif res_mode == "identity":
            y = y + x_f32                                # Cin == Cout, stride 1
        o_ref[...] = y.reshape(1, ho, wo, cout)

    return kernel


def _const_spec(arr):
    # Full array, same block every grid step (stays resident in VMEM).
    rank = arr.ndim
    return pl.BlockSpec(arr.shape, lambda n, _r=rank: (0,) * _r)


# ------------------------------- the module ---------------------------------

class InvertedResidualBlockPallas:
    def __init__(self, key, in_channels, out_channels, expansion_factor=6,
                 kernel_size=3, stride=1):
        if stride != 1 and stride != 2:
            raise ValueError('Stride should be 1 or 2')
        if kernel_size != 3:
            raise ValueError('Only kernel_size=3 (padding=1) is implemented')
        hidden = in_channels * expansion_factor
        self.in_channels, self.out_channels, self.hidden = in_channels, out_channels, hidden
        self.stride = stride
        self.is_residual = (stride == 1)
        self.is_conv_res = (in_channels != out_channels)
        if self.is_residual:
            self.res_mode = "conv" if self.is_conv_res else "identity"
        else:
            self.res_mode = "none"

        keys = jax.random.split(key, 8)

        def bn_params(k, c):
            k1, k2, k3, k4 = jax.random.split(k, 4)
            gamma = jax.random.uniform(k1, (c,), jnp.float32, 0.5, 1.5)
            beta = 0.1 * jax.random.normal(k2, (c,), jnp.float32)
            mean = 0.1 * jax.random.normal(k3, (c,), jnp.float32)
            var = jax.random.uniform(k4, (c,), jnp.float32, 0.5, 1.5)
            return gamma, beta, mean, var

        # Raw params in PyTorch layout (O, I) / (C, kh, kw) -- used by reference.
        self.w_expand = 0.2 * jax.random.normal(keys[0], (hidden, in_channels), jnp.float32)
        self.bn1 = bn_params(keys[1], hidden)
        self.w_dw = 0.2 * jax.random.normal(keys[2], (hidden, 3, 3), jnp.float32)
        self.bn2 = bn_params(keys[3], hidden)
        self.w_proj = 0.2 * jax.random.normal(keys[4], (out_channels, hidden), jnp.float32)
        self.bn3 = bn_params(keys[5], out_channels)
        if self.res_mode == "conv":
            self.w_res = 0.2 * jax.random.normal(keys[6], (out_channels, in_channels), jnp.float32)
            self.bn_res = bn_params(keys[7], out_channels)

        # ---- one-time kernel-side weight prep: transpose + fold BN scale,
        #      bf16 for the MXU matmuls, f32 for the depthwise taps / shifts.
        s1, sh1 = _fold_bn(*self.bn1)
        self.we = (self.w_expand.T * s1).astype(jnp.bfloat16)      # (Cin, hidden)
        self.b1 = sh1                                              # (1, hidden) f32
        s2, sh2 = _fold_bn(*self.bn2)
        wd = jnp.transpose(self.w_dw, (1, 2, 0)).reshape(9, hidden)
        self.wd = (wd * s2).astype(jnp.float32)                    # (9, hidden)
        self.b2 = sh2
        s3, sh3 = _fold_bn(*self.bn3)
        self.wp = (self.w_proj.T * s3).astype(jnp.bfloat16)        # (hidden, Cout)
        self.b3 = sh3
        if self.res_mode == "conv":
            sr, shr = _fold_bn(*self.bn_res)
            self.wr = (self.w_res.T * sr).astype(jnp.bfloat16)     # (Cin, Cout)
            self.br = shr

    def __call__(self, x_nchw):
        n, c, h, w = x_nchw.shape
        x = jnp.transpose(x_nchw, (0, 2, 3, 1)).astype(jnp.float32)   # NHWC

        if self.stride == 1:
            ho, wo = h, w
        else:
            ho, wo = (h + 1) // 2, (w + 1) // 2

        weight_args = [self.we, self.b1, self.wd, self.b2, self.wp, self.b3]
        if self.res_mode == "conv":
            weight_args += [self.wr, self.br]

        in_specs = [pl.BlockSpec((1, h, w, c), lambda nb: (nb, 0, 0, 0))]
        in_specs += [_const_spec(a) for a in weight_args]

        kernel = _make_fused_kernel(self.stride, self.res_mode)

        out = pl.pallas_call(
            kernel,
            grid=(n,),                                   # one image per step
            in_specs=in_specs,
            out_specs=pl.BlockSpec((1, ho, wo, self.out_channels),
                                   lambda nb: (nb, 0, 0, 0)),
            out_shape=jax.ShapeDtypeStruct((n, ho, wo, self.out_channels),
                                           jnp.float32),
            scratch_shapes=[pltpu.VMEM((h + 2, w + 2, self.hidden), jnp.float32)],
            compiler_params=pltpu.CompilerParams(
                dimension_semantics=("parallel",),       # v7x: shard over 2 TCs
                vmem_limit_bytes=64 * 1024 * 1024),      # sized for v7x VMEM
        )(x, *weight_args)

        return jnp.transpose(out, (0, 3, 1, 2))          # back to NCHW


# ------------------------ pure-JAX (lax.conv) reference ----------------------

def reference_forward(block, x):
    def conv1x1(xx, w):
        return lax.conv_general_dilated(
            xx, w[:, :, None, None], (1, 1), 'VALID',
            dimension_numbers=('NCHW', 'OIHW', 'NCHW'),
            precision=lax.Precision.HIGHEST)

    def bn(xx, p):
        gamma, beta, mean, var = p
        s = gamma * lax.rsqrt(var + _BN_EPS)
        return xx * s[None, :, None, None] + (beta - mean * s)[None, :, None, None]

    y = jnp.clip(bn(conv1x1(x, block.w_expand), block.bn1), 0.0, 6.0)
    y = lax.conv_general_dilated(
        y, block.w_dw[:, None, :, :], (block.stride, block.stride),
        ((1, 1), (1, 1)), feature_group_count=block.hidden,
        dimension_numbers=('NCHW', 'OIHW', 'NCHW'),
        precision=lax.Precision.HIGHEST)
    y = jnp.clip(bn(y, block.bn2), 0.0, 6.0)
    y = bn(conv1x1(y, block.w_proj), block.bn3)
    if block.is_residual:
        if block.is_conv_res:
            return bn(conv1x1(x, block.w_res), block.bn_res) + y
        return x + y
    return y


if __name__ == "__main__":
    key = jax.random.PRNGKey(0)
    k_x, k_p = jax.random.split(key)
    N, Cin, H, W = 2, 4, 16, 16
    Cout = 8  # Cin != Cout, stride=1 -> exercises the fused conv_res residual
    x = jax.random.normal(k_x, (N, Cin, H, W), jnp.float32)

    block = InvertedResidualBlockPallas(k_p, Cin, Cout, expansion_factor=6,
                                        kernel_size=3, stride=1)
    out = jax.block_until_ready(block(x))
    ref = jax.block_until_ready(reference_forward(block, x))

    assert out.shape == (N, Cout, H, W)
    # Tolerance accounts for bf16 MXU inputs (f32 accumulation) vs. the f32
    # XLA-conv reference.
    np.testing.assert_allclose(np.asarray(out), np.asarray(ref),
                               rtol=5e-2, atol=5e-2)
    print("KERNEL_OK")
</pallas_src>

<mosaic_0001>
module attributes {stable_mosaic.version = 11 : i64} {
  func.func @kernel(%arg0: i32, %arg1: memref<1x16x16x4xf32, #tpu.memory_space<vmem>>, %arg2: memref<4x24xbf16, #tpu.memory_space<vmem>>, %arg3: memref<1x24xf32, #tpu.memory_space<vmem>>, %arg4: memref<9x24xf32, #tpu.memory_space<vmem>>, %arg5: memref<1x24xf32, #tpu.memory_space<vmem>>, %arg6: memref<24x8xbf16, #tpu.memory_space<vmem>>, %arg7: memref<1x8xf32, #tpu.memory_space<vmem>>, %arg8: memref<4x8xbf16, #tpu.memory_space<vmem>>, %arg9: memref<1x8xf32, #tpu.memory_space<vmem>>, %arg10: memref<1x16x16x8xf32, #tpu.memory_space<vmem>>, %arg11: memref<18x18x24xf32, #tpu.memory_space<vmem>>) attributes {dimension_semantics = [#tpu.dimension_semantics<parallel>], iteration_bounds = array<i64: 2>, scalar_prefetch = 0 : i64, scratch_operands = 1 : i64, tpu.core_type = #tpu.core_type<tc>, window_params = [{transform_indices = @transform_0, window_bounds = array<i64: 1, 16, 16, 4>}, {pipeline_mode = #tpu.pipeline_mode<synchronous>, transform_indices = @transform_1, window_bounds = array<i64: 4, 24>}, {pipeline_mode = #tpu.pipeline_mode<synchronous>, transform_indices = @transform_2, window_bounds = array<i64: 1, 24>}, {pipeline_mode = #tpu.pipeline_mode<synchronous>, transform_indices = @transform_3, window_bounds = array<i64: 9, 24>}, {pipeline_mode = #tpu.pipeline_mode<synchronous>, transform_indices = @transform_4, window_bounds = array<i64: 1, 24>}, {pipeline_mode = #tpu.pipeline_mode<synchronous>, transform_indices = @transform_5, window_bounds = array<i64: 24, 8>}, {pipeline_mode = #tpu.pipeline_mode<synchronous>, transform_indices = @transform_6, window_bounds = array<i64: 1, 8>}, {pipeline_mode = #tpu.pipeline_mode<synchronous>, transform_indices = @transform_7, window_bounds = array<i64: 4, 8>}, {pipeline_mode = #tpu.pipeline_mode<synchronous>, transform_indices = @transform_8, window_bounds = array<i64: 1, 8>}, {transform_indices = @transform_9, window_bounds = array<i64: 1, 16, 16, 8>}]} {
    %c0 = arith.constant 0 : index
    %c0_0 = arith.constant 0 : index
    %c0_1 = arith.constant 0 : index
    %c0_2 = arith.constant 0 : index
    %0 = vector.load %arg1[%c0, %c0_0, %c0_1, %c0_2] : memref<1x16x16x4xf32, #tpu.memory_space<vmem>>, vector<1x16x16x4xf32>
    %1 = vector.shape_cast %0 : vector<1x16x16x4xf32> to vector<256x4xf32>
    %2 = arith.truncf %1 : vector<256x4xf32> to vector<256x4xbf16>
    %c0_3 = arith.constant 0 : index
    %c0_4 = arith.constant 0 : index
    %3 = vector.load %arg2[%c0_3, %c0_4] : memref<4x24xbf16, #tpu.memory_space<vmem>>, vector<4x24xbf16>
    %cst = arith.constant dense<0.000000e+00> : vector<256x24xf32>
    %4 = tpu.matmul %2, %3, %cst {dimension_numbers = #tpu.dot_dimension_numbers<[1], [0], [0], [1], [0, 0, 1, 1], [], []>} : vector<256x4xbf16>, vector<4x24xbf16>, vector<256x24xf32> -> vector<256x24xf32>
    %c0_5 = arith.constant 0 : index
    %c0_6 = arith.constant 0 : index
    %5 = vector.load %arg3[%c0_5, %c0_6] : memref<1x24xf32, #tpu.memory_space<vmem>>, vector<1x24xf32>
    %6 = vector.broadcast %5 : vector<1x24xf32> to vector<256x24xf32>
    %7 = arith.addf %4, %6 : vector<256x24xf32>
    %cst_7 = arith.constant 0.000000e+00 : f32
    %cst_8 = arith.constant 6.000000e+00 : f32
    %8 = vector.broadcast %cst_7 : f32 to vector<256x24xf32>
    %9 = arith.maximumf %8, %7 : vector<256x24xf32>
    %10 = vector.broadcast %cst_8 : f32 to vector<256x24xf32>
    %11 = arith.minimumf %10, %9 : vector<256x24xf32>
    %cst_9 = arith.constant 0.000000e+00 : f32
    %12 = vector.broadcast %cst_9 : f32 to vector<18x18x24xf32>
    %c0_10 = arith.constant 0 : index
    %c0_11 = arith.constant 0 : index
    %c0_12 = arith.constant 0 : index
    %13 = vector.load %arg11[%c0_10, %c0_11, %c0_12] : memref<18x18x24xf32, #tpu.memory_space<vmem>>, vector<18x18x24xf32>
    tpu.vector_store %arg11[%c0_10, %c0_11, %c0_12], %12 {strides = array<i32>} : memref<18x18x24xf32, #tpu.memory_space<vmem>>, vector<18x18x24xf32>,
    %14 = vector.shape_cast %11 : vector<256x24xf32> to vector<16x16x24xf32>
    %c1 = arith.constant 1 : index
    %c1_13 = arith.constant 1 : index
    %c0_14 = arith.constant 0 : index
    %15 = vector.load %arg11[%c1, %c1_13, %c0_14] : memref<18x18x24xf32, #tpu.memory_space<vmem>>, vector<16x16x24xf32>
    tpu.vector_store %arg11[%c1, %c1_13, %c0_14], %14 {strides = array<i32>} : memref<18x18x24xf32, #tpu.memory_space<vmem>>, vector<16x16x24xf32>,
    %cst_15 = arith.constant 0.000000e+00 : f32
    %16 = vector.broadcast %cst_15 : f32 to vector<16x16x24xf32>
    %c0_16 = arith.constant 0 : index
    %c0_17 = arith.constant 0 : index
    %c0_18 = arith.constant 0 : index
    %17 = vector.load %arg11[%c0_16, %c0_17, %c0_18] : memref<18x18x24xf32, #tpu.memory_space<vmem>>, vector<16x18x24xf32>
    %18 = vector.extract_strided_slice %17 {offsets = [0, 0, 0], sizes = [16, 16, 24], strides = [1, 1, 1]} : vector<16x18x24xf32> to vector<16x16x24xf32>
    %c0_19 = arith.constant 0 : index
    %c0_20 = arith.constant 0 : index
    %19 = vector.load %arg4[%c0_19, %c0_20] : memref<9x24xf32, #tpu.memory_space<vmem>>, vector<1x24xf32>
    %20 = vector.shape_cast %19 : vector<1x24xf32> to vector<1x1x24xf32>
    %21 = vector.broadcast %20 : vector<1x1x24xf32> to vector<16x16x24xf32>
    %22 = arith.mulf %18, %21 : vector<16x16x24xf32>
    %23 = arith.addf %16, %22 : vector<16x16x24xf32>
    %24 = vector.extract_strided_slice %17 {offsets = [0, 1, 0], sizes = [16, 16, 24], strides = [1, 1, 1]} : vector<16x18x24xf32> to vector<16x16x24xf32>
    %c1_21 = arith.constant 1 : index
    %c0_22 = arith.constant 0 : index
    %25 = vector.load %arg4[%c1_21, %c0_22] : memref<9x24xf32, #tpu.memory_space<vmem>>, vector<1x24xf32>
    %26 = vector.shape_cast %25 : vector<1x24xf32> to vector<1x1x24xf32>
    %27 = vector.broadcast %26 : vector<1x1x24xf32> to vector<16x16x24xf32>
    %28 = arith.mulf %24, %27 : vector<16x16x24xf32>
    %29 = arith.addf %23, %28 : vector<16x16x24xf32>
    %30 = vector.extract_strided_slice %17 {offsets = [0, 2, 0], sizes = [16, 16, 24], strides = [1, 1, 1]} : vector<16x18x24xf32> to vector<16x16x24xf32>
    %c2 = arith.constant 2 : index
    %c0_23 = arith.constant 0 : index
    %31 = vector.load %arg4[%c2, %c0_23] : memref<9x24xf32, #tpu.memory_space<vmem>>, vector<1x24xf32>
    %32 = vector.shape_cast %31 : vector<1x24xf32> to vector<1x1x24xf32>
    %33 = vector.broadcast %32 : vector<1x1x24xf32> to vector<16x16x24xf32>
    %34 = arith.mulf %30, %33 : vector<16x16x24xf32>
    %35 = arith.addf %29, %34 : vector<16x16x24xf32>
    %c1_24 = arith.constant 1 : index
    %c0_25 = arith.constant 0 : index
    %c0_26 = arith.constant 0 : index
    %36 = vector.load %arg11[%c1_24, %c0_25, %c0_26] : memref<18x18x24xf32, #tpu.memory_space<vmem>>, vector<16x18x24xf32>
    %37 = vector.extract_strided_slice %36 {offsets = [0, 0, 0], sizes = [16, 16, 24], strides = [1, 1, 1]} : vector<16x18x24xf32> to vector<16x16x24xf32>
    %c3 = arith.constant 3 : index
    %c0_27 = arith.constant 0 : index
    %38 = vector.load %arg4[%c3, %c0_27] : memref<9x24xf32, #tpu.memory_space<vmem>>, vector<1x24xf32>
    %39 = vector.shape_cast %38 : vector<1x24xf32> to vector<1x1x24xf32>
    %40 = vector.broadcast %39 : vector<1x1x24xf32> to vector<16x16x24xf32>
    %41 = arith.mulf %37, %40 : vector<16x16x24xf32>
    %42 = arith.addf %35, %41 : vector<16x16x24xf32>
    %43 = vector.extract_strided_slice %36 {offsets = [0, 1, 0], sizes = [16, 16, 24], strides = [1, 1, 1]} : vector<16x18x24xf32> to vector<16x16x24xf32>
    %c4 = arith.constant 4 : index
    %c0_28 = arith.constant 0 : index
    %44 = vector.load %arg4[%c4, %c0_28] : memref<9x24xf32, #tpu.memory_space<vmem>>, vector<1x24xf32>
    %45 = vector.shape_cast %44 : vector<1x24xf32> to vector<1x1x24xf32>
    %46 = vector.broadcast %45 : vector<1x1x24xf32> to vector<16x16x24xf32>
    %47 = arith.mulf %43, %46 : vector<16x16x24xf32>
    %48 = arith.addf %42, %47 : vector<16x16x24xf32>
    %49 = vector.extract_strided_slice %36 {offsets = [0, 2, 0], sizes = [16, 16, 24], strides = [1, 1, 1]} : vector<16x18x24xf32> to vector<16x16x24xf32>
    %c5 = arith.constant 5 : index
    %c0_29 = arith.constant 0 : index
    %50 = vector.load %arg4[%c5, %c0_29] : memref<9x24xf32, #tpu.memory_space<vmem>>, vector<1x24xf32>
    %51 = vector.shape_cast %50 : vector<1x24xf32> to vector<1x1x24xf32>
    %52 = vector.broadcast %51 : vector<1x1x24xf32> to vector<16x16x24xf32>
    %53 = arith.mulf %49, %52 : vector<16x16x24xf32>
    %54 = arith.addf %48, %53 : vector<16x16x24xf32>
    %c2_30 = arith.constant 2 : index
    %c0_31 = arith.constant 0 : index
    %c0_32 = arith.constant 0 : index
    %55 = vector.load %arg11[%c2_30, %c0_31, %c0_32] : memref<18x18x24xf32, #tpu.memory_space<vmem>>, vector<16x18x24xf32>
    %56 = vector.extract_strided_slice %55 {offsets = [0, 0, 0], sizes = [16, 16, 24], strides = [1, 1, 1]} : vector<16x18x24xf32> to vector<16x16x24xf32>
    %c6 = arith.constant 6 : index
    %c0_33 = arith.constant 0 : index
    %57 = vector.load %arg4[%c6, %c0_33] : memref<9x24xf32, #tpu.memory_space<vmem>>, vector<1x24xf32>
    %58 = vector.shape_cast %57 : vector<1x24xf32> to vector<1x1x24xf32>
    %59 = vector.broadcast %58 : vector<1x1x24xf32> to vector<16x16x24xf32>
    %60 = arith.mulf %56, %59 : vector<16x16x24xf32>
    %61 = arith.addf %54, %60 : vector<16x16x24xf32>
    %62 = vector.extract_strided_slice %55 {offsets = [0, 1, 0], sizes = [16, 16, 24], strides = [1, 1, 1]} : vector<16x18x24xf32> to vector<16x16x24xf32>
    %c7 = arith.constant 7 : index
    %c0_34 = arith.constant 0 : index
    %63 = vector.load %arg4[%c7, %c0_34] : memref<9x24xf32, #tpu.memory_space<vmem>>, vector<1x24xf32>
    %64 = vector.shape_cast %63 : vector<1x24xf32> to vector<1x1x24xf32>
    %65 = vector.broadcast %64 : vector<1x1x24xf32> to vector<16x16x24xf32>
    %66 = arith.mulf %62, %65 : vector<16x16x24xf32>
    %67 = arith.addf %61, %66 : vector<16x16x24xf32>
    %68 = vector.extract_strided_slice %55 {offsets = [0, 2, 0], sizes = [16, 16, 24], strides = [1, 1, 1]} : vector<16x18x24xf32> to vector<16x16x24xf32>
    %c8 = arith.constant 8 : index
    %c0_35 = arith.constant 0 : index
    %69 = vector.load %arg4[%c8, %c0_35] : memref<9x24xf32, #tpu.memory_space<vmem>>, vector<1x24xf32>
    %70 = vector.shape_cast %69 : vector<1x24xf32> to vector<1x1x24xf32>
    %71 = vector.broadcast %70 : vector<1x1x24xf32> to vector<16x16x24xf32>
    %72 = arith.mulf %68, %71 : vector<16x16x24xf32>
    %73 = arith.addf %67, %72 : vector<16x16x24xf32>
    %c0_36 = arith.constant 0 : index
    %c0_37 = arith.constant 0 : index
    %74 = vector.load %arg5[%c0_36, %c0_37] : memref<1x24xf32, #tpu.memory_space<vmem>>, vector<1x24xf32>
    %75 = vector.shape_cast %74 : vector<1x24xf32> to vector<1x1x24xf32>
    %76 = vector.broadcast %75 : vector<1x1x24xf32> to vector<16x16x24xf32>
    %77 = arith.addf %73, %76 : vector<16x16x24xf32>
    %cst_38 = arith.constant 0.000000e+00 : f32
    %cst_39 = arith.constant 6.000000e+00 : f32
    %78 = vector.broadcast %cst_38 : f32 to vector<16x16x24xf32>
    %79 = arith.maximumf %78, %77 : vector<16x16x24xf32>
    %80 = vector.broadcast %cst_39 : f32 to vector<16x16x24xf32>
    %81 = arith.minimumf %80, %79 : vector<16x16x24xf32>
    %82 = vector.shape_cast %81 : vector<16x16x24xf32> to vector<256x24xf32>
    %83 = arith.truncf %82 : vector<256x24xf32> to vector<256x24xbf16>
    %c0_40 = arith.constant 0 : index
    %c0_41 = arith.constant 0 : index
    %84 = vector.load %arg6[%c0_40, %c0_41] : memref<24x8xbf16, #tpu.memory_space<vmem>>, vector<24x8xbf16>
    %cst_42 = arith.constant dense<0.000000e+00> : vector<256x8xf32>
    %85 = tpu.matmul %83, %84, %cst_42 {dimension_numbers = #tpu.dot_dimension_numbers<[1], [0], [0], [1], [0, 0, 1, 1], [], []>} : vector<256x24xbf16>, vector<24x8xbf16>, vector<256x8xf32> -> vector<256x8xf32>
    %c0_43 = arith.constant 0 : index
    %c0_44 = arith.constant 0 : index
    %86 = vector.load %arg7[%c0_43, %c0_44] : memref<1x8xf32, #tpu.memory_space<vmem>>, vector<1x8xf32>
    %87 = vector.broadcast %86 : vector<1x8xf32> to vector<256x8xf32>
    %88 = arith.addf %85, %87 : vector<256x8xf32>
    %c0_45 = arith.constant 0 : index
    %c0_46 = arith.constant 0 : index
    %89 = vector.load %arg8[%c0_45, %c0_46] : memref<4x8xbf16, #tpu.memory_space<vmem>>, vector<4x8xbf16>
    %cst_47 = arith.constant dense<0.000000e+00> : vector<256x8xf32>
    %90 = tpu.matmul %2, %89, %cst_47 {dimension_numbers = #tpu.dot_dimension_numbers<[1], [0], [0], [1], [0, 0, 1, 1], [], []>} : vector<256x4xbf16>, vector<4x8xbf16>, vector<256x8xf32> -> vector<256x8xf32>
    %91 = arith.addf %88, %90 : vector<256x8xf32>
    %c0_48 = arith.constant 0 : index
    %c0_49 = arith.constant 0 : index
    %92 = vector.load %arg9[%c0_48, %c0_49] : memref<1x8xf32, #tpu.memory_space<vmem>>, vector<1x8xf32>
    %93 = vector.broadcast %92 : vector<1x8xf32> to vector<256x8xf32>
    %94 = arith.addf %91, %93 : vector<256x8xf32>
    %95 = vector.shape_cast %94 : vector<256x8xf32> to vector<1x16x16x8xf32>
    %c0_50 = arith.constant 0 : index
    %c0_51 = arith.constant 0 : index
    %c0_52 = arith.constant 0 : index
    %c0_53 = arith.constant 0 : index
    %96 = vector.load %arg10[%c0_50, %c0_51, %c0_52, %c0_53] : memref<1x16x16x8xf32, #tpu.memory_space<vmem>>, vector<1x16x16x8xf32>
    tpu.vector_store %arg10[%c0_50, %c0_51, %c0_52, %c0_53], %95 {strides = array<i32>} : memref<1x16x16x8xf32, #tpu.memory_space<vmem>>, vector<1x16x16x8xf32>,
    return
  }
  func.func @transform_0(%arg0: i32) -> (i32, i32, i32, i32) {
    %c0_i32 = arith.constant 0 : i32
    %c0_i32_0 = arith.constant 0 : i32
    %c0_i32_1 = arith.constant 0 : i32
    %c0_i32_2 = arith.constant 0 : i32
    return %arg0, %c0_i32, %c0_i32_0, %c0_i32_1 : i32, i32, i32, i32
  }
  func.func @transform_1(%arg0: i32) -> (i32, i32) {
    %c0_i32 = arith.constant 0 : i32
    %c0_i32_0 = arith.constant 0 : i32
    %c0_i32_1 = arith.constant 0 : i32
    return %c0_i32, %c0_i32_0 : i32, i32
  }
  func.func @transform_2(%arg0: i32) -> (i32, i32) {
    %c0_i32 = arith.constant 0 : i32
    %c0_i32_0 = arith.constant 0 : i32
    %c0_i32_1 = arith.constant 0 : i32
    return %c0_i32, %c0_i32_0 : i32, i32
  }
  func.func @transform_3(%arg0: i32) -> (i32, i32) {
    %c0_i32 = arith.constant 0 : i32
    %c0_i32_0 = arith.constant 0 : i32
    %c0_i32_1 = arith.constant 0 : i32
    return %c0_i32, %c0_i32_0 : i32, i32
  }
  func.func @transform_4(%arg0: i32) -> (i32, i32) {
    %c0_i32 = arith.constant 0 : i32
    %c0_i32_0 = arith.constant 0 : i32
    %c0_i32_1 = arith.constant 0 : i32
    return %c0_i32, %c0_i32_0 : i32, i32
  }
  func.func @transform_5(%arg0: i32) -> (i32, i32) {
    %c0_i32 = arith.constant 0 : i32
    %c0_i32_0 = arith.constant 0 : i32
    %c0_i32_1 = arith.constant 0 : i32
    return %c0_i32, %c0_i32_0 : i32, i32
  }
  func.func @transform_6(%arg0: i32) -> (i32, i32) {
    %c0_i32 = arith.constant 0 : i32
    %c0_i32_0 = arith.constant 0 : i32
    %c0_i32_1 = arith.constant 0 : i32
    return %c0_i32, %c0_i32_0 : i32, i32
  }
  func.func @transform_7(%arg0: i32) -> (i32, i32) {
    %c0_i32 = arith.constant 0 : i32
    %c0_i32_0 = arith.constant 0 : i32
    %c0_i32_1 = arith.constant 0 : i32
    return %c0_i32, %c0_i32_0 : i32, i32
  }
  func.func @transform_8(%arg0: i32) -> (i32, i32) {
    %c0_i32 = arith.constant 0 : i32
    %c0_i32_0 = arith.constant 0 : i32
    %c0_i32_1 = arith.constant 0 : i32
    return %c0_i32, %c0_i32_0 : i32, i32
  }
  func.func @transform_9(%arg0: i32) -> (i32, i32, i32, i32) {
    %c0_i32 = arith.constant 0 : i32
    %c0_i32_0 = arith.constant 0 : i32
    %c0_i32_1 = arith.constant 0 : i32
    %c0_i32_2 = arith.constant 0 : i32
    return %arg0, %c0_i32, %c0_i32_0, %c0_i32_1 : i32, i32, i32, i32
  }
}

</mosaic_0001>

<llo_original>
// kernel: tpu_custom_call.1
$region0: #{tpu_custom_call.1}
  #allocation0 [shape = 'u32[]', space=smem, size = 0x4, offset = 0x4, fixed_abs, tag = 'smem constant byte address 0x4 - core index']
  #allocation1 [shape = 'u32[144,128]{1,0:T(1,128)}', space=vmem, size = 0x12000, scoped, tag = 'internal scratch']
  #allocation2 [shape = 'f32[18,18,24]{2,1,0:T(8,128)}', space=vmem, size = 0x36000, scoped, tag = 'scratch operand']
  %s0 = inlined_call_operand.hbm [shape: f32[2,16,16,4], index: 0, kind: input, shape index: {}]
  %s1 = inlined_call_operand.hbm [shape: bf16[4,24], index: 1, kind: input, shape index: {}]
  %s2 = inlined_call_operand.hbm [shape: f32[1,24], index: 2, kind: input, shape index: {}]
  %s3 = inlined_call_operand.hbm [shape: f32[9,24], index: 3, kind: input, shape index: {}]
  %s4 = inlined_call_operand.hbm [shape: f32[1,24], index: 4, kind: input, shape index: {}]
  %s5 = inlined_call_operand.hbm [shape: bf16[24,8], index: 5, kind: input, shape index: {}]
  %s6 = inlined_call_operand.hbm [shape: f32[1,8], index: 6, kind: input, shape index: {}]
  %s7 = inlined_call_operand.hbm [shape: bf16[4,8], index: 7, kind: input, shape index: {}]
  %s8 = inlined_call_operand.hbm [shape: f32[1,8], index: 8, kind: input, shape index: {}]
  %s9 = inlined_call_operand.hbm [shape: f32[2,16,16,8], index: 9, kind: output, shape index: {}]
  %s10 = sld [smem:[#allocation0]]
  $region105: #{tpu_custom_call.1} parent=0
    _
  %s12 = ssub.s32 1, %s10
  %s13 = scalar_select 0, %s12, %s10
  $region1: #{tpu_custom_call.1} parent=0
    #allocation3 [shape = 'u8[262144]{0}', space=vmem, size = 0x40000, scoped, tag = 'input window, operand 0']
    #allocation4 [shape = 's32[2]{0}', space=sflag, size = 0x8, scoped, tag = 'scoped memory for tpu_custom_call.1']
    #allocation5 [shape = 's32[2]{0}', space=sflag, size = 0x8, scoped, tag = 'scoped memory for tpu_custom_call.1']
    #allocation6 [shape = 'u8[1024]{0}', space=vmem, size = 0x400, scoped, tag = 'input window, operand 1, single buffered']
    #allocation7 [shape = 's32[1]{0}', space=sflag, size = 0x4, scoped, tag = 'scoped memory for tpu_custom_call.1']
    #allocation8 [shape = 'u8[512]{0}', space=vmem, size = 0x400, scoped, tag = 'input window, operand 2, single buffered']
    #allocation9 [shape = 'u8[8192]{0}', space=vmem, size = 0x2000, scoped, tag = 'input window, operand 3, single buffered']
    #allocation10 [shape = 's32[1]{0}', space=sflag, size = 0x4, scoped, tag = 'scoped memory for tpu_custom_call.1']
    #allocation11 [shape = 'u8[512]{0}', space=vmem, size = 0x400, scoped, tag = 'input window, operand 4, single buffered']
    #allocation12 [shape = 'u8[6144]{0}', space=vmem, size = 0x1800, scoped, tag = 'input window, operand 5, single buffered']
    #allocation13 [shape = 's32[1]{0}', space=sflag, size = 0x4, scoped, tag = 'scoped memory for tpu_custom_call.1']
    #allocation14 [shape = 'u8[512]{0}', space=vmem, size = 0x400, scoped, tag = 'input window, operand 6, single buffered']
    #allocation15 [shape = 'u8[1024]{0}', space=vmem, size = 0x400, scoped, tag = 'input window, operand 7, single buffered']
    #allocation16 [shape = 's32[1]{0}', space=sflag, size = 0x4, scoped, tag = 'scoped memory for tpu_custom_call.1']
    #allocation17 [shape = 'u8[512]{0}', space=vmem, size = 0x400, scoped, tag = 'input window, operand 8, single buffered']
    #allocation18 [shape = 'u8[262144]{0}', space=vmem, size = 0x40000, scoped, tag = 'output window, operand 0']
    %14 = vsyncpa [#allocation4], 0
    %s15 = scalar_lea.sflag [#allocation4], 1
    %16 = vsyncpa %s15, 0
    %17 = vsyncpa [#allocation7], 0
    %18 = vsyncpa [#allocation10], 0
    %19 = vsyncpa [#allocation13], 0
    %20 = vsyncpa [#allocation16], 0
    %21 = vsyncpa [#allocation5], 0
    %s22 = scalar_lea.sflag [#allocation5], 1
    %23 = vsyncpa %s22, 0
    loop: start=0, step=1, limit=4
    $region2: #{tpu_custom_call.1} parent=1 // loop_pre_header
      _
    $region3: #{tpu_custom_call.1} parent=1 // loop_header
      %s25 = sphi 0, %s29
      %p26 = scmp.ge.s32.totalorder %s25, 4
      %s35 = sphi 0, %s37
      %s38 = sphi 0, %s35
      %s39 = sphi 0, %s38
      %s55 = sphi 0, %s39
      %s59 = sphi 0, %s59
      %s61 = sphi 0, %s59
      %s62 = sphi 0, %s61
      %s76 = sphi 0, %s62
      %s80 = sphi 0, %s80
      %s82 = sphi 0, %s80
      %s83 = sphi 0, %s82
      %s97 = sphi 0, %s83
      %s101 = sphi 0, %s101
      %s103 = sphi 0, %s101
      %s104 = sphi 0, %s103
      %s118 = sphi 0, %s104
      %s122 = sphi 0, %s122
      %s124 = sphi 0, %s122
      %s125 = sphi 0, %s124
      %s139 = sphi 0, %s125
      %s143 = sphi 0, %s143
      %s145 = sphi 0, %s143
      %s146 = sphi 0, %s145
      %s160 = sphi 0, %s146
      %s164 = sphi 0, %s164
      %s166 = sphi 0, %s164
      %s167 = sphi 0, %s166
      %s181 = sphi 0, %s167
      %s185 = sphi 0, %s185
      %s187 = sphi 0, %s185
      %s188 = sphi 0, %s187
      %s202 = sphi 0, %s188
      %s206 = sphi 0, %s206
      %s208 = sphi 0, %s206
      %s209 = sphi 0, %s208
      %s223 = sphi 0, %s209
      %s229 = sphi 0, %s231
      %s232 = sphi 0, %s229
      %s233 = sphi 0, %s232
      %s249 = sphi 0, %s233
    $region4: #{tpu_custom_call.1} parent=1 // loop_header_branch
      %28 = sbr.rel (%p26) target = $region8
    $region5: #{tpu_custom_call.1} parent=1 // loop_body
      %s30 = ssub.s32 %s25, 1
      %s31 = ssub.s32 %s25, 2
      %s32 = sadd.s32 %s25, 1
      %s33 = ssub.s32 %s25, %s32
      %p34 = scmp.eq.s32.totalorder %s33, 0
      %s36 = sadd.s32 %s35, 1
      %s37 = scalar_select %p34, %s35, %s36
      %p40 = pneg %p34
      %p41 = scmp.eq.s32.totalorder %s25, 1
      %p42 = por %p40, %p41
      %p43 = scmp.ne.s32.totalorder %s35, %s38
      %p44 = scmp.eq.s32.totalorder %s25, 0
      %p45 = por %p43, %p44
      %p46 = scmp.ne.s32.totalorder %s35, %s38
      %p47 = scmp.eq.s32.totalorder %s30, 1
      %p48 = por %p46, %p47
      %p49 = scmp.ne.s32.totalorder %s38, %s39
      %p50 = scmp.eq.s32.totalorder %s30, 0
      %p51 = por %p49, %p50
      %p52 = scmp.ne.s32.totalorder %s38, %s39
      %p53 = scmp.eq.s32.totalorder %s31, 1
      %p54 = por %p52, %p53
      %p56 = scmp.ne.s32.totalorder %s39, %s55
      %p57 = scmp.eq.s32.totalorder %s31, 0
      %p58 = por %p56, %p57
      %s60 = sadd.s32 %s59, 1
      %p63 = scmp.eq.s32.totalorder %s25, 1
      %p64 = scmp.ne.s32.totalorder %s59, %s61
      %p65 = scmp.eq.s32.totalorder %s25, 0
      %p66 = por %p64, %p65
      %p67 = scmp.ne.s32.totalorder %s59, %s61
      %p68 = scmp.eq.s32.totalorder %s30, 1
      %p69 = por %p67, %p68
      %p70 = scmp.ne.s32.totalorder %s61, %s62
      %p71 = scmp.eq.s32.totalorder %s30, 0
      %p72 = por %p70, %p71
      %p73 = scmp.ne.s32.totalorder %s61, %s62
      %p74 = scmp.eq.s32.totalorder %s31, 1
      %p75 = por %p73, %p74
      %p77 = scmp.ne.s32.totalorder %s62, %s76
      %p78 = scmp.eq.s32.totalorder %s31, 0
      %p79 = por %p77, %p78
      %s81 = sadd.s32 %s80, 1
      %p84 = scmp.eq.s32.totalorder %s25, 1
      %p85 = scmp.ne.s32.totalorder %s80, %s82
      %p86 = scmp.eq.s32.totalorder %s25, 0
      %p87 = por %p85, %p86
      %p88 = scmp.ne.s32.totalorder %s80, %s82
      %p89 = scmp.eq.s32.totalorder %s30, 1
      %p90 = por %p88, %p89
      %p91 = scmp.ne.s32.totalorder %s82, %s83
      %p92 = scmp.eq.s32.totalorder %s30, 0
      %p93 = por %p91, %p92
      %p94 = scmp.ne.s32.totalorder %s82, %s83
      %p95 = scmp.eq.s32.totalorder %s31, 1
      %p96 = por %p94, %p95
      %p98 = scmp.ne.s32.totalorder %s83, %s97
      %p99 = scmp.eq.s32.totalorder %s31, 0
      %p100 = por %p98, %p99
      %s102 = sadd.s32 %s101, 1
      %p105 = scmp.eq.s32.totalorder %s25, 1
      %p106 = scmp.ne.s32.totalorder %s101, %s103
      %p107 = scmp.eq.s32.totalorder %s25, 0
      %p108 = por %p106, %p107
      %p109 = scmp.ne.s32.totalorder %s101, %s103
      %p110 = scmp.eq.s32.totalorder %s30, 1
      %p111 = por %p109, %p110
      %p112 = scmp.ne.s32.totalorder %s103, %s104
      %p113 = scmp.eq.s32.totalorder %s30, 0
      %p114 = por %p112, %p113
      %p115 = scmp.ne.s32.totalorder %s103, %s104
      %p116 = scmp.eq.s32.totalorder %s31, 1
      %p117 = por %p115, %p116
      %p119 = scmp.ne.s32.totalorder %s104, %s118
      %p120 = scmp.eq.s32.totalorder %s31, 0
      %p121 = por %p119, %p120
      %s123 = sadd.s32 %s122, 1
      %p126 = scmp.eq.s32.totalorder %s25, 1
      %p127 = scmp.ne.s32.totalorder %s122, %s124
      %p128 = scmp.eq.s32.totalorder %s25, 0
      %p129 = por %p127, %p128
      %p130 = scmp.ne.s32.totalorder %s122, %s124
      %p131 = scmp.eq.s32.totalorder %s30, 1
      %p132 = por %p130, %p131
      %p133 = scmp.ne.s32.totalorder %s124, %s125
      %p134 = scmp.eq.s32.totalorder %s30, 0
      %p135 = por %p133, %p134
      %p136 = scmp.ne.s32.totalorder %s124, %s125
      %p137 = scmp.eq.s32.totalorder %s31, 1
      %p138 = por %p136, %p137
      %p140 = scmp.ne.s32.totalorder %s125, %s139
      %p141 = scmp.eq.s32.totalorder %s31, 0
      %p142 = por %p140, %p141
      %s144 = sadd.s32 %s143, 1
      %p147 = scmp.eq.s32.totalorder %s25, 1
      %p148 = scmp.ne.s32.totalorder %s143, %s145
      %p149 = scmp.eq.s32.totalorder %s25, 0
      %p150 = por %p148, %p149
      %p151 = scmp.ne.s32.totalorder %s143, %s145
      %p152 = scmp.eq.s32.totalorder %s30, 1
      %p153 = por %p151, %p152
      %p154 = scmp.ne.s32.totalorder %s145, %s146
      %p155 = scmp.eq.s32.totalorder %s30, 0
      %p156 = por %p154, %p155
      %p157 = scmp.ne.s32.totalorder %s145, %s146
      %p158 = scmp.eq.s32.totalorder %s31, 1
      %p159 = por %p157, %p158
      %p161 = scmp.ne.s32.totalorder %s146, %s160
      %p162 = scmp.eq.s32.totalorder %s31, 0
      %p163 = por %p161, %p162
      %s165 = sadd.s32 %s164, 1
      %p168 = scmp.eq.s32.totalorder %s25, 1
      %p169 = scmp.ne.s32.totalorder %s164, %s166
      %p170 = scmp.eq.s32.totalorder %s25, 0
      %p171 = por %p169, %p170
      %p172 = scmp.ne.s32.totalorder %s164, %s166
      %p173 = scmp.eq.s32.totalorder %s30, 1
      %p174 = por %p172, %p173
      %p175 = scmp.ne.s32.totalorder %s166, %s167
      %p176 = scmp.eq.s32.totalorder %s30, 0
      %p177 = por %p175, %p176
      %p178 = scmp.ne.s32.totalorder %s166, %s167
      %p179 = scmp.eq.s32.totalorder %s31, 1
      %p180 = por %p178, %p179
      %p182 = scmp.ne.s32.totalorder %s167, %s181
      %p183 = scmp.eq.s32.totalorder %s31, 0
      %p184 = por %p182, %p183
      %s186 = sadd.s32 %s185, 1
      %p189 = scmp.eq.s32.totalorder %s25, 1
      %p190 = scmp.ne.s32.totalorder %s185, %s187
      %p191 = scmp.eq.s32.totalorder %s25, 0
      %p192 = por %p190, %p191
      %p193 = scmp.ne.s32.totalorder %s185, %s187
      %p194 = scmp.eq.s32.totalorder %s30, 1
      %p195 = por %p193, %p194
      %p196 = scmp.ne.s32.totalorder %s187, %s188
      %p197 = scmp.eq.s32.totalorder %s30, 0
      %p198 = por %p196, %p197
      %p199 = scmp.ne.s32.totalorder %s187, %s188
      %p200 = scmp.eq.s32.totalorder %s31, 1
      %p201 = por %p199, %p200
      %p203 = scmp.ne.s32.totalorder %s188, %s202
      %p204 = scmp.eq.s32.totalorder %s31, 0
      %p205 = por %p203, %p204
      %s207 = sadd.s32 %s206, 1
      %p210 = scmp.eq.s32.totalorder %s25, 1
      %p211 = scmp.ne.s32.totalorder %s206, %s208
      %p212 = scmp.eq.s32.totalorder %s25, 0
      %p213 = por %p211, %p212
      %p214 = scmp.ne.s32.totalorder %s206, %s208
      %p215 = scmp.eq.s32.totalorder %s30, 1
      %p216 = por %p214, %p215
      %p217 = scmp.ne.s32.totalorder %s208, %s209
      %p218 = scmp.eq.s32.totalorder %s30, 0
      %p219 = por %p217, %p218
      %p220 = scmp.ne.s32.totalorder %s208, %s209
      %p221 = scmp.eq.s32.totalorder %s31, 1
      %p222 = por %p220, %p221
      %p224 = scmp.ne.s32.totalorder %s209, %s223
      %p225 = scmp.eq.s32.totalorder %s31, 0
      %p226 = por %p224, %p225
      %s227 = ssub.s32 %s25, %s32
      %p228 = scmp.eq.s32.totalorder %s227, 0
      %s230 = sadd.s32 %s229, 1
      %s231 = scalar_select %p228, %s229, %s230
      %p234 = pneg %p228
      %p235 = scmp.eq.s32.totalorder %s25, 1
      %p236 = por %p234, %p235
      %p237 = scmp.ne.s32.totalorder %s229, %s232
      %p238 = scmp.eq.s32.totalorder %s25, 0
      %p239 = por %p237, %p238
      %p240 = scmp.ne.s32.totalorder %s229, %s232
      %p241 = scmp.eq.s32.totalorder %s30, 1
      %p242 = por %p240, %p241
      %p243 = scmp.ne.s32.totalorder %s232, %s233
      %p244 = scmp.eq.s32.totalorder %s30, 0
      %p245 = por %p243, %p244
      %p246 = scmp.ne.s32.totalorder %s232, %s233
      %p247 = scmp.eq.s32.totalorder %s31, 1
      %p248 = por %p246, %p247
      %p250 = scmp.ne.s32.totalorder %s233, %s249
      %p251 = scmp.eq.s32.totalorder %s31, 0
      %p252 = por %p250, %p251
      %p253 = scmp.le.s32.totalorder 1, %s25
      %p254 = scmp.lt.s32.totalorder %s25, 3
      %p255 = pnand %p253, %p254
      %p256 = pneg %p255
      // Predicated region
      $region9: #{tpu_custom_call.1} parent=5 // pred_check
        _
      $region10: #{tpu_custom_call.1} parent=5 // pred_check_branch
        %258 = sbr.rel (%p255) target = $region12
      $region11: #{tpu_custom_call.1} parent=5 // pred_region
        %s259 = ssub.s32 %s25, 1
        // Predicated region
        $region13: #{tpu_custom_call.1} parent=11 // pred_check
          %p260 = pneg %p72
        $region14: #{tpu_custom_call.1} parent=11 // pred_check_branch
          %262 = sbr.rel (%p260) target = $region16
        $region15: #{tpu_custom_call.1} parent=11 // pred_region
          %s264 = ssub.s32 32, 32
          %265 = vsyncadd [#allocation7], %s264
          %s267 = sshll.u32 [#allocation6], 4
          %s268 = int_to_ptr.vmem [resolvable:$true] %s267
          %270 = dma.hbm_to_vmem [thread:$0]  %s1, 32, %s268, [#allocation7]
        $region16: #{tpu_custom_call.1} parent=11 // pred_fallthru
          _
        // Predicated region
        $region17: #{tpu_custom_call.1} parent=11 // pred_check
          %p271 = pneg %p93
        $region18: #{tpu_custom_call.1} parent=11 // pred_check_branch
          %273 = sbr.rel (%p271) target = $region20
        $region19: #{tpu_custom_call.1} parent=11 // pred_region
          %s275 = ssub.s32 16, 16
          %276 = vsyncadd [#allocation7], %s275
          %s278 = sshll.u32 [#allocation8], 4
          %s279 = int_to_ptr.vmem [resolvable:$true] %s278
          %281 = dma.hbm_to_vmem [thread:$0]  %s2, 16, %s279, [#allocation7]
        $region20: #{tpu_custom_call.1} parent=11 // pred_fallthru
          _
        // Predicated region
        $region21: #{tpu_custom_call.1} parent=11 // pred_check
          %p282 = pneg %p114
        $region22: #{tpu_custom_call.1} parent=11 // pred_check_branch
          %284 = sbr.rel (%p282) target = $region24
        $region23: #{tpu_custom_call.1} parent=11 // pred_region
          %s286 = ssub.s32 256, 256
          %287 = vsyncadd [#allocation10], %s286
          %s288 = sshll.u32 [#allocation9], 4
          %s289 = int_to_ptr.vmem [resolvable:$true] %s288
          %294 = dma.hbm_to_vmem [thread:$0]  %s3, 256, %s289, [#allocation10], 128, 128, 8
        $region24: #{tpu_custom_call.1} parent=11 // pred_fallthru
          _
        // Predicated region
        $region25: #{tpu_custom_call.1} parent=11 // pred_check
          %p295 = pneg %p135
        $region26: #{tpu_custom_call.1} parent=11 // pred_check_branch
          %297 = sbr.rel (%p295) target = $region28
        $region27: #{tpu_custom_call.1} parent=11 // pred_region
          %s299 = ssub.s32 16, 16
          %300 = vsyncadd [#allocation10], %s299
          %s302 = sshll.u32 [#allocation11], 4
          %s303 = int_to_ptr.vmem [resolvable:$true] %s302
          %305 = dma.hbm_to_vmem [thread:$0]  %s4, 16, %s303, [#allocation10]
        $region28: #{tpu_custom_call.1} parent=11 // pred_fallthru
          _
        // Predicated region
        $region29: #{tpu_custom_call.1} parent=11 // pred_check
          %p306 = pneg %p156
        $region30: #{tpu_custom_call.1} parent=11 // pred_check_branch
          %308 = sbr.rel (%p306) target = $region32
        $region31: #{tpu_custom_call.1} parent=11 // pred_region
          %s310 = ssub.s32 192, 192
          %311 = vsyncadd [#allocation13], %s310
          %s312 = sshll.u32 [#allocation12], 4
          %s313 = int_to_ptr.vmem [resolvable:$true] %s312
          %318 = dma.hbm_to_vmem [thread:$0]  %s5, 192, %s313, [#allocation13], 64, 64, 4
        $region32: #{tpu_custom_call.1} parent=11 // pred_fallthru
          _
        // Predicated region
        $region33: #{tpu_custom_call.1} parent=11 // pred_check
          %p319 = pneg %p177
        $region34: #{tpu_custom_call.1} parent=11 // pred_check_branch
          %321 = sbr.rel (%p319) target = $region36
        $region35: #{tpu_custom_call.1} parent=11 // pred_region
          %s323 = ssub.s32 16, 16
          %324 = vsyncadd [#allocation13], %s323
          %s326 = sshll.u32 [#allocation14], 4
          %s327 = int_to_ptr.vmem [resolvable:$true] %s326
          %329 = dma.hbm_to_vmem [thread:$0]  %s6, 16, %s327, [#allocation13]
        $region36: #{tpu_custom_call.1} parent=11 // pred_fallthru
          _
        // Predicated region
        $region37: #{tpu_custom_call.1} parent=11 // pred_check
          %p330 = pneg %p198
        $region38: #{tpu_custom_call.1} parent=11 // pred_check_branch
          %332 = sbr.rel (%p330) target = $region40
        $region39: #{tpu_custom_call.1} parent=11 // pred_region
          %s334 = ssub.s32 32, 32
          %335 = vsyncadd [#allocation16], %s334
          %s337 = sshll.u32 [#allocation15], 4
          %s338 = int_to_ptr.vmem [resolvable:$true] %s337
          %340 = dma.hbm_to_vmem [thread:$0]  %s7, 32, %s338, [#allocation16]
        $region40: #{tpu_custom_call.1} parent=11 // pred_fallthru
          _
        // Predicated region
        $region41: #{tpu_custom_call.1} parent=11 // pred_check
          %p341 = pneg %p219
        $region42: #{tpu_custom_call.1} parent=11 // pred_check_branch
          %343 = sbr.rel (%p341) target = $region44
        $region43: #{tpu_custom_call.1} parent=11 // pred_region
          %s345 = ssub.s32 16, 16
          %346 = vsyncadd [#allocation16], %s345
          %s348 = sshll.u32 [#allocation17], 4
          %s349 = int_to_ptr.vmem [resolvable:$true] %s348
          %351 = dma.hbm_to_vmem [thread:$0]  %s8, 16, %s349, [#allocation16]
        $region44: #{tpu_custom_call.1} parent=11 // pred_fallthru
          _
      $region12: #{tpu_custom_call.1} parent=5 // pred_fallthru
        _
      %p352 = scmp.lt.s32.totalorder %s25, 2
      // Predicated region
      $region45: #{tpu_custom_call.1} parent=5 // pred_check
        %p353 = pneg %p352
      $region46: #{tpu_custom_call.1} parent=5 // pred_check_branch
        %355 = sbr.rel (%p353) target = $region48
      $region47: #{tpu_custom_call.1} parent=5 // pred_region
        // Predicated region
        $region49: #{tpu_custom_call.1} parent=47 // pred_check
          %p356 = pneg %p45
        $region50: #{tpu_custom_call.1} parent=47 // pred_check_branch
          %358 = sbr.rel (%p356) target = $region52
        $region51: #{tpu_custom_call.1} parent=47 // pred_region
          %s359 = sand.u32 %s35, 1
          %s360 = scalar_lea.sflag [#allocation4], %s359
          %s361 = sand.u32 %s35, 1
          %s362 = smul.addr %s361, 256
          %s363 = scalar_lea.vmem [#allocation3], %s362
          %s365 = ssub.s32 4096, 4096
          %366 = vsyncadd %s360, %s365
          %s367 = smul.addr %s25, 32
          %s368 = smul.addr %s367, 128
          %s369 = scalar_lea.hbm %s0, %s368
          %s370 = sshll.u32 %s363, 4
          %s371 = int_to_ptr.vmem [resolvable:$true] %s370
          %376 = dma.hbm_to_vmem [thread:$0]  %s369, 4096, %s371, %s360, 128, 128, 8
        $region52: #{tpu_custom_call.1} parent=47 // pred_fallthru
          _
      $region48: #{tpu_custom_call.1} parent=5 // pred_fallthru
        _
      %p377 = scmp.le.s32.totalorder 1, %s25
      %p378 = scmp.lt.s32.totalorder %s25, 3
      %p379 = pnand %p377, %p378
      %p380 = pneg %p379
      // Predicated region
      $region53: #{tpu_custom_call.1} parent=5 // pred_check
        _
      $region54: #{tpu_custom_call.1} parent=5 // pred_check_branch
        %382 = sbr.rel (%p379) target = $region56
      $region55: #{tpu_custom_call.1} parent=5 // pred_region
        %s383 = ssub.s32 %s25, 1
        %s384 = sand.u32 %s38, 1
        %s385 = scalar_lea.sflag [#allocation4], %s384
        %s386 = sand.u32 %s38, 1
        %s387 = smul.addr %s386, 256
        %s388 = scalar_lea.vmem [#allocation3], %s387
        // Predicated region
        $region57: #{tpu_custom_call.1} parent=55 // pred_check
          %p389 = pneg %p51
        $region58: #{tpu_custom_call.1} parent=55 // pred_check_branch
          %391 = sbr.rel (%p389) target = $region60
        $region59: #{tpu_custom_call.1} parent=55 // pred_region
          %392 = dma.done %s385, 4096
        $region60: #{tpu_custom_call.1} parent=55 // pred_fallthru
          _
        // Predicated region
        $region61: #{tpu_custom_call.1} parent=55 // pred_check
          %p393 = pneg %p72
        $region62: #{tpu_custom_call.1} parent=55 // pred_check_branch
          %395 = sbr.rel (%p393) target = $region64
        $region63: #{tpu_custom_call.1} parent=55 // pred_region
          %396 = dma.done [#allocation7], 32
        $region64: #{tpu_custom_call.1} parent=55 // pred_fallthru
          _
        // Predicated region
        $region65: #{tpu_custom_call.1} parent=55 // pred_check
          %p397 = pneg %p93
        $region66: #{tpu_custom_call.1} parent=55 // pred_check_branch
          %399 = sbr.rel (%p397) target = $region68
        $region67: #{tpu_custom_call.1} parent=55 // pred_region
          %400 = dma.done [#allocation7], 16
        $region68: #{tpu_custom_call.1} parent=55 // pred_fallthru
          _
        // Predicated region
        $region69: #{tpu_custom_call.1} parent=55 // pred_check
          %p401 = pneg %p114
        $region70: #{tpu_custom_call.1} parent=55 // pred_check_branch
          %403 = sbr.rel (%p401) target = $region72
        $region71: #{tpu_custom_call.1} parent=55 // pred_region
          %404 = dma.done [#allocation10], 256
        $region72: #{tpu_custom_call.1} parent=55 // pred_fallthru
          _
        // Predicated region
        $region73: #{tpu_custom_call.1} parent=55 // pred_check
          %p405 = pneg %p135
        $region74: #{tpu_custom_call.1} parent=55 // pred_check_branch
          %407 = sbr.rel (%p405) target = $region76
        $region75: #{tpu_custom_call.1} parent=55 // pred_region
          %408 = dma.done [#allocation10], 16
        $region76: #{tpu_custom_call.1} parent=55 // pred_fallthru
          _
        // Predicated region
        $region77: #{tpu_custom_call.1} parent=55 // pred_check
          %p409 = pneg %p156
        $region78: #{tpu_custom_call.1} parent=55 // pred_check_branch
          %411 = sbr.rel (%p409) target = $region80
        $region79: #{tpu_custom_call.1} parent=55 // pred_region
          %412 = dma.done [#allocation13], 192
        $region80: #{tpu_custom_call.1} parent=55 // pred_fallthru
          _
        // Predicated region
        $region81: #{tpu_custom_call.1} parent=55 // pred_check
          %p413 = pneg %p177
        $region82: #{tpu_custom_call.1} parent=55 // pred_check_branch
          %415 = sbr.rel (%p413) target = $region84
        $region83: #{tpu_custom_call.1} parent=55 // pred_region
          %416 = dma.done [#allocation13], 16
        $region84: #{tpu_custom_call.1} parent=55 // pred_fallthru
          _
        // Predicated region
        $region85: #{tpu_custom_call.1} parent=55 // pred_check
          %p417 = pneg %p198
        $region86: #{tpu_custom_call.1} parent=55 // pred_check_branch
          %419 = sbr.rel (%p417) target = $region88
        $region87: #{tpu_custom_call.1} parent=55 // pred_region
          %420 = dma.done [#allocation16], 32
        $region88: #{tpu_custom_call.1} parent=55 // pred_fallthru
          _
        // Predicated region
        $region89: #{tpu_custom_call.1} parent=55 // pred_check
          %p421 = pneg %p219
        $region90: #{tpu_custom_call.1} parent=55 // pred_check_branch
          %423 = sbr.rel (%p421) target = $region92
        $region91: #{tpu_custom_call.1} parent=55 // pred_region
          %424 = dma.done [#allocation16], 16
        $region92: #{tpu_custom_call.1} parent=55 // pred_fallthru
          _
        %s425 = sand.u32 %s38, 1
        %s426 = scalar_lea.sflag [#allocation4], %s425
        %s427 = sand.u32 %s38, 1
        %s428 = smul.addr %s427, 256
        %s429 = scalar_lea.vmem [#allocation3], %s428
        %p430 = pneg %p51
        %p431 = pneg %p48
        %p432 = pneg %p72
        %p433 = pneg %p69
        %p434 = pneg %p93
        %p435 = pneg %p90
        %p436 = pneg %p114
        %p437 = pneg %p111
        %p438 = pneg %p135
        %p439 = pneg %p132
        %p440 = pneg %p156
        %p441 = pneg %p153
        %p442 = pneg %p177
        %p443 = pneg %p174
        %p444 = pneg %p198
        %p445 = pneg %p195
        %p446 = pneg %p219
        %p447 = pneg %p216
        %p448 = pneg %p245
        %p449 = pneg %p242
        %s450 = sand.u32 %s232, 1
        %s451 = scalar_lea.sflag [#allocation5], %s450
        %s452 = sand.u32 %s232, 1
        %s453 = smul.addr %s452, 256
        %s454 = scalar_lea.vmem [#allocation18], %s453
        %v456 = vld [vmem:[%s388] sm:$0xff]
        %v457 = vld [vmem:[%s388 + $0x8] sm:$0xff]
        %v458 = vld [vmem:[%s388 + $0x10] sm:$0xff]
        %v459 = vld [vmem:[%s388 + $0x18] sm:$0xff]
        %v460 = vld [vmem:[%s388 + $0x20] sm:$0xff]
        %v461 = vld [vmem:[%s388 + $0x28] sm:$0xff]
        %v462 = vld [vmem:[%s388 + $0x30] sm:$0xff]
        %v463 = vld [vmem:[%s388 + $0x38] sm:$0xff]
        %v464 = vld [vmem:[%s388 + $0x40] sm:$0xff]
        %v465 = vld [vmem:[%s388 + $0x48] sm:$0xff]
        %v466 = vld [vmem:[%s388 + $0x50] sm:$0xff]
        %v467 = vld [vmem:[%s388 + $0x58] sm:$0xff]
        %v468 = vld [vmem:[%s388 + $0x60] sm:$0xff]
        %v469 = vld [vmem:[%s388 + $0x68] sm:$0xff]
        %v470 = vld [vmem:[%s388 + $0x70] sm:$0xff]
        %v471 = vld [vmem:[%s388 + $0x78] sm:$0xff]
        %v472 = vld [vmem:[%s388 + $0x80] sm:$0xff]
        %v473 = vld [vmem:[%s388 + $0x88] sm:$0xff]
        %v474 = vld [vmem:[%s388 + $0x90] sm:$0xff]
        %v475 = vld [vmem:[%s388 + $0x98] sm:$0xff]
        %v476 = vld [vmem:[%s388 + $0xa0] sm:$0xff]
        %v477 = vld [vmem:[%s388 + $0xa8] sm:$0xff]
        %v478 = vld [vmem:[%s388 + $0xb0] sm:$0xff]
        %v479 = vld [vmem:[%s388 + $0xb8] sm:$0xff]
        %v480 = vld [vmem:[%s388 + $0xc0] sm:$0xff]
        %v481 = vld [vmem:[%s388 + $0xc8] sm:$0xff]
        %v482 = vld [vmem:[%s388 + $0xd0] sm:$0xff]
        %v483 = vld [vmem:[%s388 + $0xd8] sm:$0xff]
        %v484 = vld [vmem:[%s388 + $0xe0] sm:$0xff]
        %v485 = vld [vmem:[%s388 + $0xe8] sm:$0xff]
        %v486 = vld [vmem:[%s388 + $0xf0] sm:$0xff]
        %v487 = vld [vmem:[%s388 + $0xf8] sm:$0xff]
        %v488 = vpack.c.bf16 %v457, %v456
        %v489 = vpack.c.bf16 %v459, %v458
        %v490 = vpack.c.bf16 %v461, %v460
        %v491 = vpack.c.bf16 %v463, %v462
        %v492 = vpack.c.bf16 %v465, %v464
        %v493 = vpack.c.bf16 %v467, %v466
        %v494 = vpack.c.bf16 %v469, %v468
        %v495 = vpack.c.bf16 %v471, %v470
        %v496 = vpack.c.bf16 %v473, %v472
        %v497 = vpack.c.bf16 %v475, %v474
        %v498 = vpack.c.bf16 %v477, %v476
        %v499 = vpack.c.bf16 %v479, %v478
        %v500 = vpack.c.bf16 %v481, %v480
        %v501 = vpack.c.bf16 %v483, %v482
        %v502 = vpack.c.bf16 %v485, %v484
        %v503 = vpack.c.bf16 %v487, %v486
        %v504 = vld [vmem:[#allocation6] sm:$0x3]
        %v505 = vld [vmem:[#allocation8] sm:$0x1]
        %v507 = vlaneseq
        %v508 = vshrl.u32 %v507, 7
        %v509 = vsub.s32 0, %v508
        %v510 = vrot.slane %v505, %v509
        %vm512 = vcmask 31744
        %v514 = vsel %vm512, %v488, 0
        %v517 = vsel %vm512, %v489, 0
        %v520 = vsel %vm512, %v490, 0
        %v523 = vsel %vm512, %v491, 0
        %v526 = vsel %vm512, %v492, 0
        %v529 = vsel %vm512, %v493, 0
        %v532 = vsel %vm512, %v494, 0
        %v535 = vsel %vm512, %v495, 0
        %v538 = vsel %vm512, %v496, 0
        %v541 = vsel %vm512, %v497, 0
        %v544 = vsel %vm512, %v498, 0
        %v547 = vsel %vm512, %v499, 0
        %v550 = vsel %vm512, %v500, 0
        %v553 = vsel %vm512, %v501, 0
        %v556 = vsel %vm512, %v502, 0
        %v559 = vsel %vm512, %v503, 0
        %vm561 = vcmask 1041408
        %v563 = vsel %vm561, %v504, 0
        %565 = vmatprep.subr.bf16.mxu0 0
        %566 = vmatpush1.bf16.msra.mxu0 %v563
        %567 = vmatprep.subr.bf16.mxu0 0
        %568 = vmatpush1.bf16.msra.mxu0 0
        %569 = vmatprep.subr.bf16.mxu0 0
        %570 = vmatpush1.bf16.msra.mxu0 0
        %571 = vmatprep.subr.bf16.mxu0 0
        %572 = vmatpush1.bf16.msra.mxu0 0
        %573 = vmatprep.subr.bf16.mxu0 0
        %574 = vmatpush1.bf16.msra.mxu0 0
        %575 = vmatprep.subr.bf16.mxu0 0
        %576 = vmatpush1.bf16.msra.mxu0 0
        %577 = vmatprep.subr.bf16.mxu0 0
        %578 = vmatpush1.bf16.msra.mxu0 0
        %579 = vmatprep.subr.bf16.mxu0 0
        %580 = vmatpush1.bf16.msra.mxu0 0
        %581 = vmatprep.subr.bf16.mxu0 0
        %582 = vmatpush1.bf16.msra.mxu0 0
        %583 = vmatprep.subr.bf16.mxu0 0
        %584 = vmatpush1.bf16.msra.mxu0 0
        %585 = vmatprep.subr.bf16.mxu0 0
        %586 = vmatpush1.bf16.msra.mxu0 0
        %587 = vmatprep.subr.bf16.mxu0 0
        %588 = vmatpush1.bf16.msra.mxu0 0
        %589 = vmatprep.subr.bf16.mxu0 0
        %590 = vmatpush1.bf16.msra.mxu0 0
        %591 = vmatprep.subr.bf16.mxu0 0
        %592 = vmatpush1.bf16.msra.mxu0 0
        %593 = vmatprep.subr.bf16.mxu0 0
        %594 = vmatpush1.bf16.msra.mxu0 0
        %595 = vmatprep.subr.bf16.mxu0 0
        %596 = vmatpush1.bf16.msra.mxu0 0
        %597 = vmatprep.mubr.bf16.mxu0 0
        %598 = vmatmul.mubr.bf16.gmra.mrb[0].mxu0 %v514
        %v599 = vpop.f32.mrb[0].mxu0
        %v600 = vadd.f32 %v510, %v599
        %v601 = vpop.f32.mrb[0].mxu0
        %v602 = vpop.f32.mrb[0].mxu0
        %v603 = vadd.f32 %v510, %v602
        %v604 = vpop.f32.mrb[0].mxu0
        %605 = vmatprep.mubr.bf16.mxu0 0
        %606 = vmatmul.mubr.bf16.gmra.mrb[0].mxu0 %v517
        %v607 = vpop.f32.mrb[0].mxu0
        %v608 = vadd.f32 %v510, %v607
        %v609 = vpop.f32.mrb[0].mxu0
        %v610 = vpop.f32.mrb[0].mxu0
        %v611 = vadd.f32 %v510, %v610
        %v612 = vpop.f32.mrb[0].mxu0
        %613 = vmatprep.mubr.bf16.mxu0 0
        %614 = vmatmul.mubr.bf16.gmra.mrb[0].mxu0 %v520
        %v615 = vpop.f32.mrb[0].mxu0
        %v616 = vadd.f32 %v510, %v615
        %v617 = vpop.f32.mrb[0].mxu0
        %v618 = vpop.f32.mrb[0].mxu0
        %v619 = vadd.f32 %v510, %v618
        %v620 = vpop.f32.mrb[0].mxu0
        %621 = vmatprep.mubr.bf16.mxu0 0
        %622 = vmatmul.mubr.bf16.gmra.mrb[0].mxu0 %v523
        %v623 = vpop.f32.mrb[0].mxu0
        %v624 = vadd.f32 %v510, %v623
        %v625 = vpop.f32.mrb[0].mxu0
        %v626 = vpop.f32.mrb[0].mxu0
        %v627 = vadd.f32 %v510, %v626
        %v628 = vpop.f32.mrb[0].mxu0
        %629 = vmatprep.mubr.bf16.mxu0 0
        %630 = vmatmul.mubr.bf16.gmra.mrb[0].mxu0 %v526
        %v631 = vpop.f32.mrb[0].mxu0
        %v632 = vadd.f32 %v510, %v631
        %v633 = vpop.f32.mrb[0].mxu0
        %v634 = vpop.f32.mrb[0].mxu0
        %v635 = vadd.f32 %v510, %v634
        %v636 = vpop.f32.mrb[0].mxu0
        %637 = vmatprep.mubr.bf16.mxu0 0
        %638 = vmatmul.mubr.bf16.gmra.mrb[0].mxu0 %v529
        %v639 = vpop.f32.mrb[0].mxu0
        %v640 = vadd.f32 %v510, %v639
        %v641 = vpop.f32.mrb[0].mxu0
        %v642 = vpop.f32.mrb[0].mxu0
        %v643 = vadd.f32 %v510, %v642
        %v644 = vpop.f32.mrb[0].mxu0
        %645 = vmatprep.mubr.bf16.mxu0 0
        %646 = vmatmul.mubr.bf16.gmra.mrb[0].mxu0 %v532
        %v647 = vpop.f32.mrb[0].mxu0
        %v648 = vadd.f32 %v510, %v647
        %v649 = vpop.f32.mrb[0].mxu0
        %v650 = vpop.f32.mrb[0].mxu0
        %v651 = vadd.f32 %v510, %v650
        %v652 = vpop.f32.mrb[0].mxu0
        %653 = vmatprep.mubr.bf16.mxu0 0
        %654 = vmatmul.mubr.bf16.gmra.mrb[0].mxu0 %v535
        %v655 = vpop.f32.mrb[0].mxu0
        %v656 = vadd.f32 %v510, %v655
        %v657 = vpop.f32.mrb[0].mxu0
        %v658 = vpop.f32.mrb[0].mxu0
        %v659 = vadd.f32 %v510, %v658
        %v660 = vpop.f32.mrb[0].mxu0
        %661 = vmatprep.mubr.bf16.mxu0 0
        %662 = vmatmul.mubr.bf16.gmra.mrb[0].mxu0 %v538
        %v663 = vpop.f32.mrb[0].mxu0
        %v664 = vadd.f32 %v510, %v663
        %v665 = vpop.f32.mrb[0].mxu0
        %v666 = vpop.f32.mrb[0].mxu0
        %v667 = vadd.f32 %v510, %v666
        %v668 = vpop.f32.mrb[0].mxu0
        %669 = vmatprep.mubr.bf16.mxu0 0
        %670 = vmatmul.mubr.bf16.gmra.mrb[0].mxu0 %v541
        %v671 = vpop.f32.mrb[0].mxu0
        %v672 = vadd.f32 %v510, %v671
        %v673 = vpop.f32.mrb[0].mxu0
        %v674 = vpop.f32.mrb[0].mxu0
        %v675 = vadd.f32 %v510, %v674
        %v676 = vpop.f32.mrb[0].mxu0
        %677 = vmatprep.mubr.bf16.mxu0 0
        %678 = vmatmul.mubr.bf16.gmra.mrb[0].mxu0 %v544
        %v679 = vpop.f32.mrb[0].mxu0
        %v680 = vadd.f32 %v510, %v679
        %v681 = vpop.f32.mrb[0].mxu0
        %v682 = vpop.f32.mrb[0].mxu0
        %v683 = vadd.f32 %v510, %v682
        %v684 = vpop.f32.mrb[0].mxu0
        %685 = vmatprep.mubr.bf16.mxu0 0
        %686 = vmatmul.mubr.bf16.gmra.mrb[0].mxu0 %v547
        %v687 = vpop.f32.mrb[0].mxu0
        %v688 = vadd.f32 %v510, %v687
        %v689 = vpop.f32.mrb[0].mxu0
        %v690 = vpop.f32.mrb[0].mxu0
        %v691 = vadd.f32 %v510, %v690
        %v692 = vpop.f32.mrb[0].mxu0
        %693 = vmatprep.mubr.bf16.mxu0 0
        %694 = vmatmul.mubr.bf16.gmra.mrb[0].mxu0 %v550
        %v695 = vpop.f32.mrb[0].mxu0
        %v696 = vadd.f32 %v510, %v695
        %v697 = vpop.f32.mrb[0].mxu0
        %v698 = vpop.f32.mrb[0].mxu0
        %v699 = vadd.f32 %v510, %v698
        %v700 = vpop.f32.mrb[0].mxu0
        %701 = vmatprep.mubr.bf16.mxu0 0
        %702 = vmatmul.mubr.bf16.gmra.mrb[0].mxu0 %v553
        %v703 = vpop.f32.mrb[0].mxu0
        %v704 = vadd.f32 %v510, %v703
        %v705 = vpop.f32.mrb[0].mxu0
        %v706 = vpop.f32.mrb[0].mxu0
        %v707 = vadd.f32 %v510, %v706
        %v708 = vpop.f32.mrb[0].mxu0
        %709 = vmatprep.mubr.bf16.mxu0 0
        %710 = vmatmul.mubr.bf16.gmra.mrb[0].mxu0 %v556
        %v711 = vpop.f32.mrb[0].mxu0
        %v712 = vadd.f32 %v510, %v711
        %v713 = vpop.f32.mrb[0].mxu0
        %v714 = vpop.f32.mrb[0].mxu0
        %v715 = vadd.f32 %v510, %v714
        %v716 = vpop.f32.mrb[0].mxu0
        %717 = vmatprep.mubr.bf16.mxu0 0
        %718 = vmatmul.mubr.bf16.gmra.mrb[0].mxu0 %v559
        %v719 = vpop.f32.mrb[0].mxu0
        %v720 = vadd.f32 %v510, %v719
        %v721 = vpop.f32.mrb[0].mxu0
        %v722 = vpop.f32.mrb[0].mxu0
        %v723 = vadd.f32 %v510, %v722
        %v724 = vpop.f32.mrb[0].mxu0
        %725 = vdwg.mxu0
        %v726 = vmax.f32 %v600, 0.0
        %v727 = vmax.f32 %v603, 0.0
        %v728 = vmax.f32 %v608, 0.0
        %v729 = vmax.f32 %v611, 0.0
        %v730 = vmax.f32 %v616, 0.0
        %v731 = vmax.f32 %v619, 0.0
        %v732 = vmax.f32 %v624, 0.0
        %v733 = vmax.f32 %v627, 0.0
        %v734 = vmax.f32 %v632, 0.0
        %v735 = vmax.f32 %v635, 0.0
        %v736 = vmax.f32 %v640, 0.0
        %v737 = vmax.f32 %v643, 0.0
        %v738 = vmax.f32 %v648, 0.0
        %v739 = vmax.f32 %v651, 0.0
        %v740 = vmax.f32 %v656, 0.0
        %v741 = vmax.f32 %v659, 0.0
        %v742 = vmax.f32 %v664, 0.0
        %v743 = vmax.f32 %v667, 0.0
        %v744 = vmax.f32 %v672, 0.0
        %v745 = vmax.f32 %v675, 0.0
        %v746 = vmax.f32 %v680, 0.0
        %v747 = vmax.f32 %v683, 0.0
        %v748 = vmax.f32 %v688, 0.0
        %v749 = vmax.f32 %v691, 0.0
        %v750 = vmax.f32 %v696, 0.0
        %v751 = vmax.f32 %v699, 0.0
        %v752 = vmax.f32 %v704, 0.0
        %v753 = vmax.f32 %v707, 0.0
        %v754 = vmax.f32 %v712, 0.0
        %v755 = vmax.f32 %v715, 0.0
        %v756 = vmax.f32 %v720, 0.0
        %v757 = vmax.f32 %v723, 0.0
        %v758 = vmin.f32 %v726, 6.0
        %v759 = vmin.f32 %v727, 6.0
        %v760 = vmin.f32 %v728, 6.0
        %v761 = vmin.f32 %v729, 6.0
        %v762 = vmin.f32 %v730, 6.0
        %v763 = vmin.f32 %v731, 6.0
        %v764 = vmin.f32 %v732, 6.0
        %v765 = vmin.f32 %v733, 6.0
        %v766 = vmin.f32 %v734, 6.0
        %v767 = vmin.f32 %v735, 6.0
        %v768 = vmin.f32 %v736, 6.0
        %v769 = vmin.f32 %v737, 6.0
        %v770 = vmin.f32 %v738, 6.0
        %v771 = vmin.f32 %v739, 6.0
        %v772 = vmin.f32 %v740, 6.0
        %v773 = vmin.f32 %v741, 6.0
        %v774 = vmin.f32 %v742, 6.0
        %v775 = vmin.f32 %v743, 6.0
        %v776 = vmin.f32 %v744, 6.0
        %v777 = vmin.f32 %v745, 6.0
        %v778 = vmin.f32 %v746, 6.0
        %v779 = vmin.f32 %v747, 6.0
        %v780 = vmin.f32 %v748, 6.0
        %v781 = vmin.f32 %v749, 6.0
        %v782 = vmin.f32 %v750, 6.0
        %v783 = vmin.f32 %v751, 6.0
        %v784 = vmin.f32 %v752, 6.0
        %v785 = vmin.f32 %v753, 6.0
        %v786 = vmin.f32 %v754, 6.0
        %v787 = vmin.f32 %v755, 6.0
        %v788 = vmin.f32 %v756, 6.0
        %v789 = vmin.f32 %v757, 6.0
        %vm790 = vcmask 195584
        %791 = vst.msk [vmem:[#allocation2] sm:$0xff] %vm790, 0.0
        %792 = vst.msk [vmem:[#allocation2 + $0x8] sm:$0xff] %vm790, 0.0
        %vm793 = vcmask 189440
        %794 = vst.msk [vmem:[#allocation2 + $0x10] sm:$0x3] %vm793, 0.0
        %795 = vst.msk [vmem:[#allocation2 + $0x18] sm:$0xff] %vm790, 0.0
        %796 = vst.msk [vmem:[#allocation2 + $0x20] sm:$0xff] %vm790, 0.0
        %797 = vst.msk [vmem:[#allocation2 + $0x28] sm:$0x3] %vm793, 0.0
        %798 = vst.msk [vmem:[#allocation2 + $0x30] sm:$0xff] %vm790, 0.0
        %799 = vst.msk [vmem:[#allocation2 + $0x38] sm:$0xff] %vm790, 0.0
        %800 = vst.msk [vmem:[#allocation2 + $0x40] sm:$0x3] %vm793, 0.0
        %801 = vst.msk [vmem:[#allocation2 + $0x48] sm:$0xff] %vm790, 0.0
        %802 = vst.msk [vmem:[#allocation2 + $0x50] sm:$0xff] %vm790, 0.0
        %803 = vst.msk [vmem:[#allocation2 + $0x58] sm:$0x3] %vm793, 0.0
        %804 = vst.msk [vmem:[#allocation2 + $0x60] sm:$0xff] %vm790, 0.0
        %805 = vst.msk [vmem:[#allocation2 + $0x68] sm:$0xff] %vm790, 0.0
        %806 = vst.msk [vmem:[#allocation2 + $0x70] sm:$0x3] %vm793, 0.0
        %807 = vst.msk [vmem:[#allocation2 + $0x78] sm:$0xff] %vm790, 0.0
        %808 = vst.msk [vmem:[#allocation2 + $0x80] sm:$0xff] %vm790, 0.0
        %809 = vst.msk [vmem:[#allocation2 + $0x88] sm:$0x3] %vm793, 0.0
        %810 = vst.msk [vmem:[#allocation2 + $0x90] sm:$0xff] %vm790, 0.0
        %811 = vst.msk [vmem:[#allocation2 + $0x98] sm:$0xff] %vm790, 0.0
        %812 = vst.msk [vmem:[#allocation2 + $0xa0] sm:$0x3] %vm793, 0.0
        %813 = vst.msk [vmem:[#allocation2 + $0xa8] sm:$0xff] %vm790, 0.0
        %814 = vst.msk [vmem:[#allocation2 + $0xb0] sm:$0xff] %vm790, 0.0
        %815 = vst.msk [vmem:[#allocation2 + $0xb8] sm:$0x3] %vm793, 0.0
        %816 = vst.msk [vmem:[#allocation2 + $0xc0] sm:$0xff] %vm790, 0.0
        %817 = vst.msk [vmem:[#allocation2 + $0xc8] sm:$0xff] %vm790, 0.0
        %818 = vst.msk [vmem:[#allocation2 + $0xd0] sm:$0x3] %vm793, 0.0
        %819 = vst.msk [vmem:[#allocation2 + $0xd8] sm:$0xff] %vm790, 0.0
        %820 = vst.msk [vmem:[#allocation2 + $0xe0] sm:$0xff] %vm790, 0.0
        %821 = vst.msk [vmem:[#allocation2 + $0xe8] sm:$0x3] %vm793, 0.0
        %822 = vst.msk [vmem:[#allocation2 + $0xf0] sm:$0xff] %vm790, 0.0
        %823 = vst.msk [vmem:[#allocation2 + $0xf8] sm:$0xff] %vm790, 0.0
        %824 = vst.msk [vmem:[#allocation2 + $0x100] sm:$0x3] %vm793, 0.0
        %825 = vst.msk [vmem:[#allocation2 + $0x108] sm:$0xff] %vm790, 0.0
        %826 = vst.msk [vmem:[#allocation2 + $0x110] sm:$0xff] %vm790, 0.0
        %827 = vst.msk [vmem:[#allocation2 + $0x118] sm:$0x3] %vm793, 0.0
        %828 = vst.msk [vmem:[#allocation2 + $0x120] sm:$0xff] %vm790, 0.0
        %829 = vst.msk [vmem:[#allocation2 + $0x128] sm:$0xff] %vm790, 0.0
        %830 = vst.msk [vmem:[#allocation2 + $0x130] sm:$0x3] %vm793, 0.0
        %831 = vst.msk [vmem:[#allocation2 + $0x138] sm:$0xff] %vm790, 0.0
        %832 = vst.msk [vmem:[#allocation2 + $0x140] sm:$0xff] %vm790, 0.0
        %833 = vst.msk [vmem:[#allocation2 + $0x148] sm:$0x3] %vm793, 0.0
        %834 = vst.msk [vmem:[#allocation2 + $0x150] sm:$0xff] %vm790, 0.0
        %835 = vst.msk [vmem:[#allocation2 + $0x158] sm:$0xff] %vm790, 0.0
        %836 = vst.msk [vmem:[#allocation2 + $0x160] sm:$0x3] %vm793, 0.0
        %837 = vst.msk [vmem:[#allocation2 + $0x168] sm:$0xff] %vm790, 0.0
        %838 = vst.msk [vmem:[#allocation2 + $0x170] sm:$0xff] %vm790, 0.0
        %839 = vst.msk [vmem:[#allocation2 + $0x178] sm:$0x3] %vm793, 0.0
        %840 = vst.msk [vmem:[#allocation2 + $0x180] sm:$0xff] %vm790, 0.0
        %841 = vst.msk [vmem:[#allocation2 + $0x188] sm:$0xff] %vm790, 0.0
        %842 = vst.msk [vmem:[#allocation2 + $0x190] sm:$0x3] %vm793, 0.0
        %843 = vst.msk [vmem:[#allocation2 + $0x198] sm:$0xff] %vm790, 0.0
        %844 = vst.msk [vmem:[#allocation2 + $0x1a0] sm:$0xff] %vm790, 0.0
        %845 = vst.msk [vmem:[#allocation2 + $0x1a8] sm:$0x3] %vm793, 0.0
        %s846 = scalar_lea.vmem [#allocation2], 24
        %847 = vst.msk [vmem:[%s846 + $0x1] sm:$0xff] %vm790, %v758
        %848 = vst.msk [vmem:[%s846 + $0x9] sm:$0xff] %vm790, %v759
        %849 = vst.msk [vmem:[%s846 + $0x19] sm:$0xff] %vm790, %v760
        %850 = vst.msk [vmem:[%s846 + $0x21] sm:$0xff] %vm790, %v761
        %851 = vst.msk [vmem:[%s846 + $0x31] sm:$0xff] %vm790, %v762
        %852 = vst.msk [vmem:[%s846 + $0x39] sm:$0xff] %vm790, %v763
        %853 = vst.msk [vmem:[%s846 + $0x49] sm:$0xff] %vm790, %v764
        %854 = vst.msk [vmem:[%s846 + $0x51] sm:$0xff] %vm790, %v765
        %855 = vst.msk [vmem:[%s846 + $0x61] sm:$0xff] %vm790, %v766
        %856 = vst.msk [vmem:[%s846 + $0x69] sm:$0xff] %vm790, %v767
        %857 = vst.msk [vmem:[%s846 + $0x79] sm:$0xff] %vm790, %v768
        %858 = vst.msk [vmem:[%s846 + $0x81] sm:$0xff] %vm790, %v769
        %859 = vst.msk [vmem:[%s846 + $0x91] sm:$0xff] %vm790, %v770
        %860 = vst.msk [vmem:[%s846 + $0x99] sm:$0xff] %vm790, %v771
        %861 = vst.msk [vmem:[%s846 + $0xa9] sm:$0xff] %vm790, %v772
        %862 = vst.msk [vmem:[%s846 + $0xb1] sm:$0xff] %vm790, %v773
        %863 = vst.msk [vmem:[%s846 + $0xc1] sm:$0xff] %vm790, %v774
        %864 = vst.msk [vmem:[%s846 + $0xc9] sm:$0xff] %vm790, %v775
        %865 = vst.msk [vmem:[%s846 + $0xd9] sm:$0xff] %vm790, %v776
        %866 = vst.msk [vmem:[%s846 + $0xe1] sm:$0xff] %vm790, %v777
        %867 = vst.msk [vmem:[%s846 + $0xf1] sm:$0xff] %vm790, %v778
        %868 = vst.msk [vmem:[%s846 + $0xf9] sm:$0xff] %vm790, %v779
        %869 = vst.msk [vmem:[%s846 + $0x109] sm:$0xff] %vm790, %v780
        %870 = vst.msk [vmem:[%s846 + $0x111] sm:$0xff] %vm790, %v781
        %871 = vst.msk [vmem:[%s846 + $0x121] sm:$0xff] %vm790, %v782
        %872 = vst.msk [vmem:[%s846 + $0x129] sm:$0xff] %vm790, %v783
        %873 = vst.msk [vmem:[%s846 + $0x139] sm:$0xff] %vm790, %v784
        %874 = vst.msk [vmem:[%s846 + $0x141] sm:$0xff] %vm790, %v785
        %875 = vst.msk [vmem:[%s846 + $0x151] sm:$0xff] %vm790, %v786
        %876 = vst.msk [vmem:[%s846 + $0x159] sm:$0xff] %vm790, %v787
        %877 = vst.msk [vmem:[%s846 + $0x169] sm:$0xff] %vm790, %v788
        %878 = vst.msk [vmem:[%s846 + $0x171] sm:$0xff] %vm790, %v789
        %v879 = vld [vmem:[#allocation2] sm:$0xff]
        %v880 = vld [vmem:[#allocation2 + $0x8] sm:$0xff]
        %v881 = vld [vmem:[#allocation2 + $0x10] sm:$0x3]
        %v882 = vld [vmem:[#allocation2 + $0x18] sm:$0xff]
        %v883 = vld [vmem:[#allocation2 + $0x20] sm:$0xff]
        %v884 = vld [vmem:[#allocation2 + $0x28] sm:$0x3]
        %v885 = vld [vmem:[#allocation2 + $0x30] sm:$0xff]
        %v886 = vld [vmem:[#allocation2 + $0x38] sm:$0xff]
        %v887 = vld [vmem:[#allocation2 + $0x40] sm:$0x3]
        %v888 = vld [vmem:[#allocation2 + $0x48] sm:$0xff]
        %v889 = vld [vmem:[#allocation2 + $0x50] sm:$0xff]
        %v890 = vld [vmem:[#allocation2 + $0x58] sm:$0x3]
        %v891 = vld [vmem:[#allocation2 + $0x60] sm:$0xff]
        %v892 = vld [vmem:[#allocation2 + $0x68] sm:$0xff]
        %v893 = vld [vmem:[#allocation2 + $0x70] sm:$0x3]
        %v894 = vld [vmem:[#allocation2 + $0x78] sm:$0xff]
        %v895 = vld [vmem:[#allocation2 + $0x80] sm:$0xff]
        %v896 = vld [vmem:[#allocation2 + $0x88] sm:$0x3]
        %v897 = vld [vmem:[#allocation2 + $0x90] sm:$0xff]
        %v898 = vld [vmem:[#allocation2 + $0x98] sm:$0xff]
        %v899 = vld [vmem:[#allocation2 + $0xa0] sm:$0x3]
        %v900 = vld [vmem:[#allocation2 + $0xa8] sm:$0xff]
        %v901 = vld [vmem:[#allocation2 + $0xb0] sm:$0xff]
        %v902 = vld [vmem:[#allocation2 + $0xb8] sm:$0x3]
        %v903 = vld [vmem:[#allocation2 + $0xc0] sm:$0xff]
        %v904 = vld [vmem:[#allocation2 + $0xc8] sm:$0xff]
        %v905 = vld [vmem:[#allocation2 + $0xd0] sm:$0x3]
        %v906 = vld [vmem:[#allocation2 + $0xd8] sm:$0xff]
        %v907 = vld [vmem:[#allocation2 + $0xe0] sm:$0xff]
        %v908 = vld [vmem:[#allocation2 + $0xe8] sm:$0x3]
        %v909 = vld [vmem:[#allocation2 + $0xf0] sm:$0xff]
        %v910 = vld [vmem:[#allocation2 + $0xf8] sm:$0xff]
        %v911 = vld [vmem:[#allocation2 + $0x100] sm:$0x3]
        %v912 = vld [vmem:[#allocation2 + $0x108] sm:$0xff]
        %v913 = vld [vmem:[#allocation2 + $0x110] sm:$0xff]
        %v914 = vld [vmem:[#allocation2 + $0x118] sm:$0x3]
        %v915 = vld [vmem:[#allocation2 + $0x120] sm:$0xff]
        %v916 = vld [vmem:[#allocation2 + $0x128] sm:$0xff]
        %v917 = vld [vmem:[#allocation2 + $0x130] sm:$0x3]
        %v918 = vld [vmem:[#allocation2 + $0x138] sm:$0xff]
        %v919 = vld [vmem:[#allocation2 + $0x140] sm:$0xff]
        %v920 = vld [vmem:[#allocation2 + $0x148] sm:$0x3]
        %v921 = vld [vmem:[#allocation2 + $0x150] sm:$0xff]
        %v922 = vld [vmem:[#allocation2 + $0x158] sm:$0xff]
        %v923 = vld [vmem:[#allocation2 + $0x160] sm:$0x3]
        %v924 = vld [vmem:[#allocation2 + $0x168] sm:$0xff]
        %v925 = vld [vmem:[#allocation2 + $0x170] sm:$0xff]
        %v926 = vld [vmem:[#allocation2 + $0x178] sm:$0x3]
        %v927 = vld [vmem:[#allocation9] sm:$0x1]
        %v928 = vlaneseq
        %v929 = vshrl.u32 %v928, 7
        %v930 = vsub.s32 0, %v929
        %v931 = vrot.slane %v927, %v930
        %v932 = vmul.f32 %v879, %v931
        %v933 = vmul.f32 %v880, %v931
        %v934 = vmul.f32 %v882, %v931
        %v935 = vmul.f32 %v883, %v931
        %v936 = vmul.f32 %v885, %v931
        %v937 = vmul.f32 %v886, %v931
        %v938 = vmul.f32 %v888, %v931
        %v939 = vmul.f32 %v889, %v931
        %v940 = vmul.f32 %v891, %v931
        %v941 = vmul.f32 %v892, %v931
        %v942 = vmul.f32 %v894, %v931
        %v943 = vmul.f32 %v895, %v931
        %v944 = vmul.f32 %v897, %v931
        %v945 = vmul.f32 %v898, %v931
        %v946 = vmul.f32 %v900, %v931
        %v947 = vmul.f32 %v901, %v931
        %v948 = vmul.f32 %v903, %v931
        %v949 = vmul.f32 %v904, %v931
        %v950 = vmul.f32 %v906, %v931
        %v951 = vmul.f32 %v907, %v931
        %v952 = vmul.f32 %v909, %v931
        %v953 = vmul.f32 %v910, %v931
        %v954 = vmul.f32 %v912, %v931
        %v955 = vmul.f32 %v913, %v931
        %v956 = vmul.f32 %v915, %v931
        %v957 = vmul.f32 %v916, %v931
        %v958 = vmul.f32 %v918, %v931
        %v959 = vmul.f32 %v919, %v931
        %v960 = vmul.f32 %v921, %v931
        %v961 = vmul.f32 %v922, %v931
        %v962 = vmul.f32 %v924, %v931
        %v963 = vmul.f32 %v925, %v931
        %v964 = vadd.f32 %v932, 0.0
        %v965 = vadd.f32 %v933, 0.0
        %v966 = vadd.f32 %v934, 0.0
        %v967 = vadd.f32 %v935, 0.0
        %v968 = vadd.f32 %v936, 0.0
        %v969 = vadd.f32 %v937, 0.0
        %v970 = vadd.f32 %v938, 0.0
        %v971 = vadd.f32 %v939, 0.0
        %v972 = vadd.f32 %v940, 0.0
        %v973 = vadd.f32 %v941, 0.0
        %v974 = vadd.f32 %v942, 0.0
        %v975 = vadd.f32 %v943, 0.0
        %v976 = vadd.f32 %v944, 0.0
        %v977 = vadd.f32 %v945, 0.0
        %v978 = vadd.f32 %v946, 0.0
        %v979 = vadd.f32 %v947, 0.0
        %v980 = vadd.f32 %v948, 0.0
        %v981 = vadd.f32 %v949, 0.0
        %v982 = vadd.f32 %v950, 0.0
        %v983 = vadd.f32 %v951, 0.0
        %v984 = vadd.f32 %v952, 0.0
        %v985 = vadd.f32 %v953, 0.0
        %v986 = vadd.f32 %v954, 0.0
        %v987 = vadd.f32 %v955, 0.0
        %v988 = vadd.f32 %v956, 0.0
        %v989 = vadd.f32 %v957, 0.0
        %v990 = vadd.f32 %v958, 0.0
        %v991 = vadd.f32 %v959, 0.0
        %v992 = vadd.f32 %v960, 0.0
        %v993 = vadd.f32 %v961, 0.0
        %v994 = vadd.f32 %v962, 0.0
        %v995 = vadd.f32 %v963, 0.0
        %v996 = vld [vmem:[#allocation9 + $0x1] sm:$0x1]
        %v997 = vlaneseq
        %v998 = vshrl.u32 %v997, 7
        %v999 = vsub.s32 0, %v998
        %v1000 = vrot.slane %v996, %v999
        %v1001 = vmul.f32 %v879, %v1000
        %v1002 = vmul.f32 %v880, %v1000
        %v1003 = vmul.f32 %v881, %v1000
        %v1004 = vmul.f32 %v882, %v1000
        %v1005 = vmul.f32 %v883, %v1000
        %v1006 = vmul.f32 %v884, %v1000
        %v1007 = vmul.f32 %v885, %v1000
        %v1008 = vmul.f32 %v886, %v1000
        %v1009 = vmul.f32 %v887, %v1000
        %v1010 = vmul.f32 %v888, %v1000
        %v1011 = vmul.f32 %v889, %v1000
        %v1012 = vmul.f32 %v890, %v1000
        %v1013 = vmul.f32 %v891, %v1000
        %v1014 = vmul.f32 %v892, %v1000
        %v1015 = vmul.f32 %v893, %v1000
        %v1016 = vmul.f32 %v894, %v1000
        %v1017 = vmul.f32 %v895, %v1000
        %v1018 = vmul.f32 %v896, %v1000
        %v1019 = vmul.f32 %v897, %v1000
        %v1020 = vmul.f32 %v898, %v1000
        %v1021 = vmul.f32 %v899, %v1000
        %v1022 = vmul.f32 %v900, %v1000
        %v1023 = vmul.f32 %v901, %v1000
        %v1024 = vmul.f32 %v902, %v1000
        %v1025 = vmul.f32 %v903, %v1000
        %v1026 = vmul.f32 %v904, %v1000
        %v1027 = vmul.f32 %v905, %v1000
        %v1028 = vmul.f32 %v906, %v1000
        %v1029 = vmul.f32 %v907, %v1000
        %v1030 = vmul.f32 %v908, %v1000
        %v1031 = vmul.f32 %v909, %v1000
        %v1032 = vmul.f32 %v910, %v1000
        %v1033 = vmul.f32 %v911, %v1000
        %v1034 = vmul.f32 %v912, %v1000
        %v1035 = vmul.f32 %v913, %v1000
        %v1036 = vmul.f32 %v914, %v1000
        %v1037 = vmul.f32 %v915, %v1000
        %v1038 = vmul.f32 %v916, %v1000
        %v1039 = vmul.f32 %v917, %v1000
        %v1040 = vmul.f32 %v918, %v1000
        %v1041 = vmul.f32 %v919, %v1000
        %v1042 = vmul.f32 %v920, %v1000
        %v1043 = vmul.f32 %v921, %v1000
        %v1044 = vmul.f32 %v922, %v1000
        %v1045 = vmul.f32 %v923, %v1000
        %v1046 = vmul.f32 %v924, %v1000
        %v1047 = vmul.f32 %v925, %v1000
        %v1048 = vmul.f32 %v926, %v1000
        %vm1097 = vcmask 1046528
        %v1098 = vrot.slane %v1001, 1
        %v1099 = vrot.slane %v1002, 1
        %v1100 = vsel %vm1097, %v1098, %v1099
        %v1101 = vrot.slane %v1003, 1
        %v1102 = vsel %vm1097, %v1099, %v1101
        %v1103 = vrot.slane %v1004, 1
        %v1104 = vrot.slane %v1005, 1
        %v1105 = vsel %vm1097, %v1103, %v1104
        %v1106 = vrot.slane %v1006, 1
        %v1107 = vsel %vm1097, %v1104, %v1106
        %v1108 = vrot.slane %v1007, 1
        %v1109 = vrot.slane %v1008, 1
        %v1110 = vsel %vm1097, %v1108, %v1109
        %v1111 = vrot.slane %v1009, 1
        %v1112 = vsel %vm1097, %v1109, %v1111
        %v1113 = vrot.slane %v1010, 1
        %v1114 = vrot.slane %v1011, 1
        %v1115 = vsel %vm1097, %v1113, %v1114
        %v1116 = vrot.slane %v1012, 1
        %v1117 = vsel %vm1097, %v1114, %v1116
        %v1118 = vrot.slane %v1013, 1
        %v1119 = vrot.slane %v1014, 1
        %v1120 = vsel %vm1097, %v1118, %v1119
        %v1121 = vrot.slane %v1015, 1
        %v1122 = vsel %vm1097, %v1119, %v1121
        %v1123 = vrot.slane %v1016, 1
        %v1124 = vrot.slane %v1017, 1
        %v1125 = vsel %vm1097, %v1123, %v1124
        %v1126 = vrot.slane %v1018, 1
        %v1127 = vsel %vm1097, %v1124, %v1126
        %v1128 = vrot.slane %v1019, 1
        %v1129 = vrot.slane %v1020, 1
        %v1130 = vsel %vm1097, %v1128, %v1129
        %v1131 = vrot.slane %v1021, 1
        %v1132 = vsel %vm1097, %v1129, %v1131
        %v1133 = vrot.slane %v1022, 1
        %v1134 = vrot.slane %v1023, 1
        %v1135 = vsel %vm1097, %v1133, %v1134
        %v1136 = vrot.slane %v1024, 1
        %v1137 = vsel %vm1097, %v1134, %v1136
        %v1138 = vrot.slane %v1025, 1
        %v1139 = vrot.slane %v1026, 1
        %v1140 = vsel %vm1097, %v1138, %v1139
        %v1141 = vrot.slane %v1027, 1
        %v1142 = vsel %vm1097, %v1139, %v1141
        %v1143 = vrot.slane %v1028, 1
        %v1144 = vrot.slane %v1029, 1
        %v1145 = vsel %vm1097, %v1143, %v1144
        %v1146 = vrot.slane %v1030, 1
        %v1147 = vsel %vm1097, %v1144, %v1146
        %v1148 = vrot.slane %v1031, 1
        %v1149 = vrot.slane %v1032, 1
        %v1150 = vsel %vm1097, %v1148, %v1149
        %v1151 = vrot.slane %v1033, 1
        %v1152 = vsel %vm1097, %v1149, %v1151
        %v1153 = vrot.slane %v1034, 1
        %v1154 = vrot.slane %v1035, 1
        %v1155 = vsel %vm1097, %v1153, %v1154
        %v1156 = vrot.slane %v1036, 1
        %v1157 = vsel %vm1097, %v1154, %v1156
        %v1158 = vrot.slane %v1037, 1
        %v1159 = vrot.slane %v1038, 1
        %v1160 = vsel %vm1097, %v1158, %v1159
        %v1161 = vrot.slane %v1039, 1
        %v1162 = vsel %vm1097, %v1159, %v1161
        %v1163 = vrot.slane %v1040, 1
        %v1164 = vrot.slane %v1041, 1
        %v1165 = vsel %vm1097, %v1163, %v1164
        %v1166 = vrot.slane %v1042, 1
        %v1167 = vsel %vm1097, %v1164, %v1166
        %v1168 = vrot.slane %v1043, 1
        %v1169 = vrot.slane %v1044, 1
        %v1170 = vsel %vm1097, %v1168, %v1169
        %v1171 = vrot.slane %v1045, 1
        %v1172 = vsel %vm1097, %v1169, %v1171
        %v1173 = vrot.slane %v1046, 1
        %v1174 = vrot.slane %v1047, 1
        %v1175 = vsel %vm1097, %v1173, %v1174
        %v1176 = vrot.slane %v1048, 1
        %v1177 = vsel %vm1097, %v1174, %v1176
        %v1210 = vadd.f32 %v964, %v1100
        %v1211 = vadd.f32 %v965, %v1102
        %v1212 = vadd.f32 %v966, %v1105
        %v1213 = vadd.f32 %v967, %v1107
        %v1214 = vadd.f32 %v968, %v1110
        %v1215 = vadd.f32 %v969, %v1112
        %v1216 = vadd.f32 %v970, %v1115
        %v1217 = vadd.f32 %v971, %v1117
        %v1218 = vadd.f32 %v972, %v1120
        %v1219 = vadd.f32 %v973, %v1122
        %v1220 = vadd.f32 %v974, %v1125
        %v1221 = vadd.f32 %v975, %v1127
        %v1222 = vadd.f32 %v976, %v1130
        %v1223 = vadd.f32 %v977, %v1132
        %v1224 = vadd.f32 %v978, %v1135
        %v1225 = vadd.f32 %v979, %v1137
        %v1226 = vadd.f32 %v980, %v1140
        %v1227 = vadd.f32 %v981, %v1142
        %v1228 = vadd.f32 %v982, %v1145
        %v1229 = vadd.f32 %v983, %v1147
        %v1230 = vadd.f32 %v984, %v1150
        %v1231 = vadd.f32 %v985, %v1152
        %v1232 = vadd.f32 %v986, %v1155
        %v1233 = vadd.f32 %v987, %v1157
        %v1234 = vadd.f32 %v988, %v1160
        %v1235 = vadd.f32 %v989, %v1162
        %v1236 = vadd.f32 %v990, %v1165
        %v1237 = vadd.f32 %v991, %v1167
        %v1238 = vadd.f32 %v992, %v1170
        %v1239 = vadd.f32 %v993, %v1172
        %v1240 = vadd.f32 %v994, %v1175
        %v1241 = vadd.f32 %v995, %v1177
        %v1242 = vld [vmem:[#allocation9 + $0x2] sm:$0x1]
        %v1243 = vlaneseq
        %v1244 = vshrl.u32 %v1243, 7
        %v1245 = vsub.s32 0, %v1244
        %v1246 = vrot.slane %v1242, %v1245
        %v1247 = vmul.f32 %v879, %v1246
        %v1248 = vmul.f32 %v880, %v1246
        %v1249 = vmul.f32 %v881, %v1246
        %v1250 = vmul.f32 %v882, %v1246
        %v1251 = vmul.f32 %v883, %v1246
        %v1252 = vmul.f32 %v884, %v1246
        %v1253 = vmul.f32 %v885, %v1246
        %v1254 = vmul.f32 %v886, %v1246
        %v1255 = vmul.f32 %v887, %v1246
        %v1256 = vmul.f32 %v888, %v1246
        %v1257 = vmul.f32 %v889, %v1246
        %v1258 = vmul.f32 %v890, %v1246
        %v1259 = vmul.f32 %v891, %v1246
        %v1260 = vmul.f32 %v892, %v1246
        %v1261 = vmul.f32 %v893, %v1246
        %v1262 = vmul.f32 %v894, %v1246
        %v1263 = vmul.f32 %v895, %v1246
        %v1264 = vmul.f32 %v896, %v1246
        %v1265 = vmul.f32 %v897, %v1246
        %v1266 = vmul.f32 %v898, %v1246
        %v1267 = vmul.f32 %v899, %v1246
        %v1268 = vmul.f32 %v900, %v1246
        %v1269 = vmul.f32 %v901, %v1246
        %v1270 = vmul.f32 %v902, %v1246
        %v1271 = vmul.f32 %v903, %v1246
        %v1272 = vmul.f32 %v904, %v1246
        %v1273 = vmul.f32 %v905, %v1246
        %v1274 = vmul.f32 %v906, %v1246
        %v1275 = vmul.f32 %v907, %v1246
        %v1276 = vmul.f32 %v908, %v1246
        %v1277 = vmul.f32 %v909, %v1246
        %v1278 = vmul.f32 %v910, %v1246
        %v1279 = vmul.f32 %v911, %v1246
        %v1280 = vmul.f32 %v912, %v1246
        %v1281 = vmul.f32 %v913, %v1246
        %v1282 = vmul.f32 %v914, %v1246
        %v1283 = vmul.f32 %v915, %v1246
        %v1284 = vmul.f32 %v916, %v1246
        %v1285 = vmul.f32 %v917, %v1246
        %v1286 = vmul.f32 %v918, %v1246
        %v1287 = vmul.f32 %v919, %v1246
        %v1288 = vmul.f32 %v920, %v1246
        %v1289 = vmul.f32 %v921, %v1246
        %v1290 = vmul.f32 %v922, %v1246
        %v1291 = vmul.f32 %v923, %v1246
        %v1292 = vmul.f32 %v924, %v1246
        %v1293 = vmul.f32 %v925, %v1246
        %v1294 = vmul.f32 %v926, %v1246
        %vm1343 = vcmask 1045504
        %v1344 = vrot.slane %v1247, 2
        %v1345 = vrot.slane %v1248, 2
        %v1346 = vsel %vm1343, %v1344, %v1345
        %v1347 = vrot.slane %v1249, 2
        %v1348 = vsel %vm1343, %v1345, %v1347
        %v1349 = vrot.slane %v1250, 2
        %v1350 = vrot.slane %v1251, 2
        %v1351 = vsel %vm1343, %v1349, %v1350
        %v1352 = vrot.slane %v1252, 2
        %v1353 = vsel %vm1343, %v1350, %v1352
        %v1354 = vrot.slane %v1253, 2
        %v1355 = vrot.slane %v1254, 2
        %v1356 = vsel %vm1343, %v1354, %v1355
        %v1357 = vrot.slane %v1255, 2
        %v1358 = vsel %vm1343, %v1355, %v1357
        %v1359 = vrot.slane %v1256, 2
        %v1360 = vrot.slane %v1257, 2
        %v1361 = vsel %vm1343, %v1359, %v1360
        %v1362 = vrot.slane %v1258, 2
        %v1363 = vsel %vm1343, %v1360, %v1362
        %v1364 = vrot.slane %v1259, 2
        %v1365 = vrot.slane %v1260, 2
        %v1366 = vsel %vm1343, %v1364, %v1365
        %v1367 = vrot.slane %v1261, 2
        %v1368 = vsel %vm1343, %v1365, %v1367
        %v1369 = vrot.slane %v1262, 2
        %v1370 = vrot.slane %v1263, 2
        %v1371 = vsel %vm1343, %v1369, %v1370
        %v1372 = vrot.slane %v1264, 2
        %v1373 = vsel %vm1343, %v1370, %v1372
        %v1374 = vrot.slane %v1265, 2
        %v1375 = vrot.slane %v1266, 2
        %v1376 = vsel %vm1343, %v1374, %v1375
        %v1377 = vrot.slane %v1267, 2
        %v1378 = vsel %vm1343, %v1375, %v1377
        %v1379 = vrot.slane %v1268, 2
        %v1380 = vrot.slane %v1269, 2
        %v1381 = vsel %vm1343, %v1379, %v1380
        %v1382 = vrot.slane %v1270, 2
        %v1383 = vsel %vm1343, %v1380, %v1382
        %v1384 = vrot.slane %v1271, 2
        %v1385 = vrot.slane %v1272, 2
        %v1386 = vsel %vm1343, %v1384, %v1385
        %v1387 = vrot.slane %v1273, 2
        %v1388 = vsel %vm1343, %v1385, %v1387
        %v1389 = vrot.slane %v1274, 2
        %v1390 = vrot.slane %v1275, 2
        %v1391 = vsel %vm1343, %v1389, %v1390
        %v1392 = vrot.slane %v1276, 2
        %v1393 = vsel %vm1343, %v1390, %v1392
        %v1394 = vrot.slane %v1277, 2
        %v1395 = vrot.slane %v1278, 2
        %v1396 = vsel %vm1343, %v1394, %v1395
        %v1397 = vrot.slane %v1279, 2
        %v1398 = vsel %vm1343, %v1395, %v1397
        %v1399 = vrot.slane %v1280, 2
        %v1400 = vrot.slane %v1281, 2
        %v1401 = vsel %vm1343, %v1399, %v1400
        %v1402 = vrot.slane %v1282, 2
        %v1403 = vsel %vm1343, %v1400, %v1402
        %v1404 = vrot.slane %v1283, 2
        %v1405 = vrot.slane %v1284, 2
        %v1406 = vsel %vm1343, %v1404, %v1405
        %v1407 = vrot.slane %v1285, 2
        %v1408 = vsel %vm1343, %v1405, %v1407
        %v1409 = vrot.slane %v1286, 2
        %v1410 = vrot.slane %v1287, 2
        %v1411 = vsel %vm1343, %v1409, %v1410
        %v1412 = vrot.slane %v1288, 2
        %v1413 = vsel %vm1343, %v1410, %v1412
        %v1414 = vrot.slane %v1289, 2
        %v1415 = vrot.slane %v1290, 2
        %v1416 = vsel %vm1343, %v1414, %v1415
        %v1417 = vrot.slane %v1291, 2
        %v1418 = vsel %vm1343, %v1415, %v1417
        %v1419 = vrot.slane %v1292, 2
        %v1420 = vrot.slane %v1293, 2
        %v1421 = vsel %vm1343, %v1419, %v1420
        %v1422 = vrot.slane %v1294, 2
        %v1423 = vsel %vm1343, %v1420, %v1422
        %v1456 = vadd.f32 %v1210, %v1346
        %v1457 = vadd.f32 %v1211, %v1348
        %v1458 = vadd.f32 %v1212, %v1351
        %v1459 = vadd.f32 %v1213, %v1353
        %v1460 = vadd.f32 %v1214, %v1356
        %v1461 = vadd.f32 %v1215, %v1358
        %v1462 = vadd.f32 %v1216, %v1361
        %v1463 = vadd.f32 %v1217, %v1363
        %v1464 = vadd.f32 %v1218, %v1366
        %v1465 = vadd.f32 %v1219, %v1368
        %v1466 = vadd.f32 %v1220, %v1371
        %v1467 = vadd.f32 %v1221, %v1373
        %v1468 = vadd.f32 %v1222, %v1376
        %v1469 = vadd.f32 %v1223, %v1378
        %v1470 = vadd.f32 %v1224, %v1381
        %v1471 = vadd.f32 %v1225, %v1383
        %v1472 = vadd.f32 %v1226, %v1386
        %v1473 = vadd.f32 %v1227, %v1388
        %v1474 = vadd.f32 %v1228, %v1391
        %v1475 = vadd.f32 %v1229, %v1393
        %v1476 = vadd.f32 %v1230, %v1396
        %v1477 = vadd.f32 %v1231, %v1398
        %v1478 = vadd.f32 %v1232, %v1401
        %v1479 = vadd.f32 %v1233, %v1403
        %v1480 = vadd.f32 %v1234, %v1406
        %v1481 = vadd.f32 %v1235, %v1408
        %v1482 = vadd.f32 %v1236, %v1411
        %v1483 = vadd.f32 %v1237, %v1413
        %v1484 = vadd.f32 %v1238, %v1416
        %v1485 = vadd.f32 %v1239, %v1418
        %v1486 = vadd.f32 %v1240, %v1421
        %v1487 = vadd.f32 %v1241, %v1423
        %v1488 = vld [vmem:[%s846] sm:$0xff]
        %v1489 = vld [vmem:[%s846 + $0x8] sm:$0xff]
        %v1490 = vld [vmem:[%s846 + $0x10] sm:$0x3]
        %v1491 = vld [vmem:[%s846 + $0x18] sm:$0xff]
        %v1492 = vld [vmem:[%s846 + $0x20] sm:$0xff]
        %v1493 = vld [vmem:[%s846 + $0x28] sm:$0x3]
        %v1494 = vld [vmem:[%s846 + $0x30] sm:$0xff]
        %v1495 = vld [vmem:[%s846 + $0x38] sm:$0xff]
        %v1496 = vld [vmem:[%s846 + $0x40] sm:$0x3]
        %v1497 = vld [vmem:[%s846 + $0x48] sm:$0xff]
        %v1498 = vld [vmem:[%s846 + $0x50] sm:$0xff]
        %v1499 = vld [vmem:[%s846 + $0x58] sm:$0x3]
        %v1500 = vld [vmem:[%s846 + $0x60] sm:$0xff]
        %v1501 = vld [vmem:[%s846 + $0x68] sm:$0xff]
        %v1502 = vld [vmem:[%s846 + $0x70] sm:$0x3]
        %v1503 = vld [vmem:[%s846 + $0x78] sm:$0xff]
        %v1504 = vld [vmem:[%s846 + $0x80] sm:$0xff]
        %v1505 = vld [vmem:[%s846 + $0x88] sm:$0x3]
        %v1506 = vld [vmem:[%s846 + $0x90] sm:$0xff]
        %v1507 = vld [vmem:[%s846 + $0x98] sm:$0xff]
        %v1508 = vld [vmem:[%s846 + $0xa0] sm:$0x3]
        %v1509 = vld [vmem:[%s846 + $0xa8] sm:$0xff]
        %v1510 = vld [vmem:[%s846 + $0xb0] sm:$0xff]
        %v1511 = vld [vmem:[%s846 + $0xb8] sm:$0x3]
        %v1512 = vld [vmem:[%s846 + $0xc0] sm:$0xff]
        %v1513 = vld [vmem:[%s846 + $0xc8] sm:$0xff]
        %v1514 = vld [vmem:[%s846 + $0xd0] sm:$0x3]
        %v1515 = vld [vmem:[%s846 + $0xd8] sm:$0xff]
        %v1516 = vld [vmem:[%s846 + $0xe0] sm:$0xff]
        %v1517 = vld [vmem:[%s846 + $0xe8] sm:$0x3]
        %v1518 = vld [vmem:[%s846 + $0xf0] sm:$0xff]
        %v1519 = vld [vmem:[%s846 + $0xf8] sm:$0xff]
        %v1520 = vld [vmem:[%s846 + $0x100] sm:$0x3]
        %v1521 = vld [vmem:[%s846 + $0x108] sm:$0xff]
        %v1522 = vld [vmem:[%s846 + $0x110] sm:$0xff]
        %v1523 = vld [vmem:[%s846 + $0x118] sm:$0x3]
        %v1524 = vld [vmem:[%s846 + $0x120] sm:$0xff]
        %v1525 = vld [vmem:[%s846 + $0x128] sm:$0xff]
        %v1526 = vld [vmem:[%s846 + $0x130] sm:$0x3]
        %v1527 = vld [vmem:[%s846 + $0x138] sm:$0xff]
        %v1528 = vld [vmem:[%s846 + $0x140] sm:$0xff]
        %v1529 = vld [vmem:[%s846 + $0x148] sm:$0x3]
        %v1530 = vld [vmem:[%s846 + $0x150] sm:$0xff]
        %v1531 = vld [vmem:[%s846 + $0x158] sm:$0xff]
        %v1532 = vld [vmem:[%s846 + $0x160] sm:$0x3]
        %v1533 = vld [vmem:[%s846 + $0x168] sm:$0xff]
        %v1534 = vld [vmem:[%s846 + $0x170] sm:$0xff]
        %v1535 = vld [vmem:[%s846 + $0x178] sm:$0x3]
        %v1536 = vld [vmem:[#allocation9 + $0x3] sm:$0x1]
        %v1537 = vlaneseq
        %v1538 = vshrl.u32 %v1537, 7
        %v1539 = vsub.s32 0, %v1538
        %v1540 = vrot.slane %v1536, %v1539
        %v1541 = vmul.f32 %v1488, %v1540
        %v1542 = vmul.f32 %v1489, %v1540
        %v1543 = vmul.f32 %v1491, %v1540
        %v1544 = vmul.f32 %v1492, %v1540
        %v1545 = vmul.f32 %v1494, %v1540
        %v1546 = vmul.f32 %v1495, %v1540
        %v1547 = vmul.f32 %v1497, %v1540
        %v1548 = vmul.f32 %v1498, %v1540
        %v1549 = vmul.f32 %v1500, %v1540
        %v1550 = vmul.f32 %v1501, %v1540
        %v1551 = vmul.f32 %v1503, %v1540
        %v1552 = vmul.f32 %v1504, %v1540
        %v1553 = vmul.f32 %v1506, %v1540
        %v1554 = vmul.f32 %v1507, %v1540
        %v1555 = vmul.f32 %v1509, %v1540
        %v1556 = vmul.f32 %v1510, %v1540
        %v1557 = vmul.f32 %v1512, %v1540
        %v1558 = vmul.f32 %v1513, %v1540
        %v1559 = vmul.f32 %v1515, %v1540
        %v1560 = vmul.f32 %v1516, %v1540
        %v1561 = vmul.f32 %v1518, %v1540
        %v1562 = vmul.f32 %v1519, %v1540
        %v1563 = vmul.f32 %v1521, %v1540
        %v1564 = vmul.f32 %v1522, %v1540
        %v1565 = vmul.f32 %v1524, %v1540
        %v1566 = vmul.f32 %v1525, %v1540
        %v1567 = vmul.f32 %v1527, %v1540
        %v1568 = vmul.f32 %v1528, %v1540
        %v1569 = vmul.f32 %v1530, %v1540
        %v1570 = vmul.f32 %v1531, %v1540
        %v1571 = vmul.f32 %v1533, %v1540
        %v1572 = vmul.f32 %v1534, %v1540
        %v1573 = vadd.f32 %v1456, %v1541
        %v1574 = vadd.f32 %v1457, %v1542
        %v1575 = vadd.f32 %v1458, %v1543
        %v1576 = vadd.f32 %v1459, %v1544
        %v1577 = vadd.f32 %v1460, %v1545
        %v1578 = vadd.f32 %v1461, %v1546
        %v1579 = vadd.f32 %v1462, %v1547
        %v1580 = vadd.f32 %v1463, %v1548
        %v1581 = vadd.f32 %v1464, %v1549
        %v1582 = vadd.f32 %v1465, %v1550
        %v1583 = vadd.f32 %v1466, %v1551
        %v1584 = vadd.f32 %v1467, %v1552
        %v1585 = vadd.f32 %v1468, %v1553
        %v1586 = vadd.f32 %v1469, %v1554
        %v1587 = vadd.f32 %v1470, %v1555
        %v1588 = vadd.f32 %v1471, %v1556
        %v1589 = vadd.f32 %v1472, %v1557
        %v1590 = vadd.f32 %v1473, %v1558
        %v1591 = vadd.f32 %v1474, %v1559
        %v1592 = vadd.f32 %v1475, %v1560
        %v1593 = vadd.f32 %v1476, %v1561
        %v1594 = vadd.f32 %v1477, %v1562
        %v1595 = vadd.f32 %v1478, %v1563
        %v1596 = vadd.f32 %v1479, %v1564
        %v1597 = vadd.f32 %v1480, %v1565
        %v1598 = vadd.f32 %v1481, %v1566
        %v1599 = vadd.f32 %v1482, %v1567
        %v1600 = vadd.f32 %v1483, %v1568
        %v1601 = vadd.f32 %v1484, %v1569
        %v1602 = vadd.f32 %v1485, %v1570
        %v1603 = vadd.f32 %v1486, %v1571
        %v1604 = vadd.f32 %v1487, %v1572
        %v1605 = vld [vmem:[#allocation9 + $0x4] sm:$0x1]
        %v1606 = vlaneseq
        %v1607 = vshrl.u32 %v1606, 7
        %v1608 = vsub.s32 0, %v1607
        %v1609 = vrot.slane %v1605, %v1608
        %v1610 = vmul.f32 %v1488, %v1609
        %v1611 = vmul.f32 %v1489, %v1609
        %v1612 = vmul.f32 %v1490, %v1609
        %v1613 = vmul.f32 %v1491, %v1609
        %v1614 = vmul.f32 %v1492, %v1609
        %v1615 = vmul.f32 %v1493, %v1609
        %v1616 = vmul.f32 %v1494, %v1609
        %v1617 = vmul.f32 %v1495, %v1609
        %v1618 = vmul.f32 %v1496, %v1609
        %v1619 = vmul.f32 %v1497, %v1609
        %v1620 = vmul.f32 %v1498, %v1609
        %v1621 = vmul.f32 %v1499, %v1609
        %v1622 = vmul.f32 %v1500, %v1609
        %v1623 = vmul.f32 %v1501, %v1609
        %v1624 = vmul.f32 %v1502, %v1609
        %v1625 = vmul.f32 %v1503, %v1609
        %v1626 = vmul.f32 %v1504, %v1609
        %v1627 = vmul.f32 %v1505, %v1609
        %v1628 = vmul.f32 %v1506, %v1609
        %v1629 = vmul.f32 %v1507, %v1609
        %v1630 = vmul.f32 %v1508, %v1609
        %v1631 = vmul.f32 %v1509, %v1609
        %v1632 = vmul.f32 %v1510, %v1609
        %v1633 = vmul.f32 %v1511, %v1609
        %v1634 = vmul.f32 %v1512, %v1609
        %v1635 = vmul.f32 %v1513, %v1609
        %v1636 = vmul.f32 %v1514, %v1609
        %v1637 = vmul.f32 %v1515, %v1609
        %v1638 = vmul.f32 %v1516, %v1609
        %v1639 = vmul.f32 %v1517, %v1609
        %v1640 = vmul.f32 %v1518, %v1609
        %v1641 = vmul.f32 %v1519, %v1609
        %v1642 = vmul.f32 %v1520, %v1609
        %v1643 = vmul.f32 %v1521, %v1609
        %v1644 = vmul.f32 %v1522, %v1609
        %v1645 = vmul.f32 %v1523, %v1609
        %v1646 = vmul.f32 %v1524, %v1609
        %v1647 = vmul.f32 %v1525, %v1609
        %v1648 = vmul.f32 %v1526, %v1609
        %v1649 = vmul.f32 %v1527, %v1609
        %v1650 = vmul.f32 %v1528, %v1609
        %v1651 = vmul.f32 %v1529, %v1609
        %v1652 = vmul.f32 %v1530, %v1609
        %v1653 = vmul.f32 %v1531, %v1609
        %v1654 = vmul.f32 %v1532, %v1609
        %v1655 = vmul.f32 %v1533, %v1609
        %v1656 = vmul.f32 %v1534, %v1609
        %v1657 = vmul.f32 %v1535, %v1609
        %v1706 = vrot.slane %v1610, 1
        %v1707 = vrot.slane %v1611, 1
        %v1708 = vsel %vm1097, %v1706, %v1707
        %v1709 = vrot.slane %v1612, 1
        %v1710 = vsel %vm1097, %v1707, %v1709
        %v1711 = vrot.slane %v1613, 1
        %v1712 = vrot.slane %v1614, 1
        %v1713 = vsel %vm1097, %v1711, %v1712
        %v1714 = vrot.slane %v1615, 1
        %v1715 = vsel %vm1097, %v1712, %v1714
        %v1716 = vrot.slane %v1616, 1
        %v1717 = vrot.slane %v1617, 1
        %v1718 = vsel %vm1097, %v1716, %v1717
        %v1719 = vrot.slane %v1618, 1
        %v1720 = vsel %vm1097, %v1717, %v1719
        %v1721 = vrot.slane %v1619, 1
        %v1722 = vrot.slane %v1620, 1
        %v1723 = vsel %vm1097, %v1721, %v1722
        %v1724 = vrot.slane %v1621, 1
        %v1725 = vsel %vm1097, %v1722, %v1724
        %v1726 = vrot.slane %v1622, 1
        %v1727 = vrot.slane %v1623, 1
        %v1728 = vsel %vm1097, %v1726, %v1727
        %v1729 = vrot.slane %v1624, 1
        %v1730 = vsel %vm1097, %v1727, %v1729
        %v1731 = vrot.slane %v1625, 1
        %v1732 = vrot.slane %v1626, 1
        %v1733 = vsel %vm1097, %v1731, %v1732
        %v1734 = vrot.slane %v1627, 1
        %v1735 = vsel %vm1097, %v1732, %v1734
        %v1736 = vrot.slane %v1628, 1
        %v1737 = vrot.slane %v1629, 1
        %v1738 = vsel %vm1097, %v1736, %v1737
        %v1739 = vrot.slane %v1630, 1
        %v1740 = vsel %vm1097, %v1737, %v1739
        %v1741 = vrot.slane %v1631, 1
        %v1742 = vrot.slane %v1632, 1
        %v1743 = vsel %vm1097, %v1741, %v1742
        %v1744 = vrot.slane %v1633, 1
        %v1745 = vsel %vm1097, %v1742, %v1744
        %v1746 = vrot.slane %v1634, 1
        %v1747 = vrot.slane %v1635, 1
        %v1748 = vsel %vm1097, %v1746, %v1747
        %v1749 = vrot.slane %v1636, 1
        %v1750 = vsel %vm1097, %v1747, %v1749
        %v1751 = vrot.slane %v1637, 1
        %v1752 = vrot.slane %v1638, 1
        %v1753 = vsel %vm1097, %v1751, %v1752
        %v1754 = vrot.slane %v1639, 1
        %v1755 = vsel %vm1097, %v1752, %v1754
        %v1756 = vrot.slane %v1640, 1
        %v1757 = vrot.slane %v1641, 1
        %v1758 = vsel %vm1097, %v1756, %v1757
        %v1759 = vrot.slane %v1642, 1
        %v1760 = vsel %vm1097, %v1757, %v1759
        %v1761 = vrot.slane %v1643, 1
        %v1762 = vrot.slane %v1644, 1
        %v1763 = vsel %vm1097, %v1761, %v1762
        %v1764 = vrot.slane %v1645, 1
        %v1765 = vsel %vm1097, %v1762, %v1764
        %v1766 = vrot.slane %v1646, 1
        %v1767 = vrot.slane %v1647, 1
        %v1768 = vsel %vm1097, %v1766, %v1767
        %v1769 = vrot.slane %v1648, 1
        %v1770 = vsel %vm1097, %v1767, %v1769
        %v1771 = vrot.slane %v1649, 1
        %v1772 = vrot.slane %v1650, 1
        %v1773 = vsel %vm1097, %v1771, %v1772
        %v1774 = vrot.slane %v1651, 1
        %v1775 = vsel %vm1097, %v1772, %v1774
        %v1776 = vrot.slane %v1652, 1
        %v1777 = vrot.slane %v1653, 1
        %v1778 = vsel %vm1097, %v1776, %v1777
        %v1779 = vrot.slane %v1654, 1
        %v1780 = vsel %vm1097, %v1777, %v1779
        %v1781 = vrot.slane %v1655, 1
        %v1782 = vrot.slane %v1656, 1
        %v1783 = vsel %vm1097, %v1781, %v1782
        %v1784 = vrot.slane %v1657, 1
        %v1785 = vsel %vm1097, %v1782, %v1784
        %v1818 = vadd.f32 %v1573, %v1708
        %v1819 = vadd.f32 %v1574, %v1710
        %v1820 = vadd.f32 %v1575, %v1713
        %v1821 = vadd.f32 %v1576, %v1715
        %v1822 = vadd.f32 %v1577, %v1718
        %v1823 = vadd.f32 %v1578, %v1720
        %v1824 = vadd.f32 %v1579, %v1723
        %v1825 = vadd.f32 %v1580, %v1725
        %v1826 = vadd.f32 %v1581, %v1728
        %v1827 = vadd.f32 %v1582, %v1730
        %v1828 = vadd.f32 %v1583, %v1733
        %v1829 = vadd.f32 %v1584, %v1735
        %v1830 = vadd.f32 %v1585, %v1738
        %v1831 = vadd.f32 %v1586, %v1740
        %v1832 = vadd.f32 %v1587, %v1743
        %v1833 = vadd.f32 %v1588, %v1745
        %v1834 = vadd.f32 %v1589, %v1748
        %v1835 = vadd.f32 %v1590, %v1750
        %v1836 = vadd.f32 %v1591, %v1753
        %v1837 = vadd.f32 %v1592, %v1755
        %v1838 = vadd.f32 %v1593, %v1758
        %v1839 = vadd.f32 %v1594, %v1760
        %v1840 = vadd.f32 %v1595, %v1763
        %v1841 = vadd.f32 %v1596, %v1765
        %v1842 = vadd.f32 %v1597, %v1768
        %v1843 = vadd.f32 %v1598, %v1770
        %v1844 = vadd.f32 %v1599, %v1773
        %v1845 = vadd.f32 %v1600, %v1775
        %v1846 = vadd.f32 %v1601, %v1778
        %v1847 = vadd.f32 %v1602, %v1780
        %v1848 = vadd.f32 %v1603, %v1783
        %v1849 = vadd.f32 %v1604, %v1785
        %v1850 = vld [vmem:[#allocation9 + $0x5] sm:$0x1]
        %v1851 = vlaneseq
        %v1852 = vshrl.u32 %v1851, 7
        %v1853 = vsub.s32 0, %v1852
        %v1854 = vrot.slane %v1850, %v1853
        %v1855 = vmul.f32 %v1488, %v1854
        %v1856 = vmul.f32 %v1489, %v1854
        %v1857 = vmul.f32 %v1490, %v1854
        %v1858 = vmul.f32 %v1491, %v1854
        %v1859 = vmul.f32 %v1492, %v1854
        %v1860 = vmul.f32 %v1493, %v1854
        %v1861 = vmul.f32 %v1494, %v1854
        %v1862 = vmul.f32 %v1495, %v1854
        %v1863 = vmul.f32 %v1496, %v1854
        %v1864 = vmul.f32 %v1497, %v1854
        %v1865 = vmul.f32 %v1498, %v1854
        %v1866 = vmul.f32 %v1499, %v1854
        %v1867 = vmul.f32 %v1500, %v1854
        %v1868 = vmul.f32 %v1501, %v1854
        %v1869 = vmul.f32 %v1502, %v1854
        %v1870 = vmul.f32 %v1503, %v1854
        %v1871 = vmul.f32 %v1504, %v1854
        %v1872 = vmul.f32 %v1505, %v1854
        %v1873 = vmul.f32 %v1506, %v1854
        %v1874 = vmul.f32 %v1507, %v1854
        %v1875 = vmul.f32 %v1508, %v1854
        %v1876 = vmul.f32 %v1509, %v1854
        %v1877 = vmul.f32 %v1510, %v1854
        %v1878 = vmul.f32 %v1511, %v1854
        %v1879 = vmul.f32 %v1512, %v1854
        %v1880 = vmul.f32 %v1513, %v1854
        %v1881 = vmul.f32 %v1514, %v1854
        %v1882 = vmul.f32 %v1515, %v1854
        %v1883 = vmul.f32 %v1516, %v1854
        %v1884 = vmul.f32 %v1517, %v1854
        %v1885 = vmul.f32 %v1518, %v1854
        %v1886 = vmul.f32 %v1519, %v1854
        %v1887 = vmul.f32 %v1520, %v1854
        %v1888 = vmul.f32 %v1521, %v1854
        %v1889 = vmul.f32 %v1522, %v1854
        %v1890 = vmul.f32 %v1523, %v1854
        %v1891 = vmul.f32 %v1524, %v1854
        %v1892 = vmul.f32 %v1525, %v1854
        %v1893 = vmul.f32 %v1526, %v1854
        %v1894 = vmul.f32 %v1527, %v1854
        %v1895 = vmul.f32 %v1528, %v1854
        %v1896 = vmul.f32 %v1529, %v1854
        %v1897 = vmul.f32 %v1530, %v1854
        %v1898 = vmul.f32 %v1531, %v1854
        %v1899 = vmul.f32 %v1532, %v1854
        %v1900 = vmul.f32 %v1533, %v1854
        %v1901 = vmul.f32 %v1534, %v1854
        %v1902 = vmul.f32 %v1535, %v1854
        %v1951 = vrot.slane %v1855, 2
        %v1952 = vrot.slane %v1856, 2
        %v1953 = vsel %vm1343, %v1951, %v1952
        %v1954 = vrot.slane %v1857, 2
        %v1955 = vsel %vm1343, %v1952, %v1954
        %v1956 = vrot.slane %v1858, 2
        %v1957 = vrot.slane %v1859, 2
        %v1958 = vsel %vm1343, %v1956, %v1957
        %v1959 = vrot.slane %v1860, 2
        %v1960 = vsel %vm1343, %v1957, %v1959
        %v1961 = vrot.slane %v1861, 2
        %v1962 = vrot.slane %v1862, 2
        %v1963 = vsel %vm1343, %v1961, %v1962
        %v1964 = vrot.slane %v1863, 2
        %v1965 = vsel %vm1343, %v1962, %v1964
        %v1966 = vrot.slane %v1864, 2
        %v1967 = vrot.slane %v1865, 2
        %v1968 = vsel %vm1343, %v1966, %v1967
        %v1969 = vrot.slane %v1866, 2
        %v1970 = vsel %vm1343, %v1967, %v1969
        %v1971 = vrot.slane %v1867, 2
        %v1972 = vrot.slane %v1868, 2
        %v1973 = vsel %vm1343, %v1971, %v1972
        %v1974 = vrot.slane %v1869, 2
        %v1975 = vsel %vm1343, %v1972, %v1974
        %v1976 = vrot.slane %v1870, 2
        %v1977 = vrot.slane %v1871, 2
        %v1978 = vsel %vm1343, %v1976, %v1977
        %v1979 = vrot.slane %v1872, 2
        %v1980 = vsel %vm1343, %v1977, %v1979
        %v1981 = vrot.slane %v1873, 2
        %v1982 = vrot.slane %v1874, 2
        %v1983 = vsel %vm1343, %v1981, %v1982
        %v1984 = vrot.slane %v1875, 2
        %v1985 = vsel %vm1343, %v1982, %v1984
        %v1986 = vrot.slane %v1876, 2
        %v1987 = vrot.slane %v1877, 2
        %v1988 = vsel %vm1343, %v1986, %v1987
        %v1989 = vrot.slane %v1878, 2
        %v1990 = vsel %vm1343, %v1987, %v1989
        %v1991 = vrot.slane %v1879, 2
        %v1992 = vrot.slane %v1880, 2
        %v1993 = vsel %vm1343, %v1991, %v1992
        %v1994 = vrot.slane %v1881, 2
        %v1995 = vsel %vm1343, %v1992, %v1994
        %v1996 = vrot.slane %v1882, 2
        %v1997 = vrot.slane %v1883, 2
        %v1998 = vsel %vm1343, %v1996, %v1997
        %v1999 = vrot.slane %v1884, 2
        %v2000 = vsel %vm1343, %v1997, %v1999
        %v2001 = vrot.slane %v1885, 2
        %v2002 = vrot.slane %v1886, 2
        %v2003 = vsel %vm1343, %v2001, %v2002
        %v2004 = vrot.slane %v1887, 2
        %v2005 = vsel %vm1343, %v2002, %v2004
        %v2006 = vrot.slane %v1888, 2
        %v2007 = vrot.slane %v1889, 2
        %v2008 = vsel %vm1343, %v2006, %v2007
        %v2009 = vrot.slane %v1890, 2
        %v2010 = vsel %vm1343, %v2007, %v2009
        %v2011 = vrot.slane %v1891, 2
        %v2012 = vrot.slane %v1892, 2
        %v2013 = vsel %vm1343, %v2011, %v2012
        %v2014 = vrot.slane %v1893, 2
        %v2015 = vsel %vm1343, %v2012, %v2014
        %v2016 = vrot.slane %v1894, 2
        %v2017 = vrot.slane %v1895, 2
        %v2018 = vsel %vm1343, %v2016, %v2017
        %v2019 = vrot.slane %v1896, 2
        %v2020 = vsel %vm1343, %v2017, %v2019
        %v2021 = vrot.slane %v1897, 2
        %v2022 = vrot.slane %v1898, 2
        %v2023 = vsel %vm1343, %v2021, %v2022
        %v2024 = vrot.slane %v1899, 2
        %v2025 = vsel %vm1343, %v2022, %v2024
        %v2026 = vrot.slane %v1900, 2
        %v2027 = vrot.slane %v1901, 2
        %v2028 = vsel %vm1343, %v2026, %v2027
        %v2029 = vrot.slane %v1902, 2
        %v2030 = vsel %vm1343, %v2027, %v2029
        %v2063 = vadd.f32 %v1818, %v1953
        %v2064 = vadd.f32 %v1819, %v1955
        %v2065 = vadd.f32 %v1820, %v1958
        %v2066 = vadd.f32 %v1821, %v1960
        %v2067 = vadd.f32 %v1822, %v1963
        %v2068 = vadd.f32 %v1823, %v1965
        %v2069 = vadd.f32 %v1824, %v1968
        %v2070 = vadd.f32 %v1825, %v1970
        %v2071 = vadd.f32 %v1826, %v1973
        %v2072 = vadd.f32 %v1827, %v1975
        %v2073 = vadd.f32 %v1828, %v1978
        %v2074 = vadd.f32 %v1829, %v1980
        %v2075 = vadd.f32 %v1830, %v1983
        %v2076 = vadd.f32 %v1831, %v1985
        %v2077 = vadd.f32 %v1832, %v1988
        %v2078 = vadd.f32 %v1833, %v1990
        %v2079 = vadd.f32 %v1834, %v1993
        %v2080 = vadd.f32 %v1835, %v1995
        %v2081 = vadd.f32 %v1836, %v1998
        %v2082 = vadd.f32 %v1837, %v2000
        %v2083 = vadd.f32 %v1838, %v2003
        %v2084 = vadd.f32 %v1839, %v2005
        %v2085 = vadd.f32 %v1840, %v2008
        %v2086 = vadd.f32 %v1841, %v2010
        %v2087 = vadd.f32 %v1842, %v2013
        %v2088 = vadd.f32 %v1843, %v2015
        %v2089 = vadd.f32 %v1844, %v2018
        %v2090 = vadd.f32 %v1845, %v2020
        %v2091 = vadd.f32 %v1846, %v2023
        %v2092 = vadd.f32 %v1847, %v2025
        %v2093 = vadd.f32 %v1848, %v2028
        %v2094 = vadd.f32 %v1849, %v2030
        %s2095 = scalar_lea.vmem [#allocation2], 48
        %v2096 = vld [vmem:[%s2095] sm:$0xff]
        %v2097 = vld [vmem:[%s2095 + $0x8] sm:$0xff]
        %v2098 = vld [vmem:[%s2095 + $0x10] sm:$0x3]
        %v2099 = vld [vmem:[%s2095 + $0x18] sm:$0xff]
        %v2100 = vld [vmem:[%s2095 + $0x20] sm:$0xff]
        %v2101 = vld [vmem:[%s2095 + $0x28] sm:$0x3]
        %v2102 = vld [vmem:[%s2095 + $0x30] sm:$0xff]
        %v2103 = vld [vmem:[%s2095 + $0x38] sm:$0xff]
        %v2104 = vld [vmem:[%s2095 + $0x40] sm:$0x3]
        %v2105 = vld [vmem:[%s2095 + $0x48] sm:$0xff]
        %v2106 = vld [vmem:[%s2095 + $0x50] sm:$0xff]
        %v2107 = vld [vmem:[%s2095 + $0x58] sm:$0x3]
        %v2108 = vld [vmem:[%s2095 + $0x60] sm:$0xff]
        %v2109 = vld [vmem:[%s2095 + $0x68] sm:$0xff]
        %v2110 = vld [vmem:[%s2095 + $0x70] sm:$0x3]
        %v2111 = vld [vmem:[%s2095 + $0x78] sm:$0xff]
        %v2112 = vld [vmem:[%s2095 + $0x80] sm:$0xff]
        %v2113 = vld [vmem:[%s2095 + $0x88] sm:$0x3]
        %v2114 = vld [vmem:[%s2095 + $0x90] sm:$0xff]
        %v2115 = vld [vmem:[%s2095 + $0x98] sm:$0xff]
        %v2116 = vld [vmem:[%s2095 + $0xa0] sm:$0x3]
        %v2117 = vld [vmem:[%s2095 + $0xa8] sm:$0xff]
        %v2118 = vld [vmem:[%s2095 + $0xb0] sm:$0xff]
        %v2119 = vld [vmem:[%s2095 + $0xb8] sm:$0x3]
        %v2120 = vld [vmem:[%s2095 + $0xc0] sm:$0xff]
        %v2121 = vld [vmem:[%s2095 + $0xc8] sm:$0xff]
        %v2122 = vld [vmem:[%s2095 + $0xd0] sm:$0x3]
        %v2123 = vld [vmem:[%s2095 + $0xd8] sm:$0xff]
        %v2124 = vld [vmem:[%s2095 + $0xe0] sm:$0xff]
        %v2125 = vld [vmem:[%s2095 + $0xe8] sm:$0x3]
        %v2126 = vld [vmem:[%s2095 + $0xf0] sm:$0xff]
        %v2127 = vld [vmem:[%s2095 + $0xf8] sm:$0xff]
        %v2128 = vld [vmem:[%s2095 + $0x100] sm:$0x3]
        %v2129 = vld [vmem:[%s2095 + $0x108] sm:$0xff]
        %v2130 = vld [vmem:[%s2095 + $0x110] sm:$0xff]
        %v2131 = vld [vmem:[%s2095 + $0x118] sm:$0x3]
        %v2132 = vld [vmem:[%s2095 + $0x120] sm:$0xff]
        %v2133 = vld [vmem:[%s2095 + $0x128] sm:$0xff]
        %v2134 = vld [vmem:[%s2095 + $0x130] sm:$0x3]
        %v2135 = vld [vmem:[%s2095 + $0x138] sm:$0xff]
        %v2136 = vld [vmem:[%s2095 + $0x140] sm:$0xff]
        %v2137 = vld [vmem:[%s2095 + $0x148] sm:$0x3]
        %v2138 = vld [vmem:[%s2095 + $0x150] sm:$0xff]
        %v2139 = vld [vmem:[%s2095 + $0x158] sm:$0xff]
        %v2140 = vld [vmem:[%s2095 + $0x160] sm:$0x3]
        %v2141 = vld [vmem:[%s2095 + $0x168] sm:$0xff]
        %v2142 = vld [vmem:[%s2095 + $0x170] sm:$0xff]
        %v2143 = vld [vmem:[%s2095 + $0x178] sm:$0x3]
        %v2144 = vld [vmem:[#allocation9 + $0x6] sm:$0x1]
        %v2145 = vlaneseq
        %v2146 = vshrl.u32 %v2145, 7
        %v2147 = vsub.s32 0, %v2146
        %v2148 = vrot.slane %v2144, %v2147
        %v2149 = vmul.f32 %v2096, %v2148
        %v2150 = vmul.f32 %v2097, %v2148
        %v2151 = vmul.f32 %v2099, %v2148
        %v2152 = vmul.f32 %v2100, %v2148
        %v2153 = vmul.f32 %v2102, %v2148
        %v2154 = vmul.f32 %v2103, %v2148
        %v2155 = vmul.f32 %v2105, %v2148
        %v2156 = vmul.f32 %v2106, %v2148
        %v2157 = vmul.f32 %v2108, %v2148
        %v2158 = vmul.f32 %v2109, %v2148
        %v2159 = vmul.f32 %v2111, %v2148
        %v2160 = vmul.f32 %v2112, %v2148
        %v2161 = vmul.f32 %v2114, %v2148
        %v2162 = vmul.f32 %v2115, %v2148
        %v2163 = vmul.f32 %v2117, %v2148
        %v2164 = vmul.f32 %v2118, %v2148
        %v2165 = vmul.f32 %v2120, %v2148
        %v2166 = vmul.f32 %v2121, %v2148
        %v2167 = vmul.f32 %v2123, %v2148
        %v2168 = vmul.f32 %v2124, %v2148
        %v2169 = vmul.f32 %v2126, %v2148
        %v2170 = vmul.f32 %v2127, %v2148
        %v2171 = vmul.f32 %v2129, %v2148
        %v2172 = vmul.f32 %v2130, %v2148
        %v2173 = vmul.f32 %v2132, %v2148
        %v2174 = vmul.f32 %v2133, %v2148
        %v2175 = vmul.f32 %v2135, %v2148
        %v2176 = vmul.f32 %v2136, %v2148
        %v2177 = vmul.f32 %v2138, %v2148
        %v2178 = vmul.f32 %v2139, %v2148
        %v2179 = vmul.f32 %v2141, %v2148
        %v2180 = vmul.f32 %v2142, %v2148
        %v2181 = vadd.f32 %v2063, %v2149
        %v2182 = vadd.f32 %v2064, %v2150
        %v2183 = vadd.f32 %v2065, %v2151
        %v2184 = vadd.f32 %v2066, %v2152
        %v2185 = vadd.f32 %v2067, %v2153
        %v2186 = vadd.f32 %v2068, %v2154
        %v2187 = vadd.f32 %v2069, %v2155
        %v2188 = vadd.f32 %v2070, %v2156
        %v2189 = vadd.f32 %v2071, %v2157
        %v2190 = vadd.f32 %v2072, %v2158
        %v2191 = vadd.f32 %v2073, %v2159
        %v2192 = vadd.f32 %v2074, %v2160
        %v2193 = vadd.f32 %v2075, %v2161
        %v2194 = vadd.f32 %v2076, %v2162
        %v2195 = vadd.f32 %v2077, %v2163
        %v2196 = vadd.f32 %v2078, %v2164
        %v2197 = vadd.f32 %v2079, %v2165
        %v2198 = vadd.f32 %v2080, %v2166
        %v2199 = vadd.f32 %v2081, %v2167
        %v2200 = vadd.f32 %v2082, %v2168
        %v2201 = vadd.f32 %v2083, %v2169
        %v2202 = vadd.f32 %v2084, %v2170
        %v2203 = vadd.f32 %v2085, %v2171
        %v2204 = vadd.f32 %v2086, %v2172
        %v2205 = vadd.f32 %v2087, %v2173
        %v2206 = vadd.f32 %v2088, %v2174
        %v2207 = vadd.f32 %v2089, %v2175
        %v2208 = vadd.f32 %v2090, %v2176
        %v2209 = vadd.f32 %v2091, %v2177
        %v2210 = vadd.f32 %v2092, %v2178
        %v2211 = vadd.f32 %v2093, %v2179
        %v2212 = vadd.f32 %v2094, %v2180
        %v2213 = vld [vmem:[#allocation9 + $0x7] sm:$0x1]
        %v2214 = vlaneseq
        %v2215 = vshrl.u32 %v2214, 7
        %v2216 = vsub.s32 0, %v2215
        %v2217 = vrot.slane %v2213, %v2216
        %v2218 = vmul.f32 %v2096, %v2217
        %v2219 = vmul.f32 %v2097, %v2217
        %v2220 = vmul.f32 %v2098, %v2217
        %v2221 = vmul.f32 %v2099, %v2217
        %v2222 = vmul.f32 %v2100, %v2217
        %v2223 = vmul.f32 %v2101, %v2217
        %v2224 = vmul.f32 %v2102, %v2217
        %v2225 = vmul.f32 %v2103, %v2217
        %v2226 = vmul.f32 %v2104, %v2217
        %v2227 = vmul.f32 %v2105, %v2217
        %v2228 = vmul.f32 %v2106, %v2217
        %v2229 = vmul.f32 %v2107, %v2217
        %v2230 = vmul.f32 %v2108, %v2217
        %v2231 = vmul.f32 %v2109, %v2217
        %v2232 = vmul.f32 %v2110, %v2217
        %v2233 = vmul.f32 %v2111, %v2217
        %v2234 = vmul.f32 %v2112, %v2217
        %v2235 = vmul.f32 %v2113, %v2217
        %v2236 = vmul.f32 %v2114, %v2217
        %v2237 = vmul.f32 %v2115, %v2217
        %v2238 = vmul.f32 %v2116, %v2217
        %v2239 = vmul.f32 %v2117, %v2217
        %v2240 = vmul.f32 %v2118, %v2217
        %v2241 = vmul.f32 %v2119, %v2217
        %v2242 = vmul.f32 %v2120, %v2217
        %v2243 = vmul.f32 %v2121, %v2217
        %v2244 = vmul.f32 %v2122, %v2217
        %v2245 = vmul.f32 %v2123, %v2217
        %v2246 = vmul.f32 %v2124, %v2217
        %v2247 = vmul.f32 %v2125, %v2217
        %v2248 = vmul.f32 %v2126, %v2217
        %v2249 = vmul.f32 %v2127, %v2217
        %v2250 = vmul.f32 %v2128, %v2217
        %v2251 = vmul.f32 %v2129, %v2217
        %v2252 = vmul.f32 %v2130, %v2217
        %v2253 = vmul.f32 %v2131, %v2217
        %v2254 = vmul.f32 %v2132, %v2217
        %v2255 = vmul.f32 %v2133, %v2217
        %v2256 = vmul.f32 %v2134, %v2217
        %v2257 = vmul.f32 %v2135, %v2217
        %v2258 = vmul.f32 %v2136, %v2217
        %v2259 = vmul.f32 %v2137, %v2217
        %v2260 = vmul.f32 %v2138, %v2217
        %v2261 = vmul.f32 %v2139, %v2217
        %v2262 = vmul.f32 %v2140, %v2217
        %v2263 = vmul.f32 %v2141, %v2217
        %v2264 = vmul.f32 %v2142, %v2217
        %v2265 = vmul.f32 %v2143, %v2217
        %v2314 = vrot.slane %v2218, 1
        %v2315 = vrot.slane %v2219, 1
        %v2316 = vsel %vm1097, %v2314, %v2315
        %v2317 = vrot.slane %v2220, 1
        %v2318 = vsel %vm1097, %v2315, %v2317
        %v2319 = vrot.slane %v2221, 1
        %v2320 = vrot.slane %v2222, 1
        %v2321 = vsel %vm1097, %v2319, %v2320
        %v2322 = vrot.slane %v2223, 1
        %v2323 = vsel %vm1097, %v2320, %v2322
        %v2324 = vrot.slane %v2224, 1
        %v2325 = vrot.slane %v2225, 1
        %v2326 = vsel %vm1097, %v2324, %v2325
        %v2327 = vrot.slane %v2226, 1
        %v2328 = vsel %vm1097, %v2325, %v2327
        %v2329 = vrot.slane %v2227, 1
        %v2330 = vrot.slane %v2228, 1
        %v2331 = vsel %vm1097, %v2329, %v2330
        %v2332 = vrot.slane %v2229, 1
        %v2333 = vsel %vm1097, %v2330, %v2332
        %v2334 = vrot.slane %v2230, 1
        %v2335 = vrot.slane %v2231, 1
        %v2336 = vsel %vm1097, %v2334, %v2335
        %v2337 = vrot.slane %v2232, 1
        %v2338 = vsel %vm1097, %v2335, %v2337
        %v2339 = vrot.slane %v2233, 1
        %v2340 = vrot.slane %v2234, 1
        %v2341 = vsel %vm1097, %v2339, %v2340
        %v2342 = vrot.slane %v2235, 1
        %v2343 = vsel %vm1097, %v2340, %v2342
        %v2344 = vrot.slane %v2236, 1
        %v2345 = vrot.slane %v2237, 1
        %v2346 = vsel %vm1097, %v2344, %v2345
        %v2347 = vrot.slane %v2238, 1
        %v2348 = vsel %vm1097, %v2345, %v2347
        %v2349 = vrot.slane %v2239, 1
        %v2350 = vrot.slane %v2240, 1
        %v2351 = vsel %vm1097, %v2349, %v2350
        %v2352 = vrot.slane %v2241, 1
        %v2353 = vsel %vm1097, %v2350, %v2352
        %v2354 = vrot.slane %v2242, 1
        %v2355 = vrot.slane %v2243, 1
        %v2356 = vsel %vm1097, %v2354, %v2355
        %v2357 = vrot.slane %v2244, 1
        %v2358 = vsel %vm1097, %v2355, %v2357
        %v2359 = vrot.slane %v2245, 1
        %v2360 = vrot.slane %v2246, 1
        %v2361 = vsel %vm1097, %v2359, %v2360
        %v2362 = vrot.slane %v2247, 1
        %v2363 = vsel %vm1097, %v2360, %v2362
        %v2364 = vrot.slane %v2248, 1
        %v2365 = vrot.slane %v2249, 1
        %v2366 = vsel %vm1097, %v2364, %v2365
        %v2367 = vrot.slane %v2250, 1
        %v2368 = vsel %vm1097, %v2365, %v2367
        %v2369 = vrot.slane %v2251, 1
        %v2370 = vrot.slane %v2252, 1
        %v2371 = vsel %vm1097, %v2369, %v2370
        %v2372 = vrot.slane %v2253, 1
        %v2373 = vsel %vm1097, %v2370, %v2372
        %v2374 = vrot.slane %v2254, 1
        %v2375 = vrot.slane %v2255, 1
        %v2376 = vsel %vm1097, %v2374, %v2375
        %v2377 = vrot.slane %v2256, 1
        %v2378 = vsel %vm1097, %v2375, %v2377
        %v2379 = vrot.slane %v2257, 1
        %v2380 = vrot.slane %v2258, 1
        %v2381 = vsel %vm1097, %v2379, %v2380
        %v2382 = vrot.slane %v2259, 1
        %v2383 = vsel %vm1097, %v2380, %v2382
        %v2384 = vrot.slane %v2260, 1
        %v2385 = vrot.slane %v2261, 1
        %v2386 = vsel %vm1097, %v2384, %v2385
        %v2387 = vrot.slane %v2262, 1
        %v2388 = vsel %vm1097, %v2385, %v2387
        %v2389 = vrot.slane %v2263, 1
        %v2390 = vrot.slane %v2264, 1
        %v2391 = vsel %vm1097, %v2389, %v2390
        %v2392 = vrot.slane %v2265, 1
        %v2393 = vsel %vm1097, %v2390, %v2392
        %v2426 = vadd.f32 %v2181, %v2316
        %v2427 = vadd.f32 %v2182, %v2318
        %v2428 = vadd.f32 %v2183, %v2321
        %v2429 = vadd.f32 %v2184, %v2323
        %v2430 = vadd.f32 %v2185, %v2326
        %v2431 = vadd.f32 %v2186, %v2328
        %v2432 = vadd.f32 %v2187, %v2331
        %v2433 = vadd.f32 %v2188, %v2333
        %v2434 = vadd.f32 %v2189, %v2336
        %v2435 = vadd.f32 %v2190, %v2338
        %v2436 = vadd.f32 %v2191, %v2341
        %v2437 = vadd.f32 %v2192, %v2343
        %v2438 = vadd.f32 %v2193, %v2346
        %v2439 = vadd.f32 %v2194, %v2348
        %v2440 = vadd.f32 %v2195, %v2351
        %v2441 = vadd.f32 %v2196, %v2353
        %v2442 = vadd.f32 %v2197, %v2356
        %v2443 = vadd.f32 %v2198, %v2358
        %v2444 = vadd.f32 %v2199, %v2361
        %v2445 = vadd.f32 %v2200, %v2363
        %v2446 = vadd.f32 %v2201, %v2366
        %v2447 = vadd.f32 %v2202, %v2368
        %v2448 = vadd.f32 %v2203, %v2371
        %v2449 = vadd.f32 %v2204, %v2373
        %v2450 = vadd.f32 %v2205, %v2376
        %v2451 = vadd.f32 %v2206, %v2378
        %v2452 = vadd.f32 %v2207, %v2381
        %v2453 = vadd.f32 %v2208, %v2383
        %v2454 = vadd.f32 %v2209, %v2386
        %v2455 = vadd.f32 %v2210, %v2388
        %v2456 = vadd.f32 %v2211, %v2391
        %v2457 = vadd.f32 %v2212, %v2393
        %v2458 = vld [vmem:[#allocation9 + $0x8] sm:$0x1]
        %v2459 = vlaneseq
        %v2460 = vshrl.u32 %v2459, 7
        %v2461 = vsub.s32 0, %v2460
        %v2462 = vrot.slane %v2458, %v2461
        %v2463 = vmul.f32 %v2096, %v2462
        %v2464 = vmul.f32 %v2097, %v2462
        %v2465 = vmul.f32 %v2098, %v2462
        %v2466 = vmul.f32 %v2099, %v2462
        %v2467 = vmul.f32 %v2100, %v2462
        %v2468 = vmul.f32 %v2101, %v2462
        %v2469 = vmul.f32 %v2102, %v2462
        %v2470 = vmul.f32 %v2103, %v2462
        %v2471 = vmul.f32 %v2104, %v2462
        %v2472 = vmul.f32 %v2105, %v2462
        %v2473 = vmul.f32 %v2106, %v2462
        %v2474 = vmul.f32 %v2107, %v2462
        %v2475 = vmul.f32 %v2108, %v2462
        %v2476 = vmul.f32 %v2109, %v2462
        %v2477 = vmul.f32 %v2110, %v2462
        %v2478 = vmul.f32 %v2111, %v2462
        %v2479 = vmul.f32 %v2112, %v2462
        %v2480 = vmul.f32 %v2113, %v2462
        %v2481 = vmul.f32 %v2114, %v2462
        %v2482 = vmul.f32 %v2115, %v2462
        %v2483 = vmul.f32 %v2116, %v2462
        %v2484 = vmul.f32 %v2117, %v2462
        %v2485 = vmul.f32 %v2118, %v2462
        %v2486 = vmul.f32 %v2119, %v2462
        %v2487 = vmul.f32 %v2120, %v2462
        %v2488 = vmul.f32 %v2121, %v2462
        %v2489 = vmul.f32 %v2122, %v2462
        %v2490 = vmul.f32 %v2123, %v2462
        %v2491 = vmul.f32 %v2124, %v2462
        %v2492 = vmul.f32 %v2125, %v2462
        %v2493 = vmul.f32 %v2126, %v2462
        %v2494 = vmul.f32 %v2127, %v2462
        %v2495 = vmul.f32 %v2128, %v2462
        %v2496 = vmul.f32 %v2129, %v2462
        %v2497 = vmul.f32 %v2130, %v2462
        %v2498 = vmul.f32 %v2131, %v2462
        %v2499 = vmul.f32 %v2132, %v2462
        %v2500 = vmul.f32 %v2133, %v2462
        %v2501 = vmul.f32 %v2134, %v2462
        %v2502 = vmul.f32 %v2135, %v2462
        %v2503 = vmul.f32 %v2136, %v2462
        %v2504 = vmul.f32 %v2137, %v2462
        %v2505 = vmul.f32 %v2138, %v2462
        %v2506 = vmul.f32 %v2139, %v2462
        %v2507 = vmul.f32 %v2140, %v2462
        %v2508 = vmul.f32 %v2141, %v2462
        %v2509 = vmul.f32 %v2142, %v2462
        %v2510 = vmul.f32 %v2143, %v2462
        %v2559 = vrot.slane %v2463, 2
        %v2560 = vrot.slane %v2464, 2
        %v2561 = vsel %vm1343, %v2559, %v2560
        %v2562 = vrot.slane %v2465, 2
        %v2563 = vsel %vm1343, %v2560, %v2562
        %v2564 = vrot.slane %v2466, 2
        %v2565 = vrot.slane %v2467, 2
        %v2566 = vsel %vm1343, %v2564, %v2565
        %v2567 = vrot.slane %v2468, 2
        %v2568 = vsel %vm1343, %v2565, %v2567
        %v2569 = vrot.slane %v2469, 2
        %v2570 = vrot.slane %v2470, 2
        %v2571 = vsel %vm1343, %v2569, %v2570
        %v2572 = vrot.slane %v2471, 2
        %v2573 = vsel %vm1343, %v2570, %v2572
        %v2574 = vrot.slane %v2472, 2
        %v2575 = vrot.slane %v2473, 2
        %v2576 = vsel %vm1343, %v2574, %v2575
        %v2577 = vrot.slane %v2474, 2
        %v2578 = vsel %vm1343, %v2575, %v2577
        %v2579 = vrot.slane %v2475, 2
        %v2580 = vrot.slane %v2476, 2
        %v2581 = vsel %vm1343, %v2579, %v2580
        %v2582 = vrot.slane %v2477, 2
        %v2583 = vsel %vm1343, %v2580, %v2582
        %v2584 = vrot.slane %v2478, 2
        %v2585 = vrot.slane %v2479, 2
        %v2586 = vsel %vm1343, %v2584, %v2585
        %v2587 = vrot.slane %v2480, 2
        %v2588 = vsel %vm1343, %v2585, %v2587
        %v2589 = vrot.slane %v2481, 2
        %v2590 = vrot.slane %v2482, 2
        %v2591 = vsel %vm1343, %v2589, %v2590
        %v2592 = vrot.slane %v2483, 2
        %v2593 = vsel %vm1343, %v2590, %v2592
        %v2594 = vrot.slane %v2484, 2
        %v2595 = vrot.slane %v2485, 2
        %v2596 = vsel %vm1343, %v2594, %v2595
        %v2597 = vrot.slane %v2486, 2
        %v2598 = vsel %vm1343, %v2595, %v2597
        %v2599 = vrot.slane %v2487, 2
        %v2600 = vrot.slane %v2488, 2
        %v2601 = vsel %vm1343, %v2599, %v2600
        %v2602 = vrot.slane %v2489, 2
        %v2603 = vsel %vm1343, %v2600, %v2602
        %v2604 = vrot.slane %v2490, 2
        %v2605 = vrot.slane %v2491, 2
        %v2606 = vsel %vm1343, %v2604, %v2605
        %v2607 = vrot.slane %v2492, 2
        %v2608 = vsel %vm1343, %v2605, %v2607
        %v2609 = vrot.slane %v2493, 2
        %v2610 = vrot.slane %v2494, 2
        %v2611 = vsel %vm1343, %v2609, %v2610
        %v2612 = vrot.slane %v2495, 2
        %v2613 = vsel %vm1343, %v2610, %v2612
        %v2614 = vrot.slane %v2496, 2
        %v2615 = vrot.slane %v2497, 2
        %v2616 = vsel %vm1343, %v2614, %v2615
        %v2617 = vrot.slane %v2498, 2
        %v2618 = vsel %vm1343, %v2615, %v2617
        %v2619 = vrot.slane %v2499, 2
        %v2620 = vrot.slane %v2500, 2
        %v2621 = vsel %vm1343, %v2619, %v2620
        %v2622 = vrot.slane %v2501, 2
        %v2623 = vsel %vm1343, %v2620, %v2622
        %v2624 = vrot.slane %v2502, 2
        %v2625 = vrot.slane %v2503, 2
        %v2626 = vsel %vm1343, %v2624, %v2625
        %v2627 = vrot.slane %v2504, 2
        %v2628 = vsel %vm1343, %v2625, %v2627
        %v2629 = vrot.slane %v2505, 2
        %v2630 = vrot.slane %v2506, 2
        %v2631 = vsel %vm1343, %v2629, %v2630
        %v2632 = vrot.slane %v2507, 2
        %v2633 = vsel %vm1343, %v2630, %v2632
        %v2634 = vrot.slane %v2508, 2
        %v2635 = vrot.slane %v2509, 2
        %v2636 = vsel %vm1343, %v2634, %v2635
        %v2637 = vrot.slane %v2510, 2
        %v2638 = vsel %vm1343, %v2635, %v2637
        %v2671 = vadd.f32 %v2426, %v2561
        %v2672 = vadd.f32 %v2427, %v2563
        %v2673 = vadd.f32 %v2428, %v2566
        %v2674 = vadd.f32 %v2429, %v2568
        %v2675 = vadd.f32 %v2430, %v2571
        %v2676 = vadd.f32 %v2431, %v2573
        %v2677 = vadd.f32 %v2432, %v2576
        %v2678 = vadd.f32 %v2433, %v2578
        %v2679 = vadd.f32 %v2434, %v2581
        %v2680 = vadd.f32 %v2435, %v2583
        %v2681 = vadd.f32 %v2436, %v2586
        %v2682 = vadd.f32 %v2437, %v2588
        %v2683 = vadd.f32 %v2438, %v2591
        %v2684 = vadd.f32 %v2439, %v2593
        %v2685 = vadd.f32 %v2440, %v2596
        %v2686 = vadd.f32 %v2441, %v2598
        %v2687 = vadd.f32 %v2442, %v2601
        %v2688 = vadd.f32 %v2443, %v2603
        %v2689 = vadd.f32 %v2444, %v2606
        %v2690 = vadd.f32 %v2445, %v2608
        %v2691 = vadd.f32 %v2446, %v2611
        %v2692 = vadd.f32 %v2447, %v2613
        %v2693 = vadd.f32 %v2448, %v2616
        %v2694 = vadd.f32 %v2449, %v2618
        %v2695 = vadd.f32 %v2450, %v2621
        %v2696 = vadd.f32 %v2451, %v2623
        %v2697 = vadd.f32 %v2452, %v2626
        %v2698 = vadd.f32 %v2453, %v2628
        %v2699 = vadd.f32 %v2454, %v2631
        %v2700 = vadd.f32 %v2455, %v2633
        %v2701 = vadd.f32 %v2456, %v2636
        %v2702 = vadd.f32 %v2457, %v2638
        %v2703 = vld [vmem:[#allocation11] sm:$0x1]
        %v2705 = vlaneseq
        %v2706 = vshrl.u32 %v2705, 7
        %v2707 = vsub.s32 0, %v2706
        %v2708 = vrot.slane %v2703, %v2707
        %v2710 = vadd.f32 %v2671, %v2708
        %v2711 = vadd.f32 %v2672, %v2708
        %v2712 = vadd.f32 %v2673, %v2708
        %v2713 = vadd.f32 %v2674, %v2708
        %v2714 = vadd.f32 %v2675, %v2708
        %v2715 = vadd.f32 %v2676, %v2708
        %v2716 = vadd.f32 %v2677, %v2708
        %v2717 = vadd.f32 %v2678, %v2708
        %v2718 = vadd.f32 %v2679, %v2708
        %v2719 = vadd.f32 %v2680, %v2708
        %v2720 = vadd.f32 %v2681, %v2708
        %v2721 = vadd.f32 %v2682, %v2708
        %v2722 = vadd.f32 %v2683, %v2708
        %v2723 = vadd.f32 %v2684, %v2708
        %v2724 = vadd.f32 %v2685, %v2708
        %v2725 = vadd.f32 %v2686, %v2708
        %v2726 = vadd.f32 %v2687, %v2708
        %v2727 = vadd.f32 %v2688, %v2708
        %v2728 = vadd.f32 %v2689, %v2708
        %v2729 = vadd.f32 %v2690, %v2708
        %v2730 = vadd.f32 %v2691, %v2708
        %v2731 = vadd.f32 %v2692, %v2708
        %v2732 = vadd.f32 %v2693, %v2708
        %v2733 = vadd.f32 %v2694, %v2708
        %v2734 = vadd.f32 %v2695, %v2708
        %v2735 = vadd.f32 %v2696, %v2708
        %v2736 = vadd.f32 %v2697, %v2708
        %v2737 = vadd.f32 %v2698, %v2708
        %v2738 = vadd.f32 %v2699, %v2708
        %v2739 = vadd.f32 %v2700, %v2708
        %v2740 = vadd.f32 %v2701, %v2708
        %v2741 = vadd.f32 %v2702, %v2708
        %v2742 = vmax.f32 %v2710, 0.0
        %v2743 = vmax.f32 %v2711, 0.0
        %v2744 = vmax.f32 %v2712, 0.0
        %v2745 = vmax.f32 %v2713, 0.0
        %v2746 = vmax.f32 %v2714, 0.0
        %v2747 = vmax.f32 %v2715, 0.0
        %v2748 = vmax.f32 %v2716, 0.0
        %v2749 = vmax.f32 %v2717, 0.0
        %v2750 = vmax.f32 %v2718, 0.0
        %v2751 = vmax.f32 %v2719, 0.0
        %v2752 = vmax.f32 %v2720, 0.0
        %v2753 = vmax.f32 %v2721, 0.0
        %v2754 = vmax.f32 %v2722, 0.0
        %v2755 = vmax.f32 %v2723, 0.0
        %v2756 = vmax.f32 %v2724, 0.0
        %v2757 = vmax.f32 %v2725, 0.0
        %v2758 = vmax.f32 %v2726, 0.0
        %v2759 = vmax.f32 %v2727, 0.0
        %v2760 = vmax.f32 %v2728, 0.0
        %v2761 = vmax.f32 %v2729, 0.0
        %v2762 = vmax.f32 %v2730, 0.0
        %v2763 = vmax.f32 %v2731, 0.0
        %v2764 = vmax.f32 %v2732, 0.0
        %v2765 = vmax.f32 %v2733, 0.0
        %v2766 = vmax.f32 %v2734, 0.0
        %v2767 = vmax.f32 %v2735, 0.0
        %v2768 = vmax.f32 %v2736, 0.0
        %v2769 = vmax.f32 %v2737, 0.0
        %v2770 = vmax.f32 %v2738, 0.0
        %v2771 = vmax.f32 %v2739, 0.0
        %v2772 = vmax.f32 %v2740, 0.0
        %v2773 = vmax.f32 %v2741, 0.0
        %v2774 = vmin.f32 %v2742, 6.0
        %v2775 = vmin.f32 %v2743, 6.0
        %v2776 = vmin.f32 %v2744, 6.0
        %v2777 = vmin.f32 %v2745, 6.0
        %v2778 = vmin.f32 %v2746, 6.0
        %v2779 = vmin.f32 %v2747, 6.0
        %v2780 = vmin.f32 %v2748, 6.0
        %v2781 = vmin.f32 %v2749, 6.0
        %v2782 = vmin.f32 %v2750, 6.0
        %v2783 = vmin.f32 %v2751, 6.0
        %v2784 = vmin.f32 %v2752, 6.0
        %v2785 = vmin.f32 %v2753, 6.0
        %v2786 = vmin.f32 %v2754, 6.0
        %v2787 = vmin.f32 %v2755, 6.0
        %v2788 = vmin.f32 %v2756, 6.0
        %v2789 = vmin.f32 %v2757, 6.0
        %v2790 = vmin.f32 %v2758, 6.0
        %v2791 = vmin.f32 %v2759, 6.0
        %v2792 = vmin.f32 %v2760, 6.0
        %v2793 = vmin.f32 %v2761, 6.0
        %v2794 = vmin.f32 %v2762, 6.0
        %v2795 = vmin.f32 %v2763, 6.0
        %v2796 = vmin.f32 %v2764, 6.0
        %v2797 = vmin.f32 %v2765, 6.0
        %v2798 = vmin.f32 %v2766, 6.0
        %v2799 = vmin.f32 %v2767, 6.0
        %v2800 = vmin.f32 %v2768, 6.0
        %v2801 = vmin.f32 %v2769, 6.0
        %v2802 = vmin.f32 %v2770, 6.0
        %v2803 = vmin.f32 %v2771, 6.0
        %v2804 = vmin.f32 %v2772, 6.0
        %v2805 = vmin.f32 %v2773, 6.0
        %v2806 = vpack.c.bf16 %v2775, %v2774
        %v2807 = vpack.c.bf16 %v2777, %v2776
        %v2808 = vpack.c.bf16 %v2779, %v2778
        %v2809 = vpack.c.bf16 %v2781, %v2780
        %v2810 = vpack.c.bf16 %v2783, %v2782
        %v2811 = vpack.c.bf16 %v2785, %v2784
        %v2812 = vpack.c.bf16 %v2787, %v2786
        %v2813 = vpack.c.bf16 %v2789, %v2788
        %v2814 = vpack.c.bf16 %v2791, %v2790
        %v2815 = vpack.c.bf16 %v2793, %v2792
        %v2816 = vpack.c.bf16 %v2795, %v2794
        %v2817 = vpack.c.bf16 %v2797, %v2796
        %v2818 = vpack.c.bf16 %v2799, %v2798
        %v2819 = vpack.c.bf16 %v2801, %v2800
        %v2820 = vpack.c.bf16 %v2803, %v2802
        %v2821 = vpack.c.bf16 %v2805, %v2804
        %v2822 = vld [vmem:[#allocation12] sm:$0xf]
        %v2823 = vld [vmem:[#allocation12 + $0x4] sm:$0xf]
        %v2824 = vld [vmem:[#allocation12 + $0x8] sm:$0xf]
        %v2825 = vld [vmem:[#allocation14] sm:$0x1]
        %v2827 = vlaneseq
        %v2828 = vshrl.u32 %v2827, 7
        %v2829 = vsub.s32 0, %v2828
        %v2830 = vrot.slane %v2825, %v2829
        %v2835 = vunpack.c.l.b16 %v2822
        %v2836 = vunpack.c.l.b16 %v2823
        %v2837 = vunpack.c.l.b16 %v2824
        %v2838 = vpack.c.b16 %v2836, %v2835
        %v2839 = vpack.c.b16 %v2837, %v2837
        %v2842 = vsel %vm790, %v2806, 0
        %v2845 = vsel %vm790, %v2807, 0
        %v2848 = vsel %vm790, %v2808, 0
        %v2851 = vsel %vm790, %v2809, 0
        %v2854 = vsel %vm790, %v2810, 0
        %v2857 = vsel %vm790, %v2811, 0
        %v2860 = vsel %vm790, %v2812, 0
        %v2863 = vsel %vm790, %v2813, 0
        %v2866 = vsel %vm790, %v2814, 0
        %v2869 = vsel %vm790, %v2815, 0
        %v2872 = vsel %vm790, %v2816, 0
        %v2875 = vsel %vm790, %v2817, 0
        %v2878 = vsel %vm790, %v2818, 0
        %v2881 = vsel %vm790, %v2819, 0
        %v2884 = vsel %vm790, %v2820, 0
        %v2887 = vsel %vm790, %v2821, 0
        %vm2889 = vcmask 1043456
        %v2891 = vsel %vm2889, %v2839, 0
        %2893 = vmatprep.subr.bf16.mxu0 0
        %2894 = vmatpush1.bf16.msra.mxu0 %v2838
        %2895 = vmatprep.subr.bf16.mxu0 0
        %2896 = vmatpush1.bf16.msra.mxu0 %v2891
        %2897 = vmatprep.subr.bf16.mxu0 0
        %2898 = vmatpush1.bf16.msra.mxu0 0
        %2899 = vmatprep.subr.bf16.mxu0 0
        %2900 = vmatpush1.bf16.msra.mxu0 0
        %2901 = vmatprep.subr.bf16.mxu0 0
        %2902 = vmatpush1.bf16.msra.mxu0 0
        %2903 = vmatprep.subr.bf16.mxu0 0
        %2904 = vmatpush1.bf16.msra.mxu0 0
        %2905 = vmatprep.subr.bf16.mxu0 0
        %2906 = vmatpush1.bf16.msra.mxu0 0
        %2907 = vmatprep.subr.bf16.mxu0 0
        %2908 = vmatpush1.bf16.msra.mxu0 0
        %2909 = vmatprep.subr.bf16.mxu0 0
        %2910 = vmatpush1.bf16.msra.mxu0 0
        %2911 = vmatprep.subr.bf16.mxu0 0
        %2912 = vmatpush1.bf16.msra.mxu0 0
        %2913 = vmatprep.subr.bf16.mxu0 0
        %2914 = vmatpush1.bf16.msra.mxu0 0
        %2915 = vmatprep.subr.bf16.mxu0 0
        %2916 = vmatpush1.bf16.msra.mxu0 0
        %2917 = vmatprep.subr.bf16.mxu0 0
        %2918 = vmatpush1.bf16.msra.mxu0 0
        %2919 = vmatprep.subr.bf16.mxu0 0
        %2920 = vmatpush1.bf16.msra.mxu0 0
        %2921 = vmatprep.subr.bf16.mxu0 0
        %2922 = vmatpush1.bf16.msra.mxu0 0
        %2923 = vmatprep.subr.bf16.mxu0 0
        %2924 = vmatpush1.bf16.msra.mxu0 0
        %2925 = vmatprep.mubr.bf16.mxu0 0
        %2926 = vmatmul.mubr.bf16.gmra.mrb[0].mxu0 %v2842
        %v2927 = vpop.f32.mrb[0].mxu0
        %v2928 = vadd.f32 %v2830, %v2927
        %v2929 = vpop.f32.mrb[0].mxu0
        %v2930 = vpop.f32.mrb[0].mxu0
        %v2931 = vadd.f32 %v2830, %v2930
        %v2932 = vpop.f32.mrb[0].mxu0
        %2933 = vmatprep.mubr.bf16.mxu0 0
        %2934 = vmatmul.mubr.bf16.gmra.mrb[0].mxu0 %v2845
        %v2935 = vpop.f32.mrb[0].mxu0
        %v2936 = vadd.f32 %v2830, %v2935
        %v2937 = vpop.f32.mrb[0].mxu0
        %v2938 = vpop.f32.mrb[0].mxu0
        %v2939 = vadd.f32 %v2830, %v2938
        %v2940 = vpop.f32.mrb[0].mxu0
        %2941 = vmatprep.mubr.bf16.mxu0 0
        %2942 = vmatmul.mubr.bf16.gmra.mrb[0].mxu0 %v2848
        %v2943 = vpop.f32.mrb[0].mxu0
        %v2944 = vadd.f32 %v2830, %v2943
        %v2945 = vpop.f32.mrb[0].mxu0
        %v2946 = vpop.f32.mrb[0].mxu0
        %v2947 = vadd.f32 %v2830, %v2946
        %v2948 = vpop.f32.mrb[0].mxu0
        %2949 = vmatprep.mubr.bf16.mxu0 0
        %2950 = vmatmul.mubr.bf16.gmra.mrb[0].mxu0 %v2851
        %v2951 = vpop.f32.mrb[0].mxu0
        %v2952 = vadd.f32 %v2830, %v2951
        %v2953 = vpop.f32.mrb[0].mxu0
        %v2954 = vpop.f32.mrb[0].mxu0
        %v2955 = vadd.f32 %v2830, %v2954
        %v2956 = vpop.f32.mrb[0].mxu0
        %2957 = vmatprep.mubr.bf16.mxu0 0
        %2958 = vmatmul.mubr.bf16.gmra.mrb[0].mxu0 %v2854
        %v2959 = vpop.f32.mrb[0].mxu0
        %v2960 = vadd.f32 %v2830, %v2959
        %v2961 = vpop.f32.mrb[0].mxu0
        %v2962 = vpop.f32.mrb[0].mxu0
        %v2963 = vadd.f32 %v2830, %v2962
        %v2964 = vpop.f32.mrb[0].mxu0
        %2965 = vmatprep.mubr.bf16.mxu0 0
        %2966 = vmatmul.mubr.bf16.gmra.mrb[0].mxu0 %v2857
        %v2967 = vpop.f32.mrb[0].mxu0
        %v2968 = vadd.f32 %v2830, %v2967
        %v2969 = vpop.f32.mrb[0].mxu0
        %v2970 = vpop.f32.mrb[0].mxu0
        %v2971 = vadd.f32 %v2830, %v2970
        %v2972 = vpop.f32.mrb[0].mxu0
        %2973 = vmatprep.mubr.bf16.mxu0 0
        %2974 = vmatmul.mubr.bf16.gmra.mrb[0].mxu0 %v2860
        %v2975 = vpop.f32.mrb[0].mxu0
        %v2976 = vadd.f32 %v2830, %v2975
        %v2977 = vpop.f32.mrb[0].mxu0
        %v2978 = vpop.f32.mrb[0].mxu0
        %v2979 = vadd.f32 %v2830, %v2978
        %v2980 = vpop.f32.mrb[0].mxu0
        %2981 = vmatprep.mubr.bf16.mxu0 0
        %2982 = vmatmul.mubr.bf16.gmra.mrb[0].mxu0 %v2863
        %v2983 = vpop.f32.mrb[0].mxu0
        %v2984 = vadd.f32 %v2830, %v2983
        %v2985 = vpop.f32.mrb[0].mxu0
        %v2986 = vpop.f32.mrb[0].mxu0
        %v2987 = vadd.f32 %v2830, %v2986
        %v2988 = vpop.f32.mrb[0].mxu0
        %2989 = vmatprep.mubr.bf16.mxu0 0
        %2990 = vmatmul.mubr.bf16.gmra.mrb[0].mxu0 %v2866
        %v2991 = vpop.f32.mrb[0].mxu0
        %v2992 = vadd.f32 %v2830, %v2991
        %v2993 = vpop.f32.mrb[0].mxu0
        %v2994 = vpop.f32.mrb[0].mxu0
        %v2995 = vadd.f32 %v2830, %v2994
        %v2996 = vpop.f32.mrb[0].mxu0
        %2997 = vmatprep.mubr.bf16.mxu0 0
        %2998 = vmatmul.mubr.bf16.gmra.mrb[0].mxu0 %v2869
        %v2999 = vpop.f32.mrb[0].mxu0
        %v3000 = vadd.f32 %v2830, %v2999
        %v3001 = vpop.f32.mrb[0].mxu0
        %v3002 = vpop.f32.mrb[0].mxu0
        %v3003 = vadd.f32 %v2830, %v3002
        %v3004 = vpop.f32.mrb[0].mxu0
        %3005 = vmatprep.mubr.bf16.mxu0 0
        %3006 = vmatmul.mubr.bf16.gmra.mrb[0].mxu0 %v2872
        %v3007 = vpop.f32.mrb[0].mxu0
        %v3008 = vadd.f32 %v2830, %v3007
        %v3009 = vpop.f32.mrb[0].mxu0
        %v3010 = vpop.f32.mrb[0].mxu0
        %v3011 = vadd.f32 %v2830, %v3010
        %v3012 = vpop.f32.mrb[0].mxu0
        %3013 = vmatprep.mubr.bf16.mxu0 0
        %3014 = vmatmul.mubr.bf16.gmra.mrb[0].mxu0 %v2875
        %v3015 = vpop.f32.mrb[0].mxu0
        %v3016 = vadd.f32 %v2830, %v3015
        %v3017 = vpop.f32.mrb[0].mxu0
        %v3018 = vpop.f32.mrb[0].mxu0
        %v3019 = vadd.f32 %v2830, %v3018
        %v3020 = vpop.f32.mrb[0].mxu0
        %3021 = vmatprep.mubr.bf16.mxu0 0
        %3022 = vmatmul.mubr.bf16.gmra.mrb[0].mxu0 %v2878
        %v3023 = vpop.f32.mrb[0].mxu0
        %v3024 = vadd.f32 %v2830, %v3023
        %v3025 = vpop.f32.mrb[0].mxu0
        %v3026 = vpop.f32.mrb[0].mxu0
        %v3027 = vadd.f32 %v2830, %v3026
        %v3028 = vpop.f32.mrb[0].mxu0
        %3029 = vmatprep.mubr.bf16.mxu0 0
        %3030 = vmatmul.mubr.bf16.gmra.mrb[0].mxu0 %v2881
        %v3031 = vpop.f32.mrb[0].mxu0
        %v3032 = vadd.f32 %v2830, %v3031
        %v3033 = vpop.f32.mrb[0].mxu0
        %v3034 = vpop.f32.mrb[0].mxu0
        %v3035 = vadd.f32 %v2830, %v3034
        %v3036 = vpop.f32.mrb[0].mxu0
        %3037 = vmatprep.mubr.bf16.mxu0 0
        %3038 = vmatmul.mubr.bf16.gmra.mrb[0].mxu0 %v2884
        %v3039 = vpop.f32.mrb[0].mxu0
        %v3040 = vadd.f32 %v2830, %v3039
        %v3041 = vpop.f32.mrb[0].mxu0
        %v3042 = vpop.f32.mrb[0].mxu0
        %v3043 = vadd.f32 %v2830, %v3042
        %v3044 = vpop.f32.mrb[0].mxu0
        %3045 = vmatprep.mubr.bf16.mxu0 0
        %3046 = vmatmul.mubr.bf16.gmra.mrb[0].mxu0 %v2887
        %v3047 = vpop.f32.mrb[0].mxu0
        %v3048 = vadd.f32 %v2830, %v3047
        %v3049 = vpop.f32.mrb[0].mxu0
        %v3050 = vpop.f32.mrb[0].mxu0
        %v3051 = vadd.f32 %v2830, %v3050
        %v3052 = vpop.f32.mrb[0].mxu0
        %3053 = vdwg.mxu0
        %v3054 = vld [vmem:[#allocation15] sm:$0x3]
        %v3056 = vsel %vm561, %v3054, 0
        %3058 = vmatprep.subr.bf16.mxu0 0
        %3059 = vmatpush1.bf16.msra.mxu0 %v3056
        %3060 = vmatprep.subr.bf16.mxu0 0
        %3061 = vmatpush1.bf16.msra.mxu0 0
        %3062 = vmatprep.subr.bf16.mxu0 0
        %3063 = vmatpush1.bf16.msra.mxu0 0
        %3064 = vmatprep.subr.bf16.mxu0 0
        %3065 = vmatpush1.bf16.msra.mxu0 0
        %3066 = vmatprep.subr.bf16.mxu0 0
        %3067 = vmatpush1.bf16.msra.mxu0 0
        %3068 = vmatprep.subr.bf16.mxu0 0
        %3069 = vmatpush1.bf16.msra.mxu0 0
        %3070 = vmatprep.subr.bf16.mxu0 0
        %3071 = vmatpush1.bf16.msra.mxu0 0
        %3072 = vmatprep.subr.bf16.mxu0 0
        %3073 = vmatpush1.bf16.msra.mxu0 0
        %3074 = vmatprep.subr.bf16.mxu0 0
        %3075 = vmatpush1.bf16.msra.mxu0 0
        %3076 = vmatprep.subr.bf16.mxu0 0
        %3077 = vmatpush1.bf16.msra.mxu0 0
        %3078 = vmatprep.subr.bf16.mxu0 0
        %3079 = vmatpush1.bf16.msra.mxu0 0
        %3080 = vmatprep.subr.bf16.mxu0 0
        %3081 = vmatpush1.bf16.msra.mxu0 0
        %3082 = vmatprep.subr.bf16.mxu0 0
        %3083 = vmatpush1.bf16.msra.mxu0 0
        %3084 = vmatprep.subr.bf16.mxu0 0
        %3085 = vmatpush1.bf16.msra.mxu0 0
        %3086 = vmatprep.subr.bf16.mxu0 0
        %3087 = vmatpush1.bf16.msra.mxu0 0
        %3088 = vmatprep.subr.bf16.mxu0 0
        %3089 = vmatpush1.bf16.msra.mxu0 0
        %3090 = vmatprep.mubr.bf16.mxu0 0
        %3091 = vmatmul.mubr.bf16.gmra.mrb[0].mxu0 %v514
        %v3092 = vpop.f32.mrb[0].mxu0
        %v3093 = vadd.f32 0.0, %v3092
        %v3094 = vpop.f32.mrb[0].mxu0
        %v3095 = vpop.f32.mrb[0].mxu0
        %v3096 = vadd.f32 0.0, %v3095
        %v3097 = vpop.f32.mrb[0].mxu0
        %3098 = vmatprep.mubr.bf16.mxu0 0
        %3099 = vmatmul.mubr.bf16.gmra.mrb[0].mxu0 %v517
        %v3100 = vpop.f32.mrb[0].mxu0
        %v3101 = vadd.f32 0.0, %v3100
        %v3102 = vpop.f32.mrb[0].mxu0
        %v3103 = vpop.f32.mrb[0].mxu0
        %v3104 = vadd.f32 0.0, %v3103
        %v3105 = vpop.f32.mrb[0].mxu0
        %3106 = vmatprep.mubr.bf16.mxu0 0
        %3107 = vmatmul.mubr.bf16.gmra.mrb[0].mxu0 %v520
        %v3108 = vpop.f32.mrb[0].mxu0
        %v3109 = vadd.f32 0.0, %v3108
        %v3110 = vpop.f32.mrb[0].mxu0
        %v3111 = vpop.f32.mrb[0].mxu0
        %v3112 = vadd.f32 0.0, %v3111
        %v3113 = vpop.f32.mrb[0].mxu0
        %3114 = vmatprep.mubr.bf16.mxu0 0
        %3115 = vmatmul.mubr.bf16.gmra.mrb[0].mxu0 %v523
        %v3116 = vpop.f32.mrb[0].mxu0
        %v3117 = vadd.f32 0.0, %v3116
        %v3118 = vpop.f32.mrb[0].mxu0
        %v3119 = vpop.f32.mrb[0].mxu0
        %v3120 = vadd.f32 0.0, %v3119
        %v3121 = vpop.f32.mrb[0].mxu0
        %3122 = vmatprep.mubr.bf16.mxu0 0
        %3123 = vmatmul.mubr.bf16.gmra.mrb[0].mxu0 %v526
        %v3124 = vpop.f32.mrb[0].mxu0
        %v3125 = vadd.f32 0.0, %v3124
        %v3126 = vpop.f32.mrb[0].mxu0
        %v3127 = vpop.f32.mrb[0].mxu0
        %v3128 = vadd.f32 0.0, %v3127
        %v3129 = vpop.f32.mrb[0].mxu0
        %3130 = vmatprep.mubr.bf16.mxu0 0
        %3131 = vmatmul.mubr.bf16.gmra.mrb[0].mxu0 %v529
        %v3132 = vpop.f32.mrb[0].mxu0
        %v3133 = vadd.f32 0.0, %v3132
        %v3134 = vpop.f32.mrb[0].mxu0
        %v3135 = vpop.f32.mrb[0].mxu0
        %v3136 = vadd.f32 0.0, %v3135
        %v3137 = vpop.f32.mrb[0].mxu0
        %3138 = vmatprep.mubr.bf16.mxu0 0
        %3139 = vmatmul.mubr.bf16.gmra.mrb[0].mxu0 %v532
        %v3140 = vpop.f32.mrb[0].mxu0
        %v3141 = vadd.f32 0.0, %v3140
        %v3142 = vpop.f32.mrb[0].mxu0
        %v3143 = vpop.f32.mrb[0].mxu0
        %v3144 = vadd.f32 0.0, %v3143
        %v3145 = vpop.f32.mrb[0].mxu0
        %3146 = vmatprep.mubr.bf16.mxu0 0
        %3147 = vmatmul.mubr.bf16.gmra.mrb[0].mxu0 %v535
        %v3148 = vpop.f32.mrb[0].mxu0
        %v3149 = vadd.f32 0.0, %v3148
        %v3150 = vpop.f32.mrb[0].mxu0
        %v3151 = vpop.f32.mrb[0].mxu0
        %v3152 = vadd.f32 0.0, %v3151
        %v3153 = vpop.f32.mrb[0].mxu0
        %3154 = vmatprep.mubr.bf16.mxu0 0
        %3155 = vmatmul.mubr.bf16.gmra.mrb[0].mxu0 %v538
        %v3156 = vpop.f32.mrb[0].mxu0
        %v3157 = vadd.f32 0.0, %v3156
        %v3158 = vpop.f32.mrb[0].mxu0
        %v3159 = vpop.f32.mrb[0].mxu0
        %v3160 = vadd.f32 0.0, %v3159
        %v3161 = vpop.f32.mrb[0].mxu0
        %3162 = vmatprep.mubr.bf16.mxu0 0
        %3163 = vmatmul.mubr.bf16.gmra.mrb[0].mxu0 %v541
        %v3164 = vpop.f32.mrb[0].mxu0
        %v3165 = vadd.f32 0.0, %v3164
        %v3166 = vpop.f32.mrb[0].mxu0
        %v3167 = vpop.f32.mrb[0].mxu0
        %v3168 = vadd.f32 0.0, %v3167
        %v3169 = vpop.f32.mrb[0].mxu0
        %3170 = vmatprep.mubr.bf16.mxu0 0
        %3171 = vmatmul.mubr.bf16.gmra.mrb[0].mxu0 %v544
        %v3172 = vpop.f32.mrb[0].mxu0
        %v3173 = vadd.f32 0.0, %v3172
        %v3174 = vpop.f32.mrb[0].mxu0
        %v3175 = vpop.f32.mrb[0].mxu0
        %v3176 = vadd.f32 0.0, %v3175
        %v3177 = vpop.f32.mrb[0].mxu0
        %3178 = vmatprep.mubr.bf16.mxu0 0
        %3179 = vmatmul.mubr.bf16.gmra.mrb[0].mxu0 %v547
        %v3180 = vpop.f32.mrb[0].mxu0
        %v3181 = vadd.f32 0.0, %v3180
        %v3182 = vpop.f32.mrb[0].mxu0
        %v3183 = vpop.f32.mrb[0].mxu0
        %v3184 = vadd.f32 0.0, %v3183
        %v3185 = vpop.f32.mrb[0].mxu0
        %3186 = vmatprep.mubr.bf16.mxu0 0
        %3187 = vmatmul.mubr.bf16.gmra.mrb[0].mxu0 %v550
        %v3188 = vpop.f32.mrb[0].mxu0
        %v3189 = vadd.f32 0.0, %v3188
        %v3190 = vpop.f32.mrb[0].mxu0
        %v3191 = vpop.f32.mrb[0].mxu0
        %v3192 = vadd.f32 0.0, %v3191
        %v3193 = vpop.f32.mrb[0].mxu0
        %3194 = vmatprep.mubr.bf16.mxu0 0
        %3195 = vmatmul.mubr.bf16.gmra.mrb[0].mxu0 %v553
        %v3196 = vpop.f32.mrb[0].mxu0
        %v3197 = vadd.f32 0.0, %v3196
        %v3198 = vpop.f32.mrb[0].mxu0
        %v3199 = vpop.f32.mrb[0].mxu0
        %v3200 = vadd.f32 0.0, %v3199
        %v3201 = vpop.f32.mrb[0].mxu0
        %3202 = vmatprep.mubr.bf16.mxu0 0
        %3203 = vmatmul.mubr.bf16.gmra.mrb[0].mxu0 %v556
        %v3204 = vpop.f32.mrb[0].mxu0
        %v3205 = vadd.f32 0.0, %v3204
        %v3206 = vpop.f32.mrb[0].mxu0
        %v3207 = vpop.f32.mrb[0].mxu0
        %v3208 = vadd.f32 0.0, %v3207
        %v3209 = vpop.f32.mrb[0].mxu0
        %3210 = vmatprep.mubr.bf16.mxu0 0
        %3211 = vmatmul.mubr.bf16.gmra.mrb[0].mxu0 %v559
        %v3212 = vpop.f32.mrb[0].mxu0
        %v3213 = vadd.f32 0.0, %v3212
        %v3214 = vpop.f32.mrb[0].mxu0
        %v3215 = vpop.f32.mrb[0].mxu0
        %v3216 = vadd.f32 0.0, %v3215
        %v3217 = vpop.f32.mrb[0].mxu0
        %3218 = vdwg.mxu0
        %v3219 = vadd.f32 %v2928, %v3093
        %v3220 = vadd.f32 %v2931, %v3096
        %v3221 = vadd.f32 %v2936, %v3101
        %v3222 = vadd.f32 %v2939, %v3104
        %v3223 = vadd.f32 %v2944, %v3109
        %v3224 = vadd.f32 %v2947, %v3112
        %v3225 = vadd.f32 %v2952, %v3117
        %v3226 = vadd.f32 %v2955, %v3120
        %v3227 = vadd.f32 %v2960, %v3125
        %v3228 = vadd.f32 %v2963, %v3128
        %v3229 = vadd.f32 %v2968, %v3133
        %v3230 = vadd.f32 %v2971, %v3136
        %v3231 = vadd.f32 %v2976, %v3141
        %v3232 = vadd.f32 %v2979, %v3144
        %v3233 = vadd.f32 %v2984, %v3149
        %v3234 = vadd.f32 %v2987, %v3152
        %v3235 = vadd.f32 %v2992, %v3157
        %v3236 = vadd.f32 %v2995, %v3160
        %v3237 = vadd.f32 %v3000, %v3165
        %v3238 = vadd.f32 %v3003, %v3168
        %v3239 = vadd.f32 %v3008, %v3173
        %v3240 = vadd.f32 %v3011, %v3176
        %v3241 = vadd.f32 %v3016, %v3181
        %v3242 = vadd.f32 %v3019, %v3184
        %v3243 = vadd.f32 %v3024, %v3189
        %v3244 = vadd.f32 %v3027, %v3192
        %v3245 = vadd.f32 %v3032, %v3197
        %v3246 = vadd.f32 %v3035, %v3200
        %v3247 = vadd.f32 %v3040, %v3205
        %v3248 = vadd.f32 %v3043, %v3208
        %v3249 = vadd.f32 %v3048, %v3213
        %v3250 = vadd.f32 %v3051, %v3216
        %v3251 = vld [vmem:[#allocation17] sm:$0x1]
        %v3253 = vlaneseq
        %v3254 = vshrl.u32 %v3253, 7
        %v3255 = vsub.s32 0, %v3254
        %v3256 = vrot.slane %v3251, %v3255
        %v3258 = vadd.f32 %v3219, %v3256
        %v3259 = vadd.f32 %v3220, %v3256
        %v3260 = vadd.f32 %v3221, %v3256
        %v3261 = vadd.f32 %v3222, %v3256
        %v3262 = vadd.f32 %v3223, %v3256
        %v3263 = vadd.f32 %v3224, %v3256
        %v3264 = vadd.f32 %v3225, %v3256
        %v3265 = vadd.f32 %v3226, %v3256
        %v3266 = vadd.f32 %v3227, %v3256
        %v3267 = vadd.f32 %v3228, %v3256
        %v3268 = vadd.f32 %v3229, %v3256
        %v3269 = vadd.f32 %v3230, %v3256
        %v3270 = vadd.f32 %v3231, %v3256
        %v3271 = vadd.f32 %v3232, %v3256
        %v3272 = vadd.f32 %v3233, %v3256
        %v3273 = vadd.f32 %v3234, %v3256
        %v3274 = vadd.f32 %v3235, %v3256
        %v3275 = vadd.f32 %v3236, %v3256
        %v3276 = vadd.f32 %v3237, %v3256
        %v3277 = vadd.f32 %v3238, %v3256
        %v3278 = vadd.f32 %v3239, %v3256
        %v3279 = vadd.f32 %v3240, %v3256
        %v3280 = vadd.f32 %v3241, %v3256
        %v3281 = vadd.f32 %v3242, %v3256
        %v3282 = vadd.f32 %v3243, %v3256
        %v3283 = vadd.f32 %v3244, %v3256
        %v3284 = vadd.f32 %v3245, %v3256
        %v3285 = vadd.f32 %v3246, %v3256
        %v3286 = vadd.f32 %v3247, %v3256
        %v3287 = vadd.f32 %v3248, %v3256
        %v3288 = vadd.f32 %v3249, %v3256
        %v3289 = vadd.f32 %v3250, %v3256
        %vm3290 = vcmask 64512
        %3291 = vst.msk [vmem:[%s454] sm:$0xff] %vm3290, %v3258
        %3292 = vst.msk [vmem:[%s454 + $0x8] sm:$0xff] %vm3290, %v3259
        %3293 = vst.msk [vmem:[%s454 + $0x10] sm:$0xff] %vm3290, %v3260
        %3294 = vst.msk [vmem:[%s454 + $0x18] sm:$0xff] %vm3290, %v3261
        %3295 = vst.msk [vmem:[%s454 + $0x20] sm:$0xff] %vm3290, %v3262
        %3296 = vst.msk [vmem:[%s454 + $0x28] sm:$0xff] %vm3290, %v3263
        %3297 = vst.msk [vmem:[%s454 + $0x30] sm:$0xff] %vm3290, %v3264
        %3298 = vst.msk [vmem:[%s454 + $0x38] sm:$0xff] %vm3290, %v3265
        %3299 = vst.msk [vmem:[%s454 + $0x40] sm:$0xff] %vm3290, %v3266
        %3300 = vst.msk [vmem:[%s454 + $0x48] sm:$0xff] %vm3290, %v3267
        %3301 = vst.msk [vmem:[%s454 + $0x50] sm:$0xff] %vm3290, %v3268
        %3302 = vst.msk [vmem:[%s454 + $0x58] sm:$0xff] %vm3290, %v3269
        %3303 = vst.msk [vmem:[%s454 + $0x60] sm:$0xff] %vm3290, %v3270
        %3304 = vst.msk [vmem:[%s454 + $0x68] sm:$0xff] %vm3290, %v3271
        %3305 = vst.msk [vmem:[%s454 + $0x70] sm:$0xff] %vm3290, %v3272
        %3306 = vst.msk [vmem:[%s454 + $0x78] sm:$0xff] %vm3290, %v3273
        %3307 = vst.msk [vmem:[%s454 + $0x80] sm:$0xff] %vm3290, %v3274
        %3308 = vst.msk [vmem:[%s454 + $0x88] sm:$0xff] %vm3290, %v3275
        %3309 = vst.msk [vmem:[%s454 + $0x90] sm:$0xff] %vm3290, %v3276
        %3310 = vst.msk [vmem:[%s454 + $0x98] sm:$0xff] %vm3290, %v3277
        %3311 = vst.msk [vmem:[%s454 + $0xa0] sm:$0xff] %vm3290, %v3278
        %3312 = vst.msk [vmem:[%s454 + $0xa8] sm:$0xff] %vm3290, %v3279
        %3313 = vst.msk [vmem:[%s454 + $0xb0] sm:$0xff] %vm3290, %v3280
        %3314 = vst.msk [vmem:[%s454 + $0xb8] sm:$0xff] %vm3290, %v3281
        %3315 = vst.msk [vmem:[%s454 + $0xc0] sm:$0xff] %vm3290, %v3282
        %3316 = vst.msk [vmem:[%s454 + $0xc8] sm:$0xff] %vm3290, %v3283
        %3317 = vst.msk [vmem:[%s454 + $0xd0] sm:$0xff] %vm3290, %v3284
        %3318 = vst.msk [vmem:[%s454 + $0xd8] sm:$0xff] %vm3290, %v3285
        %3319 = vst.msk [vmem:[%s454 + $0xe0] sm:$0xff] %vm3290, %v3286
        %3320 = vst.msk [vmem:[%s454 + $0xe8] sm:$0xff] %vm3290, %v3287
        %3321 = vst.msk [vmem:[%s454 + $0xf0] sm:$0xff] %vm3290, %v3288
        %3322 = vst.msk [vmem:[%s454 + $0xf8] sm:$0xff] %vm3290, %v3289
        %s3323 = sand.u32 %s232, 1
        %s3324 = scalar_lea.sflag [#allocation5], %s3323
        %s3325 = sand.u32 %s232, 1
        %s3326 = smul.addr %s3325, 256
        %s3327 = scalar_lea.vmem [#allocation18], %s3326
        // Predicated region
        $region93: #{tpu_custom_call.1} parent=55 // pred_check
          %p3328 = pneg %p242
        $region94: #{tpu_custom_call.1} parent=55 // pred_check_branch
          %3330 = sbr.rel (%p3328) target = $region96
        $region95: #{tpu_custom_call.1} parent=55 // pred_region
          %s3332 = ssub.s32 4096, 4096
          %3333 = vsyncadd %s3324, %s3332
          %s3334 = smul.addr %s30, 32
          %s3335 = smul.addr %s3334, 128
          %s3336 = scalar_lea.hbm %s9, %s3335
          %s3337 = sshll.u32 %s3327, 4
          %s3338 = int_to_ptr.vmem [resolvable:$true] %s3337
          %3343 = dma.vmem_to_hbm [thread:$0]  %s3338, 4096, %s3336, %s3324, 128, 128, 8
        $region96: #{tpu_custom_call.1} parent=55 // pred_fallthru
          _
      $region56: #{tpu_custom_call.1} parent=5 // pred_fallthru
        _
      %p3344 = scmp.le.s32.totalorder 2, %s25
      // Predicated region
      $region97: #{tpu_custom_call.1} parent=5 // pred_check
        %p3345 = pneg %p3344
      $region98: #{tpu_custom_call.1} parent=5 // pred_check_branch
        %3347 = sbr.rel (%p3345) target = $region100
      $region99: #{tpu_custom_call.1} parent=5 // pred_region
        %s3348 = ssub.s32 %s25, 2
        // Predicated region
        $region101: #{tpu_custom_call.1} parent=99 // pred_check
          %p3349 = pneg %p248
        $region102: #{tpu_custom_call.1} parent=99 // pred_check_branch
          %3351 = sbr.rel (%p3349) target = $region104
        $region103: #{tpu_custom_call.1} parent=99 // pred_region
          %s3352 = sand.u32 %s233, 1
          %s3353 = scalar_lea.sflag [#allocation5], %s3352
          %s3354 = sand.u32 %s233, 1
          %s3355 = smul.addr %s3354, 256
          %s3356 = scalar_lea.vmem [#allocation18], %s3355
          %3357 = dma.done %s3353, 4096
        $region104: #{tpu_custom_call.1} parent=99 // pred_fallthru
          _
      $region100: #{tpu_custom_call.1} parent=5 // pred_fallthru
        _
    $region6: #{tpu_custom_call.1} parent=1 // loop_footer
      %s29 = sadd.s32 1, %s25
    $region7: #{tpu_custom_call.1} parent=1 // loop_footer_branch
      %24 = sbr.rel target = $region3
    $region8: #{tpu_custom_call.1} parent=1 // loop_exit
      _
    %3358 = vsyncpa [#allocation4], 1
    %s3359 = scalar_lea.sflag [#allocation4], 1
    %3360 = vsyncpa %s3359, 1
    %3361 = vsyncpa [#allocation7], 1
    %3362 = vsyncpa [#allocation10], 1
    %3363 = vsyncpa [#allocation13], 1
    %3364 = vsyncpa [#allocation16], 1
    %3365 = vsyncpa [#allocation5], 1
    %s3366 = scalar_lea.sflag [#allocation5], 1
    %3367 = vsyncpa %s3366, 1

</llo_original>
